<compile_context>
chip_gen: v7x
topology: tpu7x:2x2x1
jax: 0.10.0
libtpu: 0.0.40
codegen_flags: <defaults>
</compile_context>

<pallas_src>
import functools

import jax
import jax.numpy as jnp
from jax.experimental import pallas as pl
from jax.experimental.pallas import tpu as pltpu


# ----------------------------- fused Pallas kernel ---------------------------

def _lenet_kernel(x_ref, wtc_ref, wfc_ref, bias_ref, psel1_ref, psel2_ref,
                  out_ref, p1_ref, p2_ref):
    f32 = jnp.float32

    # ---- conv1 (5x5, 3->6) + bias + relu: 5 Toeplitz matmuls on the MXU ------
    acc1 = jnp.dot(x_ref[0, 0:28, :], wtc_ref[0], preferred_element_type=f32)
    for di in range(1, 5):
        acc1 = acc1 + jnp.dot(x_ref[0, di:di + 28, :], wtc_ref[di],
                              preferred_element_type=f32)
    a1 = jnp.maximum(acc1 + bias_ref[0:1, :], 0.0)             # (28, 256)

    # ---- maxpool 2x2 -> (14, 14, 6) ------------------------------------------
    h1 = jnp.maximum(a1[:, :128], a1[:, 128:])                 # pool over W
    p1_ref[...] = jnp.maximum(                                 # pool over H (MXU)
        jnp.dot(psel1_ref[0], h1, preferred_element_type=f32),
        jnp.dot(psel1_ref[1], h1, preferred_element_type=f32))  # (14, 128)

    # ---- conv2 (5x5, 6->16) + bias + relu ------------------------------------
    acc2 = jnp.dot(p1_ref[0:10, :], wtc_ref[5], preferred_element_type=f32)
    for di in range(1, 5):
        acc2 = acc2 + jnp.dot(p1_ref[di:di + 10, :], wtc_ref[5 + di],
                              preferred_element_type=f32)
    a2 = jnp.maximum(acc2 + bias_ref[1:2, :], 0.0)             # (10, 256)

    # ---- maxpool 2x2 -> (5, 5, 16) -------------------------------------------
    h2 = jnp.maximum(a2[:, :128], a2[:, 128:])
    p2_ref[...] = jnp.maximum(
        jnp.dot(psel2_ref[0], h2, preferred_element_type=f32),
        jnp.dot(psel2_ref[1], h2, preferred_element_type=f32))  # (5, 128)

    # ---- fc1 (400 -> 120) + relu: contract over the 5 feature rows -----------
    y = bias_ref[2:3, :128]                                    # (1, 128)
    for h in range(5):
        y = y + jnp.dot(p2_ref[h:h + 1, :], wfc_ref[h],
                        preferred_element_type=f32)
    y = jnp.maximum(y, 0.0)

    # ---- fc2 (120 -> 84) + relu,  fc3 (84 -> num_classes) ---------------------
    y = jnp.maximum(jnp.dot(y, wfc_ref[5], preferred_element_type=f32)
                    + bias_ref[3:4, :128], 0.0)
    y = jnp.dot(y, wfc_ref[6], preferred_element_type=f32) + bias_ref[4:5, :128]

    out_ref[0] = y                                             # lane-dense store


# ------------------------------ weight packing --------------------------------

def pack_params(params, num_classes):
    """One-time repacking of PyTorch-layout weights into MXU-friendly slabs."""
    assert num_classes <= 128
    f32 = jnp.float32

    # Conv Toeplitz slabs, stacked: rows 0..4 -> conv1, rows 5..9 -> conv2.
    # conv1: wtc[di, wi*3+ci, parity*128 + w2*6 + co] = conv1_w[co, ci, di, wi-wo]
    wtc = jnp.zeros((10, 128, 256), f32)
    k1 = params["conv1_w"].astype(f32).transpose(2, 3, 1, 0).reshape(5, 15, 6)
    for parity in range(2):
        for w2 in range(14):
            r0 = (2 * w2 + parity) * 3
            c0 = parity * 128 + w2 * 6
            wtc = wtc.at[0:5, r0:r0 + 15, c0:c0 + 6].set(k1)
    k2 = params["conv2_w"].astype(f32).transpose(2, 3, 1, 0).reshape(5, 30, 16)
    for parity in range(2):
        for w2 in range(5):
            r0 = (2 * w2 + parity) * 6
            c0 = parity * 128 + w2 * 16
            wtc = wtc.at[5:10, r0:r0 + 30, c0:c0 + 16].set(k2)

    # FC weight slabs: rows 0..4 -> fc1 (one per feature row h), 5 -> fc2, 6 -> fc3.
    wfc = jnp.zeros((7, 128, 128), f32)
    c1 = params["fc1_w"].astype(f32).reshape(120, 16, 5, 5)
    c1 = c1.transpose(2, 3, 1, 0).reshape(5, 80, 120)          # (h, w*16+c, n)
    wfc = wfc.at[0:5, :80, :120].set(c1)
    wfc = wfc.at[5, :120, :84].set(params["fc2_w"].astype(f32).T)
    wfc = wfc.at[6, :84, :num_classes].set(params["fc3_w"].astype(f32).T)

    # Biases, one row each (conv biases tiled over output W, parity-split).
    bias = jnp.zeros((8, 256), f32)
    cb1 = jnp.tile(params["conv1_b"].astype(f32), 14)          # 84 lanes
    bias = bias.at[0, 0:84].set(cb1).at[0, 128:212].set(cb1)
    cb2 = jnp.tile(params["conv2_b"].astype(f32), 5)           # 80 lanes
    bias = bias.at[1, 0:80].set(cb2).at[1, 128:208].set(cb2)
    bias = bias.at[2, :120].set(params["fc1_b"].astype(f32))
    bias = bias.at[3, :84].set(params["fc2_b"].astype(f32))
    bias = bias.at[4, :num_classes].set(params["fc3_b"].astype(f32))

    # Max-pool-over-H 0/1 even/odd row-selection matrices, built once here.
    def parity_rows(m_out, m_in):
        r = jnp.arange(m_out)[:, None]
        c = jnp.arange(m_in)[None, :]
        return jnp.stack([(c == 2 * r).astype(f32),
                          (c == 2 * r + 1).astype(f32)])
    psel1 = parity_rows(14, 28)                                # (2, 14, 28)
    psel2 = parity_rows(5, 10)                                 # (2, 5, 10)

    return {"wtc": wtc, "wfc": wfc, "bias": bias,
            "psel1": psel1, "psel2": psel2}


# --------------------------------- forward ------------------------------------

def _pack_input(x):
    # NCHW (B, 3, 32, 32) -> (B, H=32, W*C=96) -> zero-pad lanes to 128.
    B = x.shape[0]
    xt = x.astype(jnp.float32).transpose(0, 2, 3, 1).reshape(B, 32, 96)
    return jnp.pad(xt, ((0, 0), (0, 0), (0, 32)))


def net_forward(packed, x, num_classes):
    B = x.shape[0]
    xp = _pack_input(x)
    out = pl.pallas_call(
        _lenet_kernel,
        out_shape=jax.ShapeDtypeStruct((B, 1, 128), jnp.float32),
        grid=(B,),
        in_specs=[
            pl.BlockSpec((1, 32, 128), lambda b: (b, 0, 0)),    # packed image
            pl.BlockSpec((10, 128, 256), lambda b: (0, 0, 0)),  # conv Toeplitz slabs
            pl.BlockSpec((7, 128, 128), lambda b: (0, 0, 0)),   # fc weight slabs
            pl.BlockSpec((8, 256), lambda b: (0, 0)),           # all biases
            pl.BlockSpec((2, 14, 28), lambda b: (0, 0, 0)),     # pool1 H selectors
            pl.BlockSpec((2, 5, 10), lambda b: (0, 0, 0)),      # pool2 H selectors
        ],
        out_specs=pl.BlockSpec((1, 1, 128), lambda b: (b, 0, 0)),
        scratch_shapes=[pltpu.VMEM((14, 128), jnp.float32),     # pooled conv1
                        pltpu.VMEM((5, 128), jnp.float32)],     # pooled conv2
        compiler_params=pltpu.CompilerParams(
            dimension_semantics=("parallel",)),                 # batch across cores
    )(xp, packed["wtc"], packed["wfc"], packed["bias"],
      packed["psel1"], packed["psel2"])
    return out[:, 0, :num_classes]


# ------------------------------ parameters ------------------------------------

def _uniform(key, shape, fan_in):
    bound = 1.0 / jnp.sqrt(jnp.float32(fan_in))
    return jax.random.uniform(key, shape, jnp.float32, -bound, bound)


def init_params(key, num_classes):
    ks = jax.random.split(key, 10)
    return {
        "conv1_w": _uniform(ks[0], (6, 3, 5, 5), 3 * 5 * 5),
        "conv1_b": _uniform(ks[1], (6,), 3 * 5 * 5),
        "conv2_w": _uniform(ks[2], (16, 6, 5, 5), 6 * 5 * 5),
        "conv2_b": _uniform(ks[3], (16,), 6 * 5 * 5),
        "fc1_w": _uniform(ks[4], (120, 400), 400),
        "fc1_b": _uniform(ks[5], (120,), 400),
        "fc2_w": _uniform(ks[6], (84, 120), 120),
        "fc2_b": _uniform(ks[7], (84,), 120),
        "fc3_w": _uniform(ks[8], (num_classes, 84), 84),
        "fc3_b": _uniform(ks[9], (84,), 84) if False else _uniform(ks[9], (num_classes,), 84),
    }


# ----------------------- pure-JAX reference (check) ----------------------------

def net_forward_ref(params, x):
    def conv(x, w, b):
        y = jax.lax.conv_general_dilated(
            x, w, window_strides=(1, 1), padding="VALID",
            dimension_numbers=("NCHW", "OIHW", "NCHW"))
        return jnp.maximum(y + b[None, :, None, None], 0.0)

    def pool(x):
        B, C, H, W = x.shape
        return jnp.max(x.reshape(B, C, H // 2, 2, W // 2, 2), axis=(3, 5))

    x = pool(conv(x, params["conv1_w"], params["conv1_b"]))
    x = pool(conv(x, params["conv2_w"], params["conv2_b"]))
    x = x.reshape(x.shape[0], 400)
    x = jnp.maximum(x @ params["fc1_w"].T + params["fc1_b"], 0.0)
    x = jnp.maximum(x @ params["fc2_w"].T + params["fc2_b"], 0.0)
    return x @ params["fc3_w"].T + params["fc3_b"]


# ---------------------------------- main ---------------------------------------

if __name__ == "__main__":
    num_classes = 10
    key = jax.random.PRNGKey(0)
    k_param, k_x = jax.random.split(key)

    params = init_params(k_param, num_classes)
    x = jax.random.normal(k_x, (2, 3, 32, 32), jnp.float32)   # NCHW, like PyTorch

    packed = pack_params(params, num_classes)                  # one-time packing
    fwd = jax.jit(functools.partial(net_forward, num_classes=num_classes))

    out = jax.block_until_ready(fwd(packed, x))
    ref = net_forward_ref(params, x)

    assert out.shape == (2, num_classes), out.shape
    max_err = float(jnp.max(jnp.abs(out - ref)))
    assert jnp.allclose(out, ref, atol=1e-3, rtol=1e-3), max_err

    print("KERNEL_OK")
</pallas_src>

<mosaic_0001>
module attributes {stable_mosaic.version = 11 : i64} {
  func.func @_lenet_kernel(%arg0: i32, %arg1: memref<1x32x128xf32, #tpu.memory_space<vmem>>, %arg2: memref<10x128x256xf32, #tpu.memory_space<vmem>>, %arg3: memref<7x128x128xf32, #tpu.memory_space<vmem>>, %arg4: memref<8x256xf32, #tpu.memory_space<vmem>>, %arg5: memref<2x14x28xf32, #tpu.memory_space<vmem>>, %arg6: memref<2x5x10xf32, #tpu.memory_space<vmem>>, %arg7: memref<1x1x128xf32, #tpu.memory_space<vmem>>, %arg8: memref<14x128xf32, #tpu.memory_space<vmem>>, %arg9: memref<5x128xf32, #tpu.memory_space<vmem>>) attributes {dimension_semantics = [#tpu.dimension_semantics<parallel>], iteration_bounds = array<i64: 2>, scalar_prefetch = 0 : i64, scratch_operands = 2 : i64, tpu.core_type = #tpu.core_type<tc>, window_params = [{transform_indices = @transform_0, window_bounds = array<i64: 1, 32, 128>}, {pipeline_mode = #tpu.pipeline_mode<synchronous>, transform_indices = @transform_1, window_bounds = array<i64: 10, 128, 256>}, {pipeline_mode = #tpu.pipeline_mode<synchronous>, transform_indices = @transform_2, window_bounds = array<i64: 7, 128, 128>}, {pipeline_mode = #tpu.pipeline_mode<synchronous>, transform_indices = @transform_3, window_bounds = array<i64: 8, 256>}, {pipeline_mode = #tpu.pipeline_mode<synchronous>, transform_indices = @transform_4, window_bounds = array<i64: 2, 14, 28>}, {pipeline_mode = #tpu.pipeline_mode<synchronous>, transform_indices = @transform_5, window_bounds = array<i64: 2, 5, 10>}, {transform_indices = @transform_6, window_bounds = array<i64: 1, 1, 128>}]} {
    %c0 = arith.constant 0 : index
    %c0_0 = arith.constant 0 : index
    %c0_1 = arith.constant 0 : index
    %0 = vector.load %arg1[%c0, %c0_0, %c0_1] : memref<1x32x128xf32, #tpu.memory_space<vmem>>, vector<1x28x128xf32>
    %1 = vector.shape_cast %0 : vector<1x28x128xf32> to vector<28x128xf32>
    %c0_2 = arith.constant 0 : index
    %c0_3 = arith.constant 0 : index
    %c0_4 = arith.constant 0 : index
    %2 = vector.load %arg2[%c0_2, %c0_3, %c0_4] : memref<10x128x256xf32, #tpu.memory_space<vmem>>, vector<1x128x256xf32>
    %3 = vector.shape_cast %2 : vector<1x128x256xf32> to vector<128x256xf32>
    %cst = arith.constant dense<0.000000e+00> : vector<28x256xf32>
    %4 = tpu.matmul %1, %3, %cst {dimension_numbers = #tpu.dot_dimension_numbers<[1], [0], [0], [1], [0, 0, 1, 1], [], []>} : vector<28x128xf32>, vector<128x256xf32>, vector<28x256xf32> -> vector<28x256xf32>
    %c0_5 = arith.constant 0 : index
    %c1 = arith.constant 1 : index
    %c0_6 = arith.constant 0 : index
    %5 = vector.load %arg1[%c0_5, %c1, %c0_6] : memref<1x32x128xf32, #tpu.memory_space<vmem>>, vector<1x28x128xf32>
    %6 = vector.shape_cast %5 : vector<1x28x128xf32> to vector<28x128xf32>
    %c1_7 = arith.constant 1 : index
    %c0_8 = arith.constant 0 : index
    %c0_9 = arith.constant 0 : index
    %7 = vector.load %arg2[%c1_7, %c0_8, %c0_9] : memref<10x128x256xf32, #tpu.memory_space<vmem>>, vector<1x128x256xf32>
    %8 = vector.shape_cast %7 : vector<1x128x256xf32> to vector<128x256xf32>
    %cst_10 = arith.constant dense<0.000000e+00> : vector<28x256xf32>
    %9 = tpu.matmul %6, %8, %cst_10 {dimension_numbers = #tpu.dot_dimension_numbers<[1], [0], [0], [1], [0, 0, 1, 1], [], []>} : vector<28x128xf32>, vector<128x256xf32>, vector<28x256xf32> -> vector<28x256xf32>
    %10 = arith.addf %4, %9 : vector<28x256xf32>
    %c0_11 = arith.constant 0 : index
    %c2 = arith.constant 2 : index
    %c0_12 = arith.constant 0 : index
    %11 = vector.load %arg1[%c0_11, %c2, %c0_12] : memref<1x32x128xf32, #tpu.memory_space<vmem>>, vector<1x28x128xf32>
    %12 = vector.shape_cast %11 : vector<1x28x128xf32> to vector<28x128xf32>
    %c2_13 = arith.constant 2 : index
    %c0_14 = arith.constant 0 : index
    %c0_15 = arith.constant 0 : index
    %13 = vector.load %arg2[%c2_13, %c0_14, %c0_15] : memref<10x128x256xf32, #tpu.memory_space<vmem>>, vector<1x128x256xf32>
    %14 = vector.shape_cast %13 : vector<1x128x256xf32> to vector<128x256xf32>
    %cst_16 = arith.constant dense<0.000000e+00> : vector<28x256xf32>
    %15 = tpu.matmul %12, %14, %cst_16 {dimension_numbers = #tpu.dot_dimension_numbers<[1], [0], [0], [1], [0, 0, 1, 1], [], []>} : vector<28x128xf32>, vector<128x256xf32>, vector<28x256xf32> -> vector<28x256xf32>
    %16 = arith.addf %10, %15 : vector<28x256xf32>
    %c0_17 = arith.constant 0 : index
    %c3 = arith.constant 3 : index
    %c0_18 = arith.constant 0 : index
    %17 = vector.load %arg1[%c0_17, %c3, %c0_18] : memref<1x32x128xf32, #tpu.memory_space<vmem>>, vector<1x28x128xf32>
    %18 = vector.shape_cast %17 : vector<1x28x128xf32> to vector<28x128xf32>
    %c3_19 = arith.constant 3 : index
    %c0_20 = arith.constant 0 : index
    %c0_21 = arith.constant 0 : index
    %19 = vector.load %arg2[%c3_19, %c0_20, %c0_21] : memref<10x128x256xf32, #tpu.memory_space<vmem>>, vector<1x128x256xf32>
    %20 = vector.shape_cast %19 : vector<1x128x256xf32> to vector<128x256xf32>
    %cst_22 = arith.constant dense<0.000000e+00> : vector<28x256xf32>
    %21 = tpu.matmul %18, %20, %cst_22 {dimension_numbers = #tpu.dot_dimension_numbers<[1], [0], [0], [1], [0, 0, 1, 1], [], []>} : vector<28x128xf32>, vector<128x256xf32>, vector<28x256xf32> -> vector<28x256xf32>
    %22 = arith.addf %16, %21 : vector<28x256xf32>
    %c0_23 = arith.constant 0 : index
    %c4 = arith.constant 4 : index
    %c0_24 = arith.constant 0 : index
    %23 = vector.load %arg1[%c0_23, %c4, %c0_24] : memref<1x32x128xf32, #tpu.memory_space<vmem>>, vector<1x28x128xf32>
    %24 = vector.shape_cast %23 : vector<1x28x128xf32> to vector<28x128xf32>
    %c4_25 = arith.constant 4 : index
    %c0_26 = arith.constant 0 : index
    %c0_27 = arith.constant 0 : index
    %25 = vector.load %arg2[%c4_25, %c0_26, %c0_27] : memref<10x128x256xf32, #tpu.memory_space<vmem>>, vector<1x128x256xf32>
    %26 = vector.shape_cast %25 : vector<1x128x256xf32> to vector<128x256xf32>
    %cst_28 = arith.constant dense<0.000000e+00> : vector<28x256xf32>
    %27 = tpu.matmul %24, %26, %cst_28 {dimension_numbers = #tpu.dot_dimension_numbers<[1], [0], [0], [1], [0, 0, 1, 1], [], []>} : vector<28x128xf32>, vector<128x256xf32>, vector<28x256xf32> -> vector<28x256xf32>
    %28 = arith.addf %22, %27 : vector<28x256xf32>
    %c0_29 = arith.constant 0 : index
    %c0_30 = arith.constant 0 : index
    %29 = vector.load %arg4[%c0_29, %c0_30] : memref<8x256xf32, #tpu.memory_space<vmem>>, vector<1x256xf32>
    %30 = vector.broadcast %29 : vector<1x256xf32> to vector<28x256xf32>
    %31 = arith.addf %28, %30 : vector<28x256xf32>
    %cst_31 = arith.constant 0.000000e+00 : f32
    %32 = vector.broadcast %cst_31 : f32 to vector<28x256xf32>
    %33 = arith.maximumf %31, %32 : vector<28x256xf32>
    %34 = vector.extract_strided_slice %33 {offsets = [0, 0], sizes = [28, 128], strides = [1, 1]} : vector<28x256xf32> to vector<28x128xf32>
    %35 = vector.extract_strided_slice %33 {offsets = [0, 128], sizes = [28, 128], strides = [1, 1]} : vector<28x256xf32> to vector<28x128xf32>
    %36 = arith.maximumf %34, %35 : vector<28x128xf32>
    %c0_32 = arith.constant 0 : index
    %c0_33 = arith.constant 0 : index
    %c0_34 = arith.constant 0 : index
    %37 = vector.load %arg5[%c0_32, %c0_33, %c0_34] : memref<2x14x28xf32, #tpu.memory_space<vmem>>, vector<1x14x28xf32>
    %38 = vector.shape_cast %37 : vector<1x14x28xf32> to vector<14x28xf32>
    %cst_35 = arith.constant dense<0.000000e+00> : vector<14x128xf32>
    %39 = tpu.matmul %38, %36, %cst_35 {dimension_numbers = #tpu.dot_dimension_numbers<[1], [0], [0], [1], [0, 0, 1, 1], [], []>} : vector<14x28xf32>, vector<28x128xf32>, vector<14x128xf32> -> vector<14x128xf32>
    %c1_36 = arith.constant 1 : index
    %c0_37 = arith.constant 0 : index
    %c0_38 = arith.constant 0 : index
    %40 = vector.load %arg5[%c1_36, %c0_37, %c0_38] : memref<2x14x28xf32, #tpu.memory_space<vmem>>, vector<1x14x28xf32>
    %41 = vector.shape_cast %40 : vector<1x14x28xf32> to vector<14x28xf32>
    %cst_39 = arith.constant dense<0.000000e+00> : vector<14x128xf32>
    %42 = tpu.matmul %41, %36, %cst_39 {dimension_numbers = #tpu.dot_dimension_numbers<[1], [0], [0], [1], [0, 0, 1, 1], [], []>} : vector<14x28xf32>, vector<28x128xf32>, vector<14x128xf32> -> vector<14x128xf32>
    %43 = arith.maximumf %39, %42 : vector<14x128xf32>
    %c0_40 = arith.constant 0 : index
    %c0_41 = arith.constant 0 : index
    %44 = vector.load %arg8[%c0_40, %c0_41] : memref<14x128xf32, #tpu.memory_space<vmem>>, vector<14x128xf32>
    tpu.vector_store %arg8[%c0_40, %c0_41], %43 {strides = array<i32>} : memref<14x128xf32, #tpu.memory_space<vmem>>, vector<14x128xf32>,
    %c0_42 = arith.constant 0 : index
    %c0_43 = arith.constant 0 : index
    %45 = vector.load %arg8[%c0_42, %c0_43] : memref<14x128xf32, #tpu.memory_space<vmem>>, vector<10x128xf32>
    %c5 = arith.constant 5 : index
    %c0_44 = arith.constant 0 : index
    %c0_45 = arith.constant 0 : index
    %46 = vector.load %arg2[%c5, %c0_44, %c0_45] : memref<10x128x256xf32, #tpu.memory_space<vmem>>, vector<1x128x256xf32>
    %47 = vector.shape_cast %46 : vector<1x128x256xf32> to vector<128x256xf32>
    %cst_46 = arith.constant dense<0.000000e+00> : vector<10x256xf32>
    %48 = tpu.matmul %45, %47, %cst_46 {dimension_numbers = #tpu.dot_dimension_numbers<[1], [0], [0], [1], [0, 0, 1, 1], [], []>} : vector<10x128xf32>, vector<128x256xf32>, vector<10x256xf32> -> vector<10x256xf32>
    %c1_47 = arith.constant 1 : index
    %c0_48 = arith.constant 0 : index
    %49 = vector.load %arg8[%c1_47, %c0_48] : memref<14x128xf32, #tpu.memory_space<vmem>>, vector<10x128xf32>
    %c6 = arith.constant 6 : index
    %c0_49 = arith.constant 0 : index
    %c0_50 = arith.constant 0 : index
    %50 = vector.load %arg2[%c6, %c0_49, %c0_50] : memref<10x128x256xf32, #tpu.memory_space<vmem>>, vector<1x128x256xf32>
    %51 = vector.shape_cast %50 : vector<1x128x256xf32> to vector<128x256xf32>
    %cst_51 = arith.constant dense<0.000000e+00> : vector<10x256xf32>
    %52 = tpu.matmul %49, %51, %cst_51 {dimension_numbers = #tpu.dot_dimension_numbers<[1], [0], [0], [1], [0, 0, 1, 1], [], []>} : vector<10x128xf32>, vector<128x256xf32>, vector<10x256xf32> -> vector<10x256xf32>
    %53 = arith.addf %48, %52 : vector<10x256xf32>
    %c2_52 = arith.constant 2 : index
    %c0_53 = arith.constant 0 : index
    %54 = vector.load %arg8[%c2_52, %c0_53] : memref<14x128xf32, #tpu.memory_space<vmem>>, vector<10x128xf32>
    %c7 = arith.constant 7 : index
    %c0_54 = arith.constant 0 : index
    %c0_55 = arith.constant 0 : index
    %55 = vector.load %arg2[%c7, %c0_54, %c0_55] : memref<10x128x256xf32, #tpu.memory_space<vmem>>, vector<1x128x256xf32>
    %56 = vector.shape_cast %55 : vector<1x128x256xf32> to vector<128x256xf32>
    %cst_56 = arith.constant dense<0.000000e+00> : vector<10x256xf32>
    %57 = tpu.matmul %54, %56, %cst_56 {dimension_numbers = #tpu.dot_dimension_numbers<[1], [0], [0], [1], [0, 0, 1, 1], [], []>} : vector<10x128xf32>, vector<128x256xf32>, vector<10x256xf32> -> vector<10x256xf32>
    %58 = arith.addf %53, %57 : vector<10x256xf32>
    %c3_57 = arith.constant 3 : index
    %c0_58 = arith.constant 0 : index
    %59 = vector.load %arg8[%c3_57, %c0_58] : memref<14x128xf32, #tpu.memory_space<vmem>>, vector<10x128xf32>
    %c8 = arith.constant 8 : index
    %c0_59 = arith.constant 0 : index
    %c0_60 = arith.constant 0 : index
    %60 = vector.load %arg2[%c8, %c0_59, %c0_60] : memref<10x128x256xf32, #tpu.memory_space<vmem>>, vector<1x128x256xf32>
    %61 = vector.shape_cast %60 : vector<1x128x256xf32> to vector<128x256xf32>
    %cst_61 = arith.constant dense<0.000000e+00> : vector<10x256xf32>
    %62 = tpu.matmul %59, %61, %cst_61 {dimension_numbers = #tpu.dot_dimension_numbers<[1], [0], [0], [1], [0, 0, 1, 1], [], []>} : vector<10x128xf32>, vector<128x256xf32>, vector<10x256xf32> -> vector<10x256xf32>
    %63 = arith.addf %58, %62 : vector<10x256xf32>
    %c4_62 = arith.constant 4 : index
    %c0_63 = arith.constant 0 : index
    %64 = vector.load %arg8[%c4_62, %c0_63] : memref<14x128xf32, #tpu.memory_space<vmem>>, vector<10x128xf32>
    %c9 = arith.constant 9 : index
    %c0_64 = arith.constant 0 : index
    %c0_65 = arith.constant 0 : index
    %65 = vector.load %arg2[%c9, %c0_64, %c0_65] : memref<10x128x256xf32, #tpu.memory_space<vmem>>, vector<1x128x256xf32>
    %66 = vector.shape_cast %65 : vector<1x128x256xf32> to vector<128x256xf32>
    %cst_66 = arith.constant dense<0.000000e+00> : vector<10x256xf32>
    %67 = tpu.matmul %64, %66, %cst_66 {dimension_numbers = #tpu.dot_dimension_numbers<[1], [0], [0], [1], [0, 0, 1, 1], [], []>} : vector<10x128xf32>, vector<128x256xf32>, vector<10x256xf32> -> vector<10x256xf32>
    %68 = arith.addf %63, %67 : vector<10x256xf32>
    %c1_67 = arith.constant 1 : index
    %c0_68 = arith.constant 0 : index
    %69 = vector.load %arg4[%c1_67, %c0_68] : memref<8x256xf32, #tpu.memory_space<vmem>>, vector<1x256xf32>
    %70 = vector.broadcast %69 : vector<1x256xf32> to vector<10x256xf32>
    %71 = arith.addf %68, %70 : vector<10x256xf32>
    %cst_69 = arith.constant 0.000000e+00 : f32
    %72 = vector.broadcast %cst_69 : f32 to vector<10x256xf32>
    %73 = arith.maximumf %71, %72 : vector<10x256xf32>
    %74 = vector.extract_strided_slice %73 {offsets = [0, 0], sizes = [10, 128], strides = [1, 1]} : vector<10x256xf32> to vector<10x128xf32>
    %75 = vector.extract_strided_slice %73 {offsets = [0, 128], sizes = [10, 128], strides = [1, 1]} : vector<10x256xf32> to vector<10x128xf32>
    %76 = arith.maximumf %74, %75 : vector<10x128xf32>
    %c0_70 = arith.constant 0 : index
    %c0_71 = arith.constant 0 : index
    %c0_72 = arith.constant 0 : index
    %77 = vector.load %arg6[%c0_70, %c0_71, %c0_72] : memref<2x5x10xf32, #tpu.memory_space<vmem>>, vector<1x5x10xf32>
    %78 = vector.shape_cast %77 : vector<1x5x10xf32> to vector<5x10xf32>
    %cst_73 = arith.constant dense<0.000000e+00> : vector<5x128xf32>
    %79 = tpu.matmul %78, %76, %cst_73 {dimension_numbers = #tpu.dot_dimension_numbers<[1], [0], [0], [1], [0, 0, 1, 1], [], []>} : vector<5x10xf32>, vector<10x128xf32>, vector<5x128xf32> -> vector<5x128xf32>
    %c1_74 = arith.constant 1 : index
    %c0_75 = arith.constant 0 : index
    %c0_76 = arith.constant 0 : index
    %80 = vector.load %arg6[%c1_74, %c0_75, %c0_76] : memref<2x5x10xf32, #tpu.memory_space<vmem>>, vector<1x5x10xf32>
    %81 = vector.shape_cast %80 : vector<1x5x10xf32> to vector<5x10xf32>
    %cst_77 = arith.constant dense<0.000000e+00> : vector<5x128xf32>
    %82 = tpu.matmul %81, %76, %cst_77 {dimension_numbers = #tpu.dot_dimension_numbers<[1], [0], [0], [1], [0, 0, 1, 1], [], []>} : vector<5x10xf32>, vector<10x128xf32>, vector<5x128xf32> -> vector<5x128xf32>
    %83 = arith.maximumf %79, %82 : vector<5x128xf32>
    %c0_78 = arith.constant 0 : index
    %c0_79 = arith.constant 0 : index
    %84 = vector.load %arg9[%c0_78, %c0_79] : memref<5x128xf32, #tpu.memory_space<vmem>>, vector<5x128xf32>
    tpu.vector_store %arg9[%c0_78, %c0_79], %83 {strides = array<i32>} : memref<5x128xf32, #tpu.memory_space<vmem>>, vector<5x128xf32>,
    %c2_80 = arith.constant 2 : index
    %c0_81 = arith.constant 0 : index
    %85 = vector.load %arg4[%c2_80, %c0_81] : memref<8x256xf32, #tpu.memory_space<vmem>>, vector<1x128xf32>
    %c0_82 = arith.constant 0 : index
    %c0_83 = arith.constant 0 : index
    %86 = vector.load %arg9[%c0_82, %c0_83] : memref<5x128xf32, #tpu.memory_space<vmem>>, vector<1x128xf32>
    %c0_84 = arith.constant 0 : index
    %c0_85 = arith.constant 0 : index
    %c0_86 = arith.constant 0 : index
    %87 = vector.load %arg3[%c0_84, %c0_85, %c0_86] : memref<7x128x128xf32, #tpu.memory_space<vmem>>, vector<1x128x128xf32>
    %88 = vector.shape_cast %87 : vector<1x128x128xf32> to vector<128x128xf32>
    %cst_87 = arith.constant dense<0.000000e+00> : vector<1x128xf32>
    %89 = tpu.matmul %86, %88, %cst_87 {dimension_numbers = #tpu.dot_dimension_numbers<[1], [0], [0], [1], [0, 0, 1, 1], [], []>} : vector<1x128xf32>, vector<128x128xf32>, vector<1x128xf32> -> vector<1x128xf32>
    %90 = arith.addf %85, %89 : vector<1x128xf32>
    %c1_88 = arith.constant 1 : index
    %c0_89 = arith.constant 0 : index
    %91 = vector.load %arg9[%c1_88, %c0_89] : memref<5x128xf32, #tpu.memory_space<vmem>>, vector<1x128xf32>
    %c1_90 = arith.constant 1 : index
    %c0_91 = arith.constant 0 : index
    %c0_92 = arith.constant 0 : index
    %92 = vector.load %arg3[%c1_90, %c0_91, %c0_92] : memref<7x128x128xf32, #tpu.memory_space<vmem>>, vector<1x128x128xf32>
    %93 = vector.shape_cast %92 : vector<1x128x128xf32> to vector<128x128xf32>
    %cst_93 = arith.constant dense<0.000000e+00> : vector<1x128xf32>
    %94 = tpu.matmul %91, %93, %cst_93 {dimension_numbers = #tpu.dot_dimension_numbers<[1], [0], [0], [1], [0, 0, 1, 1], [], []>} : vector<1x128xf32>, vector<128x128xf32>, vector<1x128xf32> -> vector<1x128xf32>
    %95 = arith.addf %90, %94 : vector<1x128xf32>
    %c2_94 = arith.constant 2 : index
    %c0_95 = arith.constant 0 : index
    %96 = vector.load %arg9[%c2_94, %c0_95] : memref<5x128xf32, #tpu.memory_space<vmem>>, vector<1x128xf32>
    %c2_96 = arith.constant 2 : index
    %c0_97 = arith.constant 0 : index
    %c0_98 = arith.constant 0 : index
    %97 = vector.load %arg3[%c2_96, %c0_97, %c0_98] : memref<7x128x128xf32, #tpu.memory_space<vmem>>, vector<1x128x128xf32>
    %98 = vector.shape_cast %97 : vector<1x128x128xf32> to vector<128x128xf32>
    %cst_99 = arith.constant dense<0.000000e+00> : vector<1x128xf32>
    %99 = tpu.matmul %96, %98, %cst_99 {dimension_numbers = #tpu.dot_dimension_numbers<[1], [0], [0], [1], [0, 0, 1, 1], [], []>} : vector<1x128xf32>, vector<128x128xf32>, vector<1x128xf32> -> vector<1x128xf32>
    %100 = arith.addf %95, %99 : vector<1x128xf32>
    %c3_100 = arith.constant 3 : index
    %c0_101 = arith.constant 0 : index
    %101 = vector.load %arg9[%c3_100, %c0_101] : memref<5x128xf32, #tpu.memory_space<vmem>>, vector<1x128xf32>
    %c3_102 = arith.constant 3 : index
    %c0_103 = arith.constant 0 : index
    %c0_104 = arith.constant 0 : index
    %102 = vector.load %arg3[%c3_102, %c0_103, %c0_104] : memref<7x128x128xf32, #tpu.memory_space<vmem>>, vector<1x128x128xf32>
    %103 = vector.shape_cast %102 : vector<1x128x128xf32> to vector<128x128xf32>
    %cst_105 = arith.constant dense<0.000000e+00> : vector<1x128xf32>
    %104 = tpu.matmul %101, %103, %cst_105 {dimension_numbers = #tpu.dot_dimension_numbers<[1], [0], [0], [1], [0, 0, 1, 1], [], []>} : vector<1x128xf32>, vector<128x128xf32>, vector<1x128xf32> -> vector<1x128xf32>
    %105 = arith.addf %100, %104 : vector<1x128xf32>
    %c4_106 = arith.constant 4 : index
    %c0_107 = arith.constant 0 : index
    %106 = vector.load %arg9[%c4_106, %c0_107] : memref<5x128xf32, #tpu.memory_space<vmem>>, vector<1x128xf32>
    %c4_108 = arith.constant 4 : index
    %c0_109 = arith.constant 0 : index
    %c0_110 = arith.constant 0 : index
    %107 = vector.load %arg3[%c4_108, %c0_109, %c0_110] : memref<7x128x128xf32, #tpu.memory_space<vmem>>, vector<1x128x128xf32>
    %108 = vector.shape_cast %107 : vector<1x128x128xf32> to vector<128x128xf32>
    %cst_111 = arith.constant dense<0.000000e+00> : vector<1x128xf32>
    %109 = tpu.matmul %106, %108, %cst_111 {dimension_numbers = #tpu.dot_dimension_numbers<[1], [0], [0], [1], [0, 0, 1, 1], [], []>} : vector<1x128xf32>, vector<128x128xf32>, vector<1x128xf32> -> vector<1x128xf32>
    %110 = arith.addf %105, %109 : vector<1x128xf32>
    %cst_112 = arith.constant 0.000000e+00 : f32
    %111 = vector.broadcast %cst_112 : f32 to vector<1x128xf32>
    %112 = arith.maximumf %110, %111 : vector<1x128xf32>
    %c5_113 = arith.constant 5 : index
    %c0_114 = arith.constant 0 : index
    %c0_115 = arith.constant 0 : index
    %113 = vector.load %arg3[%c5_113, %c0_114, %c0_115] : memref<7x128x128xf32, #tpu.memory_space<vmem>>, vector<1x128x128xf32>
    %114 = vector.shape_cast %113 : vector<1x128x128xf32> to vector<128x128xf32>
    %cst_116 = arith.constant dense<0.000000e+00> : vector<1x128xf32>
    %115 = tpu.matmul %112, %114, %cst_116 {dimension_numbers = #tpu.dot_dimension_numbers<[1], [0], [0], [1], [0, 0, 1, 1], [], []>} : vector<1x128xf32>, vector<128x128xf32>, vector<1x128xf32> -> vector<1x128xf32>
    %c3_117 = arith.constant 3 : index
    %c0_118 = arith.constant 0 : index
    %116 = vector.load %arg4[%c3_117, %c0_118] : memref<8x256xf32, #tpu.memory_space<vmem>>, vector<1x128xf32>
    %117 = arith.addf %115, %116 : vector<1x128xf32>
    %cst_119 = arith.constant 0.000000e+00 : f32
    %118 = vector.broadcast %cst_119 : f32 to vector<1x128xf32>
    %119 = arith.maximumf %117, %118 : vector<1x128xf32>
    %c6_120 = arith.constant 6 : index
    %c0_121 = arith.constant 0 : index
    %c0_122 = arith.constant 0 : index
    %120 = vector.load %arg3[%c6_120, %c0_121, %c0_122] : memref<7x128x128xf32, #tpu.memory_space<vmem>>, vector<1x128x128xf32>
    %121 = vector.shape_cast %120 : vector<1x128x128xf32> to vector<128x128xf32>
    %cst_123 = arith.constant dense<0.000000e+00> : vector<1x128xf32>
    %122 = tpu.matmul %119, %121, %cst_123 {dimension_numbers = #tpu.dot_dimension_numbers<[1], [0], [0], [1], [0, 0, 1, 1], [], []>} : vector<1x128xf32>, vector<128x128xf32>, vector<1x128xf32> -> vector<1x128xf32>
    %c4_124 = arith.constant 4 : index
    %c0_125 = arith.constant 0 : index
    %123 = vector.load %arg4[%c4_124, %c0_125] : memref<8x256xf32, #tpu.memory_space<vmem>>, vector<1x128xf32>
    %124 = arith.addf %122, %123 : vector<1x128xf32>
    %c0_126 = arith.constant 0 : index
    %c0_127 = arith.constant 0 : index
    %c0_128 = arith.constant 0 : index
    %125 = vector.load %arg7[%c0_126, %c0_127, %c0_128] : memref<1x1x128xf32, #tpu.memory_space<vmem>>, vector<1x1x128xf32>
    %126 = vector.shape_cast %125 : vector<1x1x128xf32> to vector<1x128xf32>
    %127 = vector.shape_cast %124 : vector<1x128xf32> to vector<1x1x128xf32>
    tpu.vector_store %arg7[%c0_126, %c0_127, %c0_128], %127 {strides = array<i32>} : memref<1x1x128xf32, #tpu.memory_space<vmem>>, vector<1x1x128xf32>,
    return
  }
  func.func @transform_0(%arg0: i32) -> (i32, i32, i32) {
    %c0_i32 = arith.constant 0 : i32
    %c0_i32_0 = arith.constant 0 : i32
    %c0_i32_1 = arith.constant 0 : i32
    return %arg0, %c0_i32, %c0_i32_0 : i32, i32, i32
  }
  func.func @transform_1(%arg0: i32) -> (i32, i32, i32) {
    %c0_i32 = arith.constant 0 : i32
    %c0_i32_0 = arith.constant 0 : i32
    %c0_i32_1 = arith.constant 0 : i32
    %c0_i32_2 = arith.constant 0 : i32
    return %c0_i32, %c0_i32_0, %c0_i32_1 : i32, i32, i32
  }
  func.func @transform_2(%arg0: i32) -> (i32, i32, i32) {
    %c0_i32 = arith.constant 0 : i32
    %c0_i32_0 = arith.constant 0 : i32
    %c0_i32_1 = arith.constant 0 : i32
    %c0_i32_2 = arith.constant 0 : i32
    return %c0_i32, %c0_i32_0, %c0_i32_1 : i32, i32, i32
  }
  func.func @transform_3(%arg0: i32) -> (i32, i32) {
    %c0_i32 = arith.constant 0 : i32
    %c0_i32_0 = arith.constant 0 : i32
    %c0_i32_1 = arith.constant 0 : i32
    return %c0_i32, %c0_i32_0 : i32, i32
  }
  func.func @transform_4(%arg0: i32) -> (i32, i32, i32) {
    %c0_i32 = arith.constant 0 : i32
    %c0_i32_0 = arith.constant 0 : i32
    %c0_i32_1 = arith.constant 0 : i32
    %c0_i32_2 = arith.constant 0 : i32
    return %c0_i32, %c0_i32_0, %c0_i32_1 : i32, i32, i32
  }
  func.func @transform_5(%arg0: i32) -> (i32, i32, i32) {
    %c0_i32 = arith.constant 0 : i32
    %c0_i32_0 = arith.constant 0 : i32
    %c0_i32_1 = arith.constant 0 : i32
    %c0_i32_2 = arith.constant 0 : i32
    return %c0_i32, %c0_i32_0, %c0_i32_1 : i32, i32, i32
  }
  func.func @transform_6(%arg0: i32) -> (i32, i32, i32) {
    %c0_i32 = arith.constant 0 : i32
    %c0_i32_0 = arith.constant 0 : i32
    %c0_i32_1 = arith.constant 0 : i32
    return %arg0, %c0_i32, %c0_i32_0 : i32, i32, i32
  }
}

</mosaic_0001>

<llo_original>
// kernel: net_forward.1
$region0: #{net_forward.1}
  #allocation0 [shape = 'u32[]', space=smem, size = 0x4, offset = 0x4, fixed_abs, tag = 'smem constant byte address 0x4 - core index']
  #allocation1 [shape = 'u32[144,128]{1,0:T(1,128)}', space=vmem, size = 0x12000, scoped, tag = 'internal scratch']
  #allocation2 [shape = 'f32[14,128]{1,0:T(8,128)}', space=vmem, size = 0x2000, scoped, tag = 'scratch operand']
  #allocation3 [shape = 'f32[5,128]{1,0:T(8,128)}', space=vmem, size = 0x1000, scoped, tag = 'scratch operand']
  %s0 = inlined_call_operand.vmem [shape: f32[2,32,128], index: 0, kind: input, shape index: {}]
  %s1 = inlined_call_operand.hbm [shape: f32[10,128,256], index: 1, kind: input, shape index: {}]
  %s2 = inlined_call_operand.hbm [shape: f32[7,128,128], index: 2, kind: input, shape index: {}]
  %s3 = inlined_call_operand.hbm [shape: f32[8,256], index: 3, kind: input, shape index: {}]
  %s4 = inlined_call_operand.vmem [shape: f32[2,14,28], index: 4, kind: input, shape index: {}]
  %s5 = inlined_call_operand.vmem [shape: f32[2,5,10], index: 5, kind: input, shape index: {}]
  %s6 = inlined_call_operand.hbm [shape: f32[2,1,128], index: 6, kind: output, shape index: {}]
  %s7 = sld [smem:[#allocation0]]
  $region69: #{net_forward.1} parent=0
    _
  %s9 = ssub.s32 1, %s7
  %s10 = scalar_select 0, %s9, %s7
  $region1: #{net_forward.1} parent=0
    #allocation4 [shape = 'u8[1310720]{0}', space=vmem, size = 0x140000, scoped, tag = 'input window, operand 1, single buffered']
    #allocation5 [shape = 's32[2]{0}', space=sflag, size = 0x8, scoped, tag = 'scoped memory for net_forward.1']
    #allocation6 [shape = 's32[2]{0}', space=sflag, size = 0x8, scoped, tag = 'scoped memory for net_forward.1']
    #allocation7 [shape = 'u8[458752]{0}', space=vmem, size = 0x70000, scoped, tag = 'input window, operand 2, single buffered']
    #allocation8 [shape = 's32[1]{0}', space=sflag, size = 0x4, scoped, tag = 'scoped memory for net_forward.1']
    #allocation9 [shape = 'u8[8192]{0}', space=vmem, size = 0x2000, scoped, tag = 'input window, operand 3, single buffered']
    #allocation10 [shape = 'u8[1024]{0}', space=vmem, size = 0x400, scoped, tag = 'output window, operand 0']
    %11 = vsyncpa [#allocation5], 0
    %12 = vsyncpa [#allocation8], 0
    %13 = vsyncpa [#allocation6], 0
    %s14 = scalar_lea.sflag [#allocation6], 1
    %15 = vsyncpa %s14, 0
    loop: start=0, step=1, limit=4
    $region2: #{net_forward.1} parent=1 // loop_pre_header
      _
    $region3: #{net_forward.1} parent=1 // loop_header
      %s17 = sphi 0, %s21
      %p18 = scmp.ge.s32.totalorder %s17, 4
      %s27 = sphi 0, %s29
      %s30 = sphi 0, %s27
      %s31 = sphi 0, %s30
      %s47 = sphi 0, %s31
      %s51 = sphi 0, %s51
      %s53 = sphi 0, %s51
      %s54 = sphi 0, %s53
      %s68 = sphi 0, %s54
      %s72 = sphi 0, %s72
      %s74 = sphi 0, %s72
      %s75 = sphi 0, %s74
      %s89 = sphi 0, %s75
      %s93 = sphi 0, %s93
      %s95 = sphi 0, %s93
      %s96 = sphi 0, %s95
      %s110 = sphi 0, %s96
      %s114 = sphi 0, %s114
      %s116 = sphi 0, %s114
      %s117 = sphi 0, %s116
      %s131 = sphi 0, %s117
      %s135 = sphi 0, %s135
      %s137 = sphi 0, %s135
      %s138 = sphi 0, %s137
      %s152 = sphi 0, %s138
      %s158 = sphi 0, %s160
      %s161 = sphi 0, %s158
      %s162 = sphi 0, %s161
      %s178 = sphi 0, %s162
    $region4: #{net_forward.1} parent=1 // loop_header_branch
      %20 = sbr.rel (%p18) target = $region8
    $region5: #{net_forward.1} parent=1 // loop_body
      %s22 = ssub.s32 %s17, 1
      %s23 = ssub.s32 %s17, 2
      %s24 = sadd.s32 %s17, 1
      %s25 = ssub.s32 %s17, %s24
      %p26 = scmp.eq.s32.totalorder %s25, 0
      %s28 = sadd.s32 %s27, 1
      %s29 = scalar_select %p26, %s27, %s28
      %p32 = pneg %p26
      %p33 = scmp.eq.s32.totalorder %s17, 1
      %p34 = por %p32, %p33
      %p35 = scmp.ne.s32.totalorder %s27, %s30
      %p36 = scmp.eq.s32.totalorder %s17, 0
      %p37 = por %p35, %p36
      %p38 = scmp.ne.s32.totalorder %s27, %s30
      %p39 = scmp.eq.s32.totalorder %s22, 1
      %p40 = por %p38, %p39
      %p41 = scmp.ne.s32.totalorder %s30, %s31
      %p42 = scmp.eq.s32.totalorder %s22, 0
      %p43 = por %p41, %p42
      %p44 = scmp.ne.s32.totalorder %s30, %s31
      %p45 = scmp.eq.s32.totalorder %s23, 1
      %p46 = por %p44, %p45
      %p48 = scmp.ne.s32.totalorder %s31, %s47
      %p49 = scmp.eq.s32.totalorder %s23, 0
      %p50 = por %p48, %p49
      %s52 = sadd.s32 %s51, 1
      %p55 = scmp.eq.s32.totalorder %s17, 1
      %p56 = scmp.ne.s32.totalorder %s51, %s53
      %p57 = scmp.eq.s32.totalorder %s17, 0
      %p58 = por %p56, %p57
      %p59 = scmp.ne.s32.totalorder %s51, %s53
      %p60 = scmp.eq.s32.totalorder %s22, 1
      %p61 = por %p59, %p60
      %p62 = scmp.ne.s32.totalorder %s53, %s54
      %p63 = scmp.eq.s32.totalorder %s22, 0
      %p64 = por %p62, %p63
      %p65 = scmp.ne.s32.totalorder %s53, %s54
      %p66 = scmp.eq.s32.totalorder %s23, 1
      %p67 = por %p65, %p66
      %p69 = scmp.ne.s32.totalorder %s54, %s68
      %p70 = scmp.eq.s32.totalorder %s23, 0
      %p71 = por %p69, %p70
      %s73 = sadd.s32 %s72, 1
      %p76 = scmp.eq.s32.totalorder %s17, 1
      %p77 = scmp.ne.s32.totalorder %s72, %s74
      %p78 = scmp.eq.s32.totalorder %s17, 0
      %p79 = por %p77, %p78
      %p80 = scmp.ne.s32.totalorder %s72, %s74
      %p81 = scmp.eq.s32.totalorder %s22, 1
      %p82 = por %p80, %p81
      %p83 = scmp.ne.s32.totalorder %s74, %s75
      %p84 = scmp.eq.s32.totalorder %s22, 0
      %p85 = por %p83, %p84
      %p86 = scmp.ne.s32.totalorder %s74, %s75
      %p87 = scmp.eq.s32.totalorder %s23, 1
      %p88 = por %p86, %p87
      %p90 = scmp.ne.s32.totalorder %s75, %s89
      %p91 = scmp.eq.s32.totalorder %s23, 0
      %p92 = por %p90, %p91
      %s94 = sadd.s32 %s93, 1
      %p97 = scmp.eq.s32.totalorder %s17, 1
      %p98 = scmp.ne.s32.totalorder %s93, %s95
      %p99 = scmp.eq.s32.totalorder %s17, 0
      %p100 = por %p98, %p99
      %p101 = scmp.ne.s32.totalorder %s93, %s95
      %p102 = scmp.eq.s32.totalorder %s22, 1
      %p103 = por %p101, %p102
      %p104 = scmp.ne.s32.totalorder %s95, %s96
      %p105 = scmp.eq.s32.totalorder %s22, 0
      %p106 = por %p104, %p105
      %p107 = scmp.ne.s32.totalorder %s95, %s96
      %p108 = scmp.eq.s32.totalorder %s23, 1
      %p109 = por %p107, %p108
      %p111 = scmp.ne.s32.totalorder %s96, %s110
      %p112 = scmp.eq.s32.totalorder %s23, 0
      %p113 = por %p111, %p112
      %s115 = sadd.s32 %s114, 1
      %p118 = scmp.eq.s32.totalorder %s17, 1
      %p119 = scmp.ne.s32.totalorder %s114, %s116
      %p120 = scmp.eq.s32.totalorder %s17, 0
      %p121 = por %p119, %p120
      %p122 = scmp.ne.s32.totalorder %s114, %s116
      %p123 = scmp.eq.s32.totalorder %s22, 1
      %p124 = por %p122, %p123
      %p125 = scmp.ne.s32.totalorder %s116, %s117
      %p126 = scmp.eq.s32.totalorder %s22, 0
      %p127 = por %p125, %p126
      %p128 = scmp.ne.s32.totalorder %s116, %s117
      %p129 = scmp.eq.s32.totalorder %s23, 1
      %p130 = por %p128, %p129
      %p132 = scmp.ne.s32.totalorder %s117, %s131
      %p133 = scmp.eq.s32.totalorder %s23, 0
      %p134 = por %p132, %p133
      %s136 = sadd.s32 %s135, 1
      %p139 = scmp.eq.s32.totalorder %s17, 1
      %p140 = scmp.ne.s32.totalorder %s135, %s137
      %p141 = scmp.eq.s32.totalorder %s17, 0
      %p142 = por %p140, %p141
      %p143 = scmp.ne.s32.totalorder %s135, %s137
      %p144 = scmp.eq.s32.totalorder %s22, 1
      %p145 = por %p143, %p144
      %p146 = scmp.ne.s32.totalorder %s137, %s138
      %p147 = scmp.eq.s32.totalorder %s22, 0
      %p148 = por %p146, %p147
      %p149 = scmp.ne.s32.totalorder %s137, %s138
      %p150 = scmp.eq.s32.totalorder %s23, 1
      %p151 = por %p149, %p150
      %p153 = scmp.ne.s32.totalorder %s138, %s152
      %p154 = scmp.eq.s32.totalorder %s23, 0
      %p155 = por %p153, %p154
      %s156 = ssub.s32 %s17, %s24
      %p157 = scmp.eq.s32.totalorder %s156, 0
      %s159 = sadd.s32 %s158, 1
      %s160 = scalar_select %p157, %s158, %s159
      %p163 = pneg %p157
      %p164 = scmp.eq.s32.totalorder %s17, 1
      %p165 = por %p163, %p164
      %p166 = scmp.ne.s32.totalorder %s158, %s161
      %p167 = scmp.eq.s32.totalorder %s17, 0
      %p168 = por %p166, %p167
      %p169 = scmp.ne.s32.totalorder %s158, %s161
      %p170 = scmp.eq.s32.totalorder %s22, 1
      %p171 = por %p169, %p170
      %p172 = scmp.ne.s32.totalorder %s161, %s162
      %p173 = scmp.eq.s32.totalorder %s22, 0
      %p174 = por %p172, %p173
      %p175 = scmp.ne.s32.totalorder %s161, %s162
      %p176 = scmp.eq.s32.totalorder %s23, 1
      %p177 = por %p175, %p176
      %p179 = scmp.ne.s32.totalorder %s162, %s178
      %p180 = scmp.eq.s32.totalorder %s23, 0
      %p181 = por %p179, %p180
      %p182 = scmp.le.s32.totalorder 1, %s17
      %p183 = scmp.lt.s32.totalorder %s17, 3
      %p184 = pnand %p182, %p183
      %p185 = pneg %p184
      // Predicated region
      $region9: #{net_forward.1} parent=5 // pred_check
        _
      $region10: #{net_forward.1} parent=5 // pred_check_branch
        %187 = sbr.rel (%p184) target = $region12
      $region11: #{net_forward.1} parent=5 // pred_region
        %s188 = ssub.s32 %s17, 1
        // Predicated region
        $region13: #{net_forward.1} parent=11 // pred_check
          %p189 = pneg %p64
        $region14: #{net_forward.1} parent=11 // pred_check_branch
          %191 = sbr.rel (%p189) target = $region16
        $region15: #{net_forward.1} parent=11 // pred_region
          %s193 = ssub.s32 40960, 40960
          %194 = vsyncadd [#allocation5], %s193
          %s195 = sshll.u32 [#allocation4], 4
          %s196 = int_to_ptr.vmem [resolvable:$true] %s195
          %201 = dma.hbm_to_vmem [thread:$0]  %s1, 40960, %s196, [#allocation5], 256, 256, 16
        $region16: #{net_forward.1} parent=11 // pred_fallthru
          _
        // Predicated region
        $region17: #{net_forward.1} parent=11 // pred_check
          %p202 = pneg %p85
        $region18: #{net_forward.1} parent=11 // pred_check_branch
          %204 = sbr.rel (%p202) target = $region20
        $region19: #{net_forward.1} parent=11 // pred_region
          %s206 = ssub.s32 14336, 14336
          %207 = vsyncadd [#allocation8], %s206
          %s208 = sshll.u32 [#allocation7], 4
          %s209 = int_to_ptr.vmem [resolvable:$true] %s208
          %214 = dma.hbm_to_vmem [thread:$0]  %s2, 14336, %s209, [#allocation8], 128, 128, 8
        $region20: #{net_forward.1} parent=11 // pred_fallthru
          _
        // Predicated region
        $region21: #{net_forward.1} parent=11 // pred_check
          %p215 = pneg %p106
        $region22: #{net_forward.1} parent=11 // pred_check_branch
          %217 = sbr.rel (%p215) target = $region24
        $region23: #{net_forward.1} parent=11 // pred_region
          %s219 = ssub.s32 256, 256
          %220 = vsyncadd [#allocation8], %s219
          %s222 = sshll.u32 [#allocation9], 4
          %s223 = int_to_ptr.vmem [resolvable:$true] %s222
          %225 = dma.hbm_to_vmem [thread:$0]  %s3, 256, %s223, [#allocation8]
        $region24: #{net_forward.1} parent=11 // pred_fallthru
          _
        // Predicated region
        $region25: #{net_forward.1} parent=11 // pred_check
          %p226 = pneg %p127
        $region26: #{net_forward.1} parent=11 // pred_check_branch
          %228 = sbr.rel (%p226) target = $region28
        $region27: #{net_forward.1} parent=11 // pred_region
          _
        $region28: #{net_forward.1} parent=11 // pred_fallthru
          _
        // Predicated region
        $region29: #{net_forward.1} parent=11 // pred_check
          %p229 = pneg %p148
        $region30: #{net_forward.1} parent=11 // pred_check_branch
          %231 = sbr.rel (%p229) target = $region32
        $region31: #{net_forward.1} parent=11 // pred_region
          _
        $region32: #{net_forward.1} parent=11 // pred_fallthru
          _
      $region12: #{net_forward.1} parent=5 // pred_fallthru
        _
      %p232 = scmp.lt.s32.totalorder %s17, 2
      // Predicated region
      $region33: #{net_forward.1} parent=5 // pred_check
        %p233 = pneg %p232
      $region34: #{net_forward.1} parent=5 // pred_check_branch
        %235 = sbr.rel (%p233) target = $region36
      $region35: #{net_forward.1} parent=5 // pred_region
        // Predicated region
        $region37: #{net_forward.1} parent=35 // pred_check
          %p236 = pneg %p37
        $region38: #{net_forward.1} parent=35 // pred_check_branch
          %238 = sbr.rel (%p236) target = $region40
        $region39: #{net_forward.1} parent=35 // pred_region
          %p239 = scmp.lt.s32.totalorder %s17, 1
          %s240 = scalar_select %p239, %s17, 1
          %s241 = smul.addr %s240, 4
          %s242 = smul.addr %s241, 8
          %s243 = scalar_lea.vmem %s0, %s242
        $region40: #{net_forward.1} parent=35 // pred_fallthru
          _
      $region36: #{net_forward.1} parent=5 // pred_fallthru
        _
      %p244 = scmp.le.s32.totalorder 1, %s17
      %p245 = scmp.lt.s32.totalorder %s17, 3
      %p246 = pnand %p244, %p245
      %p247 = pneg %p246
      // Predicated region
      $region41: #{net_forward.1} parent=5 // pred_check
        _
      $region42: #{net_forward.1} parent=5 // pred_check_branch
        %249 = sbr.rel (%p246) target = $region44
      $region43: #{net_forward.1} parent=5 // pred_region
        %s250 = ssub.s32 %s17, 1
        // Predicated region
        $region45: #{net_forward.1} parent=43 // pred_check
          %p251 = pneg %p64
        $region46: #{net_forward.1} parent=43 // pred_check_branch
          %253 = sbr.rel (%p251) target = $region48
        $region47: #{net_forward.1} parent=43 // pred_region
          %254 = dma.done [#allocation5], 40960
        $region48: #{net_forward.1} parent=43 // pred_fallthru
          _
        // Predicated region
        $region49: #{net_forward.1} parent=43 // pred_check
          %p255 = pneg %p85
        $region50: #{net_forward.1} parent=43 // pred_check_branch
          %257 = sbr.rel (%p255) target = $region52
        $region51: #{net_forward.1} parent=43 // pred_region
          %258 = dma.done [#allocation8], 14336
        $region52: #{net_forward.1} parent=43 // pred_fallthru
          _
        // Predicated region
        $region53: #{net_forward.1} parent=43 // pred_check
          %p259 = pneg %p106
        $region54: #{net_forward.1} parent=43 // pred_check_branch
          %261 = sbr.rel (%p259) target = $region56
        $region55: #{net_forward.1} parent=43 // pred_region
          %262 = dma.done [#allocation8], 256
        $region56: #{net_forward.1} parent=43 // pred_fallthru
          _
        %p263 = scmp.lt.s32.totalorder %s22, 1
        %s264 = scalar_select %p263, %s22, 1
        %s265 = smul.addr %s264, 4
        %s266 = smul.addr %s265, 8
        %s267 = scalar_lea.vmem %s0, %s266
        %p268 = pneg %p43
        %p269 = pneg %p40
        %p270 = pneg %p64
        %p271 = pneg %p61
        %p272 = pneg %p85
        %p273 = pneg %p82
        %p274 = pneg %p106
        %p275 = pneg %p103
        %p276 = pneg %p127
        %p277 = pneg %p124
        %p278 = pneg %p148
        %p279 = pneg %p145
        %p280 = pneg %p174
        %p281 = pneg %p171
        %s282 = sand.u32 %s161, 1
        %s283 = scalar_lea.sflag [#allocation6], %s282
        %s284 = sand.u32 %s161, 1
        %s285 = scalar_lea.vmem [#allocation10], %s284
        %p286 = scmp.lt.s32.totalorder %s22, 1
        %s287 = scalar_select %p286, %s22, 1
        %s288 = smul.addr %s287, 4
        %s289 = smul.addr %s288, 8
        %s290 = scalar_lea.vmem %s0, %s289
        %v291 = vld [vmem:[%s290] sm:$0xff]
        %v292 = vld [vmem:[%s290 + $0x8] sm:$0xff]
        %v293 = vld [vmem:[%s290 + $0x10] sm:$0xff]
        %v294 = vld [vmem:[%s290 + $0x18] sm:$0xf]
        %v295 = vld [vmem:[#allocation4] sm:$0xff]
        %v296 = vld [vmem:[#allocation4 + $0x8] sm:$0xff]
        %v297 = vld [vmem:[#allocation4 + $0x10] sm:$0xff]
        %v298 = vld [vmem:[#allocation4 + $0x18] sm:$0xff]
        %v299 = vld [vmem:[#allocation4 + $0x20] sm:$0xff]
        %v300 = vld [vmem:[#allocation4 + $0x28] sm:$0xff]
        %v301 = vld [vmem:[#allocation4 + $0x30] sm:$0xff]
        %v302 = vld [vmem:[#allocation4 + $0x38] sm:$0xff]
        %v303 = vld [vmem:[#allocation4 + $0x40] sm:$0xff]
        %v304 = vld [vmem:[#allocation4 + $0x48] sm:$0xff]
        %v305 = vld [vmem:[#allocation4 + $0x50] sm:$0xff]
        %v306 = vld [vmem:[#allocation4 + $0x58] sm:$0xff]
        %v307 = vld [vmem:[#allocation4 + $0x60] sm:$0xff]
        %v308 = vld [vmem:[#allocation4 + $0x68] sm:$0xff]
        %v309 = vld [vmem:[#allocation4 + $0x70] sm:$0xff]
        %v310 = vld [vmem:[#allocation4 + $0x78] sm:$0xff]
        %v311 = vld [vmem:[#allocation4 + $0x80] sm:$0xff]
        %v312 = vld [vmem:[#allocation4 + $0x88] sm:$0xff]
        %v313 = vld [vmem:[#allocation4 + $0x90] sm:$0xff]
        %v314 = vld [vmem:[#allocation4 + $0x98] sm:$0xff]
        %v315 = vld [vmem:[#allocation4 + $0xa0] sm:$0xff]
        %v316 = vld [vmem:[#allocation4 + $0xa8] sm:$0xff]
        %v317 = vld [vmem:[#allocation4 + $0xb0] sm:$0xff]
        %v318 = vld [vmem:[#allocation4 + $0xb8] sm:$0xff]
        %v319 = vld [vmem:[#allocation4 + $0xc0] sm:$0xff]
        %v320 = vld [vmem:[#allocation4 + $0xc8] sm:$0xff]
        %v321 = vld [vmem:[#allocation4 + $0xd0] sm:$0xff]
        %v322 = vld [vmem:[#allocation4 + $0xd8] sm:$0xff]
        %v323 = vld [vmem:[#allocation4 + $0xe0] sm:$0xff]
        %v324 = vld [vmem:[#allocation4 + $0xe8] sm:$0xff]
        %v325 = vld [vmem:[#allocation4 + $0xf0] sm:$0xff]
        %v326 = vld [vmem:[#allocation4 + $0xf8] sm:$0xff]
        %v327 = vld [vmem:[%s290 + $0x1] sm:$0xff]
        %v328 = vld [vmem:[%s290 + $0x9] sm:$0xff]
        %v329 = vld [vmem:[%s290 + $0x11] sm:$0xff]
        %v330 = vld [vmem:[%s290 + $0x19] sm:$0xf]
        %s331 = scalar_lea.vmem [#allocation4], 256
        %v332 = vld [vmem:[%s331] sm:$0xff]
        %v333 = vld [vmem:[%s331 + $0x8] sm:$0xff]
        %v334 = vld [vmem:[%s331 + $0x10] sm:$0xff]
        %v335 = vld [vmem:[%s331 + $0x18] sm:$0xff]
        %v336 = vld [vmem:[%s331 + $0x20] sm:$0xff]
        %v337 = vld [vmem:[%s331 + $0x28] sm:$0xff]
        %v338 = vld [vmem:[%s331 + $0x30] sm:$0xff]
        %v339 = vld [vmem:[%s331 + $0x38] sm:$0xff]
        %v340 = vld [vmem:[%s331 + $0x40] sm:$0xff]
        %v341 = vld [vmem:[%s331 + $0x48] sm:$0xff]
        %v342 = vld [vmem:[%s331 + $0x50] sm:$0xff]
        %v343 = vld [vmem:[%s331 + $0x58] sm:$0xff]
        %v344 = vld [vmem:[%s331 + $0x60] sm:$0xff]
        %v345 = vld [vmem:[%s331 + $0x68] sm:$0xff]
        %v346 = vld [vmem:[%s331 + $0x70] sm:$0xff]
        %v347 = vld [vmem:[%s331 + $0x78] sm:$0xff]
        %v348 = vld [vmem:[%s331 + $0x80] sm:$0xff]
        %v349 = vld [vmem:[%s331 + $0x88] sm:$0xff]
        %v350 = vld [vmem:[%s331 + $0x90] sm:$0xff]
        %v351 = vld [vmem:[%s331 + $0x98] sm:$0xff]
        %v352 = vld [vmem:[%s331 + $0xa0] sm:$0xff]
        %v353 = vld [vmem:[%s331 + $0xa8] sm:$0xff]
        %v354 = vld [vmem:[%s331 + $0xb0] sm:$0xff]
        %v355 = vld [vmem:[%s331 + $0xb8] sm:$0xff]
        %v356 = vld [vmem:[%s331 + $0xc0] sm:$0xff]
        %v357 = vld [vmem:[%s331 + $0xc8] sm:$0xff]
        %v358 = vld [vmem:[%s331 + $0xd0] sm:$0xff]
        %v359 = vld [vmem:[%s331 + $0xd8] sm:$0xff]
        %v360 = vld [vmem:[%s331 + $0xe0] sm:$0xff]
        %v361 = vld [vmem:[%s331 + $0xe8] sm:$0xff]
        %v362 = vld [vmem:[%s331 + $0xf0] sm:$0xff]
        %v363 = vld [vmem:[%s331 + $0xf8] sm:$0xff]
        %364 = vmatprep.subr.mxu0 %v333
        %365 = vmatpush1.msra.mxu0 %v332
        %366 = vmatprep.subr.mxu0 %v335
        %367 = vmatpush1.msra.mxu0 %v334
        %368 = vmatprep.subr.mxu0 %v337
        %369 = vmatpush1.msra.mxu0 %v336
        %370 = vmatprep.subr.mxu0 %v339
        %371 = vmatpush1.msra.mxu0 %v338
        %372 = vmatprep.subr.mxu0 %v341
        %373 = vmatpush1.msra.mxu0 %v340
        %374 = vmatprep.subr.mxu0 %v343
        %375 = vmatpush1.msra.mxu0 %v342
        %376 = vmatprep.subr.mxu0 %v345
        %377 = vmatpush1.msra.mxu0 %v344
        %378 = vmatprep.subr.mxu0 %v347
        %379 = vmatpush1.msra.mxu0 %v346
        %380 = vmatprep.subr.mxu0 %v349
        %381 = vmatpush1.msra.mxu0 %v348
        %382 = vmatprep.subr.mxu0 %v351
        %383 = vmatpush1.msra.mxu0 %v350
        %384 = vmatprep.subr.mxu0 %v353
        %385 = vmatpush1.msra.mxu0 %v352
        %386 = vmatprep.subr.mxu0 %v355
        %387 = vmatpush1.msra.mxu0 %v354
        %388 = vmatprep.subr.mxu0 %v357
        %389 = vmatpush1.msra.mxu0 %v356
        %390 = vmatprep.subr.mxu0 %v359
        %391 = vmatpush1.msra.mxu0 %v358
        %392 = vmatprep.subr.mxu0 %v361
        %393 = vmatpush1.msra.mxu0 %v360
        %394 = vmatprep.subr.mxu0 %v363
        %395 = vmatpush1.msra.mxu0 %v362
        %396 = vmatprep.subr.mxu0 0.0
        %397 = vmatpush1.msra.mxu0 0.0
        %398 = vmatprep.subr.mxu0 0.0
        %399 = vmatpush1.msra.mxu0 0.0
        %400 = vmatprep.subr.mxu0 0.0
        %401 = vmatpush1.msra.mxu0 0.0
        %402 = vmatprep.subr.mxu0 0.0
        %403 = vmatpush1.msra.mxu0 0.0
        %404 = vmatprep.subr.mxu0 0.0
        %405 = vmatpush1.msra.mxu0 0.0
        %406 = vmatprep.subr.mxu0 0.0
        %407 = vmatpush1.msra.mxu0 0.0
        %408 = vmatprep.subr.mxu0 0.0
        %409 = vmatpush1.msra.mxu0 0.0
        %410 = vmatprep.subr.mxu0 0.0
        %411 = vmatpush1.msra.mxu0 0.0
        %412 = vmatprep.subr.mxu0 0.0
        %413 = vmatpush1.msra.mxu0 0.0
        %414 = vmatprep.subr.mxu0 0.0
        %415 = vmatpush1.msra.mxu0 0.0
        %416 = vmatprep.subr.mxu0 0.0
        %417 = vmatpush1.msra.mxu0 0.0
        %418 = vmatprep.subr.mxu0 0.0
        %419 = vmatpush1.msra.mxu0 0.0
        %420 = vmatprep.subr.mxu0 0.0
        %421 = vmatpush1.msra.mxu0 0.0
        %422 = vmatprep.subr.mxu0 0.0
        %423 = vmatpush1.msra.mxu0 0.0
        %424 = vmatprep.subr.mxu0 0.0
        %425 = vmatpush1.msra.mxu0 0.0
        %426 = vmatprep.subr.mxu0 0.0
        %427 = vmatpush1.msra.mxu0 0.0
        %428 = vmatprep.mubr.f32.mxu0 0.0
        %429 = vmatmul.mubr.f32.gmra.mrb[0].mxu0 %v327
        %v430 = vpop.f32.mrb[0].mxu0
        %v431 = vadd.f32 0.0, %v430
        %v432 = vpop.f32.mrb[0].mxu0
        %v433 = vadd.f32 0.0, %v432
        %434 = vmatprep.mubr.f32.mxu0 0.0
        %435 = vmatmul.mubr.f32.gmra.mrb[0].mxu0 %v328
        %v436 = vpop.f32.mrb[0].mxu0
        %v437 = vadd.f32 0.0, %v436
        %v438 = vpop.f32.mrb[0].mxu0
        %v439 = vadd.f32 0.0, %v438
        %440 = vmatprep.mubr.f32.mxu0 0.0
        %441 = vmatmul.mubr.f32.gmra.mrb[0].mxu0 %v329
        %v442 = vpop.f32.mrb[0].mxu0
        %v443 = vadd.f32 0.0, %v442
        %v444 = vpop.f32.mrb[0].mxu0
        %v445 = vadd.f32 0.0, %v444
        %446 = vmatprep.mubr.f32.mxu0 0.0
        %447 = vmatmul.mubr.f32.gmra.mrb[0].mxu0 %v330
        %v448 = vpop.f32.mrb[0].mxu0
        %v449 = vadd.f32 0.0, %v448
        %v450 = vpop.f32.mrb[0].mxu0
        %v451 = vadd.f32 0.0, %v450
        %452 = vdwg.mxu0
        %453 = vmatprep.subr.mxu0 %v296
        %454 = vmatpush1.msra.mxu0 %v295
        %455 = vmatprep.subr.mxu0 %v298
        %456 = vmatpush1.msra.mxu0 %v297
        %457 = vmatprep.subr.mxu0 %v300
        %458 = vmatpush1.msra.mxu0 %v299
        %459 = vmatprep.subr.mxu0 %v302
        %460 = vmatpush1.msra.mxu0 %v301
        %461 = vmatprep.subr.mxu0 %v304
        %462 = vmatpush1.msra.mxu0 %v303
        %463 = vmatprep.subr.mxu0 %v306
        %464 = vmatpush1.msra.mxu0 %v305
        %465 = vmatprep.subr.mxu0 %v308
        %466 = vmatpush1.msra.mxu0 %v307
        %467 = vmatprep.subr.mxu0 %v310
        %468 = vmatpush1.msra.mxu0 %v309
        %469 = vmatprep.subr.mxu0 %v312
        %470 = vmatpush1.msra.mxu0 %v311
        %471 = vmatprep.subr.mxu0 %v314
        %472 = vmatpush1.msra.mxu0 %v313
        %473 = vmatprep.subr.mxu0 %v316
        %474 = vmatpush1.msra.mxu0 %v315
        %475 = vmatprep.subr.mxu0 %v318
        %476 = vmatpush1.msra.mxu0 %v317
        %477 = vmatprep.subr.mxu0 %v320
        %478 = vmatpush1.msra.mxu0 %v319
        %479 = vmatprep.subr.mxu0 %v322
        %480 = vmatpush1.msra.mxu0 %v321
        %481 = vmatprep.subr.mxu0 %v324
        %482 = vmatpush1.msra.mxu0 %v323
        %483 = vmatprep.subr.mxu0 %v326
        %484 = vmatpush1.msra.mxu0 %v325
        %485 = vmatprep.subr.mxu0 0.0
        %486 = vmatpush1.msra.mxu0 0.0
        %487 = vmatprep.subr.mxu0 0.0
        %488 = vmatpush1.msra.mxu0 0.0
        %489 = vmatprep.subr.mxu0 0.0
        %490 = vmatpush1.msra.mxu0 0.0
        %491 = vmatprep.subr.mxu0 0.0
        %492 = vmatpush1.msra.mxu0 0.0
        %493 = vmatprep.subr.mxu0 0.0
        %494 = vmatpush1.msra.mxu0 0.0
        %495 = vmatprep.subr.mxu0 0.0
        %496 = vmatpush1.msra.mxu0 0.0
        %497 = vmatprep.subr.mxu0 0.0
        %498 = vmatpush1.msra.mxu0 0.0
        %499 = vmatprep.subr.mxu0 0.0
        %500 = vmatpush1.msra.mxu0 0.0
        %501 = vmatprep.subr.mxu0 0.0
        %502 = vmatpush1.msra.mxu0 0.0
        %503 = vmatprep.subr.mxu0 0.0
        %504 = vmatpush1.msra.mxu0 0.0
        %505 = vmatprep.subr.mxu0 0.0
        %506 = vmatpush1.msra.mxu0 0.0
        %507 = vmatprep.subr.mxu0 0.0
        %508 = vmatpush1.msra.mxu0 0.0
        %509 = vmatprep.subr.mxu0 0.0
        %510 = vmatpush1.msra.mxu0 0.0
        %511 = vmatprep.subr.mxu0 0.0
        %512 = vmatpush1.msra.mxu0 0.0
        %513 = vmatprep.subr.mxu0 0.0
        %514 = vmatpush1.msra.mxu0 0.0
        %515 = vmatprep.subr.mxu0 0.0
        %516 = vmatpush1.msra.mxu0 0.0
        %517 = vmatprep.mubr.f32.mxu0 0.0
        %518 = vmatmul.mubr.f32.gmra.mrb[0].mxu0 %v291
        %v519 = vpop.f32.mrb[0].mxu0
        %v520 = vadd.f32 %v431, %v519
        %v521 = vpop.f32.mrb[0].mxu0
        %v522 = vadd.f32 %v433, %v521
        %523 = vmatprep.mubr.f32.mxu0 0.0
        %524 = vmatmul.mubr.f32.gmra.mrb[0].mxu0 %v292
        %v525 = vpop.f32.mrb[0].mxu0
        %v526 = vadd.f32 %v437, %v525
        %v527 = vpop.f32.mrb[0].mxu0
        %v528 = vadd.f32 %v439, %v527
        %529 = vmatprep.mubr.f32.mxu0 0.0
        %530 = vmatmul.mubr.f32.gmra.mrb[0].mxu0 %v293
        %v531 = vpop.f32.mrb[0].mxu0
        %v532 = vadd.f32 %v443, %v531
        %v533 = vpop.f32.mrb[0].mxu0
        %v534 = vadd.f32 %v445, %v533
        %535 = vmatprep.mubr.f32.mxu0 0.0
        %536 = vmatmul.mubr.f32.gmra.mrb[0].mxu0 %v294
        %v537 = vpop.f32.mrb[0].mxu0
        %v538 = vadd.f32 %v449, %v537
        %v539 = vpop.f32.mrb[0].mxu0
        %v540 = vadd.f32 %v451, %v539
        %541 = vdwg.mxu0
        %v542 = vld [vmem:[%s290 + $0x2] sm:$0xff]
        %v543 = vld [vmem:[%s290 + $0xa] sm:$0xff]
        %v544 = vld [vmem:[%s290 + $0x12] sm:$0xff]
        %v545 = vld [vmem:[%s290 + $0x1a] sm:$0xf]
        %s546 = scalar_lea.vmem [#allocation4], 512
        %v547 = vld [vmem:[%s546] sm:$0xff]
        %v548 = vld [vmem:[%s546 + $0x8] sm:$0xff]
        %v549 = vld [vmem:[%s546 + $0x10] sm:$0xff]
        %v550 = vld [vmem:[%s546 + $0x18] sm:$0xff]
        %v551 = vld [vmem:[%s546 + $0x20] sm:$0xff]
        %v552 = vld [vmem:[%s546 + $0x28] sm:$0xff]
        %v553 = vld [vmem:[%s546 + $0x30] sm:$0xff]
        %v554 = vld [vmem:[%s546 + $0x38] sm:$0xff]
        %v555 = vld [vmem:[%s546 + $0x40] sm:$0xff]
        %v556 = vld [vmem:[%s546 + $0x48] sm:$0xff]
        %v557 = vld [vmem:[%s546 + $0x50] sm:$0xff]
        %v558 = vld [vmem:[%s546 + $0x58] sm:$0xff]
        %v559 = vld [vmem:[%s546 + $0x60] sm:$0xff]
        %v560 = vld [vmem:[%s546 + $0x68] sm:$0xff]
        %v561 = vld [vmem:[%s546 + $0x70] sm:$0xff]
        %v562 = vld [vmem:[%s546 + $0x78] sm:$0xff]
        %v563 = vld [vmem:[%s546 + $0x80] sm:$0xff]
        %v564 = vld [vmem:[%s546 + $0x88] sm:$0xff]
        %v565 = vld [vmem:[%s546 + $0x90] sm:$0xff]
        %v566 = vld [vmem:[%s546 + $0x98] sm:$0xff]
        %v567 = vld [vmem:[%s546 + $0xa0] sm:$0xff]
        %v568 = vld [vmem:[%s546 + $0xa8] sm:$0xff]
        %v569 = vld [vmem:[%s546 + $0xb0] sm:$0xff]
        %v570 = vld [vmem:[%s546 + $0xb8] sm:$0xff]
        %v571 = vld [vmem:[%s546 + $0xc0] sm:$0xff]
        %v572 = vld [vmem:[%s546 + $0xc8] sm:$0xff]
        %v573 = vld [vmem:[%s546 + $0xd0] sm:$0xff]
        %v574 = vld [vmem:[%s546 + $0xd8] sm:$0xff]
        %v575 = vld [vmem:[%s546 + $0xe0] sm:$0xff]
        %v576 = vld [vmem:[%s546 + $0xe8] sm:$0xff]
        %v577 = vld [vmem:[%s546 + $0xf0] sm:$0xff]
        %v578 = vld [vmem:[%s546 + $0xf8] sm:$0xff]
        %579 = vmatprep.subr.mxu0 %v548
        %580 = vmatpush1.msra.mxu0 %v547
        %581 = vmatprep.subr.mxu0 %v550
        %582 = vmatpush1.msra.mxu0 %v549
        %583 = vmatprep.subr.mxu0 %v552
        %584 = vmatpush1.msra.mxu0 %v551
        %585 = vmatprep.subr.mxu0 %v554
        %586 = vmatpush1.msra.mxu0 %v553
        %587 = vmatprep.subr.mxu0 %v556
        %588 = vmatpush1.msra.mxu0 %v555
        %589 = vmatprep.subr.mxu0 %v558
        %590 = vmatpush1.msra.mxu0 %v557
        %591 = vmatprep.subr.mxu0 %v560
        %592 = vmatpush1.msra.mxu0 %v559
        %593 = vmatprep.subr.mxu0 %v562
        %594 = vmatpush1.msra.mxu0 %v561
        %595 = vmatprep.subr.mxu0 %v564
        %596 = vmatpush1.msra.mxu0 %v563
        %597 = vmatprep.subr.mxu0 %v566
        %598 = vmatpush1.msra.mxu0 %v565
        %599 = vmatprep.subr.mxu0 %v568
        %600 = vmatpush1.msra.mxu0 %v567
        %601 = vmatprep.subr.mxu0 %v570
        %602 = vmatpush1.msra.mxu0 %v569
        %603 = vmatprep.subr.mxu0 %v572
        %604 = vmatpush1.msra.mxu0 %v571
        %605 = vmatprep.subr.mxu0 %v574
        %606 = vmatpush1.msra.mxu0 %v573
        %607 = vmatprep.subr.mxu0 %v576
        %608 = vmatpush1.msra.mxu0 %v575
        %609 = vmatprep.subr.mxu0 %v578
        %610 = vmatpush1.msra.mxu0 %v577
        %611 = vmatprep.subr.mxu0 0.0
        %612 = vmatpush1.msra.mxu0 0.0
        %613 = vmatprep.subr.mxu0 0.0
        %614 = vmatpush1.msra.mxu0 0.0
        %615 = vmatprep.subr.mxu0 0.0
        %616 = vmatpush1.msra.mxu0 0.0
        %617 = vmatprep.subr.mxu0 0.0
        %618 = vmatpush1.msra.mxu0 0.0
        %619 = vmatprep.subr.mxu0 0.0
        %620 = vmatpush1.msra.mxu0 0.0
        %621 = vmatprep.subr.mxu0 0.0
        %622 = vmatpush1.msra.mxu0 0.0
        %623 = vmatprep.subr.mxu0 0.0
        %624 = vmatpush1.msra.mxu0 0.0
        %625 = vmatprep.subr.mxu0 0.0
        %626 = vmatpush1.msra.mxu0 0.0
        %627 = vmatprep.subr.mxu0 0.0
        %628 = vmatpush1.msra.mxu0 0.0
        %629 = vmatprep.subr.mxu0 0.0
        %630 = vmatpush1.msra.mxu0 0.0
        %631 = vmatprep.subr.mxu0 0.0
        %632 = vmatpush1.msra.mxu0 0.0
        %633 = vmatprep.subr.mxu0 0.0
        %634 = vmatpush1.msra.mxu0 0.0
        %635 = vmatprep.subr.mxu0 0.0
        %636 = vmatpush1.msra.mxu0 0.0
        %637 = vmatprep.subr.mxu0 0.0
        %638 = vmatpush1.msra.mxu0 0.0
        %639 = vmatprep.subr.mxu0 0.0
        %640 = vmatpush1.msra.mxu0 0.0
        %641 = vmatprep.subr.mxu0 0.0
        %642 = vmatpush1.msra.mxu0 0.0
        %643 = vmatprep.mubr.f32.mxu0 0.0
        %644 = vmatmul.mubr.f32.gmra.mrb[0].mxu0 %v542
        %v645 = vpop.f32.mrb[0].mxu0
        %v646 = vadd.f32 0.0, %v645
        %v647 = vpop.f32.mrb[0].mxu0
        %v648 = vadd.f32 0.0, %v647
        %649 = vmatprep.mubr.f32.mxu0 0.0
        %650 = vmatmul.mubr.f32.gmra.mrb[0].mxu0 %v543
        %v651 = vpop.f32.mrb[0].mxu0
        %v652 = vadd.f32 0.0, %v651
        %v653 = vpop.f32.mrb[0].mxu0
        %v654 = vadd.f32 0.0, %v653
        %655 = vmatprep.mubr.f32.mxu0 0.0
        %656 = vmatmul.mubr.f32.gmra.mrb[0].mxu0 %v544
        %v657 = vpop.f32.mrb[0].mxu0
        %v658 = vadd.f32 0.0, %v657
        %v659 = vpop.f32.mrb[0].mxu0
        %v660 = vadd.f32 0.0, %v659
        %661 = vmatprep.mubr.f32.mxu0 0.0
        %662 = vmatmul.mubr.f32.gmra.mrb[0].mxu0 %v545
        %v663 = vpop.f32.mrb[0].mxu0
        %v664 = vadd.f32 0.0, %v663
        %v665 = vpop.f32.mrb[0].mxu0
        %v666 = vadd.f32 0.0, %v665
        %667 = vdwg.mxu0
        %v668 = vadd.f32 %v520, %v646
        %v669 = vadd.f32 %v522, %v648
        %v670 = vadd.f32 %v526, %v652
        %v671 = vadd.f32 %v528, %v654
        %v672 = vadd.f32 %v532, %v658
        %v673 = vadd.f32 %v534, %v660
        %v674 = vadd.f32 %v538, %v664
        %v675 = vadd.f32 %v540, %v666
        %v676 = vld [vmem:[%s290 + $0x3] sm:$0xff]
        %v677 = vld [vmem:[%s290 + $0xb] sm:$0xff]
        %v678 = vld [vmem:[%s290 + $0x13] sm:$0xff]
        %v679 = vld [vmem:[%s290 + $0x1b] sm:$0xf]
        %s680 = scalar_lea.vmem [#allocation4], 768
        %v681 = vld [vmem:[%s680] sm:$0xff]
        %v682 = vld [vmem:[%s680 + $0x8] sm:$0xff]
        %v683 = vld [vmem:[%s680 + $0x10] sm:$0xff]
        %v684 = vld [vmem:[%s680 + $0x18] sm:$0xff]
        %v685 = vld [vmem:[%s680 + $0x20] sm:$0xff]
        %v686 = vld [vmem:[%s680 + $0x28] sm:$0xff]
        %v687 = vld [vmem:[%s680 + $0x30] sm:$0xff]
        %v688 = vld [vmem:[%s680 + $0x38] sm:$0xff]
        %v689 = vld [vmem:[%s680 + $0x40] sm:$0xff]
        %v690 = vld [vmem:[%s680 + $0x48] sm:$0xff]
        %v691 = vld [vmem:[%s680 + $0x50] sm:$0xff]
        %v692 = vld [vmem:[%s680 + $0x58] sm:$0xff]
        %v693 = vld [vmem:[%s680 + $0x60] sm:$0xff]
        %v694 = vld [vmem:[%s680 + $0x68] sm:$0xff]
        %v695 = vld [vmem:[%s680 + $0x70] sm:$0xff]
        %v696 = vld [vmem:[%s680 + $0x78] sm:$0xff]
        %v697 = vld [vmem:[%s680 + $0x80] sm:$0xff]
        %v698 = vld [vmem:[%s680 + $0x88] sm:$0xff]
        %v699 = vld [vmem:[%s680 + $0x90] sm:$0xff]
        %v700 = vld [vmem:[%s680 + $0x98] sm:$0xff]
        %v701 = vld [vmem:[%s680 + $0xa0] sm:$0xff]
        %v702 = vld [vmem:[%s680 + $0xa8] sm:$0xff]
        %v703 = vld [vmem:[%s680 + $0xb0] sm:$0xff]
        %v704 = vld [vmem:[%s680 + $0xb8] sm:$0xff]
        %v705 = vld [vmem:[%s680 + $0xc0] sm:$0xff]
        %v706 = vld [vmem:[%s680 + $0xc8] sm:$0xff]
        %v707 = vld [vmem:[%s680 + $0xd0] sm:$0xff]
        %v708 = vld [vmem:[%s680 + $0xd8] sm:$0xff]
        %v709 = vld [vmem:[%s680 + $0xe0] sm:$0xff]
        %v710 = vld [vmem:[%s680 + $0xe8] sm:$0xff]
        %v711 = vld [vmem:[%s680 + $0xf0] sm:$0xff]
        %v712 = vld [vmem:[%s680 + $0xf8] sm:$0xff]
        %713 = vmatprep.subr.mxu0 %v682
        %714 = vmatpush1.msra.mxu0 %v681
        %715 = vmatprep.subr.mxu0 %v684
        %716 = vmatpush1.msra.mxu0 %v683
        %717 = vmatprep.subr.mxu0 %v686
        %718 = vmatpush1.msra.mxu0 %v685
        %719 = vmatprep.subr.mxu0 %v688
        %720 = vmatpush1.msra.mxu0 %v687
        %721 = vmatprep.subr.mxu0 %v690
        %722 = vmatpush1.msra.mxu0 %v689
        %723 = vmatprep.subr.mxu0 %v692
        %724 = vmatpush1.msra.mxu0 %v691
        %725 = vmatprep.subr.mxu0 %v694
        %726 = vmatpush1.msra.mxu0 %v693
        %727 = vmatprep.subr.mxu0 %v696
        %728 = vmatpush1.msra.mxu0 %v695
        %729 = vmatprep.subr.mxu0 %v698
        %730 = vmatpush1.msra.mxu0 %v697
        %731 = vmatprep.subr.mxu0 %v700
        %732 = vmatpush1.msra.mxu0 %v699
        %733 = vmatprep.subr.mxu0 %v702
        %734 = vmatpush1.msra.mxu0 %v701
        %735 = vmatprep.subr.mxu0 %v704
        %736 = vmatpush1.msra.mxu0 %v703
        %737 = vmatprep.subr.mxu0 %v706
        %738 = vmatpush1.msra.mxu0 %v705
        %739 = vmatprep.subr.mxu0 %v708
        %740 = vmatpush1.msra.mxu0 %v707
        %741 = vmatprep.subr.mxu0 %v710
        %742 = vmatpush1.msra.mxu0 %v709
        %743 = vmatprep.subr.mxu0 %v712
        %744 = vmatpush1.msra.mxu0 %v711
        %745 = vmatprep.subr.mxu0 0.0
        %746 = vmatpush1.msra.mxu0 0.0
        %747 = vmatprep.subr.mxu0 0.0
        %748 = vmatpush1.msra.mxu0 0.0
        %749 = vmatprep.subr.mxu0 0.0
        %750 = vmatpush1.msra.mxu0 0.0
        %751 = vmatprep.subr.mxu0 0.0
        %752 = vmatpush1.msra.mxu0 0.0
        %753 = vmatprep.subr.mxu0 0.0
        %754 = vmatpush1.msra.mxu0 0.0
        %755 = vmatprep.subr.mxu0 0.0
        %756 = vmatpush1.msra.mxu0 0.0
        %757 = vmatprep.subr.mxu0 0.0
        %758 = vmatpush1.msra.mxu0 0.0
        %759 = vmatprep.subr.mxu0 0.0
        %760 = vmatpush1.msra.mxu0 0.0
        %761 = vmatprep.subr.mxu0 0.0
        %762 = vmatpush1.msra.mxu0 0.0
        %763 = vmatprep.subr.mxu0 0.0
        %764 = vmatpush1.msra.mxu0 0.0
        %765 = vmatprep.subr.mxu0 0.0
        %766 = vmatpush1.msra.mxu0 0.0
        %767 = vmatprep.subr.mxu0 0.0
        %768 = vmatpush1.msra.mxu0 0.0
        %769 = vmatprep.subr.mxu0 0.0
        %770 = vmatpush1.msra.mxu0 0.0
        %771 = vmatprep.subr.mxu0 0.0
        %772 = vmatpush1.msra.mxu0 0.0
        %773 = vmatprep.subr.mxu0 0.0
        %774 = vmatpush1.msra.mxu0 0.0
        %775 = vmatprep.subr.mxu0 0.0
        %776 = vmatpush1.msra.mxu0 0.0
        %777 = vmatprep.mubr.f32.mxu0 0.0
        %778 = vmatmul.mubr.f32.gmra.mrb[0].mxu0 %v676
        %v779 = vpop.f32.mrb[0].mxu0
        %v780 = vadd.f32 0.0, %v779
        %v781 = vpop.f32.mrb[0].mxu0
        %v782 = vadd.f32 0.0, %v781
        %783 = vmatprep.mubr.f32.mxu0 0.0
        %784 = vmatmul.mubr.f32.gmra.mrb[0].mxu0 %v677
        %v785 = vpop.f32.mrb[0].mxu0
        %v786 = vadd.f32 0.0, %v785
        %v787 = vpop.f32.mrb[0].mxu0
        %v788 = vadd.f32 0.0, %v787
        %789 = vmatprep.mubr.f32.mxu0 0.0
        %790 = vmatmul.mubr.f32.gmra.mrb[0].mxu0 %v678
        %v791 = vpop.f32.mrb[0].mxu0
        %v792 = vadd.f32 0.0, %v791
        %v793 = vpop.f32.mrb[0].mxu0
        %v794 = vadd.f32 0.0, %v793
        %795 = vmatprep.mubr.f32.mxu0 0.0
        %796 = vmatmul.mubr.f32.gmra.mrb[0].mxu0 %v679
        %v797 = vpop.f32.mrb[0].mxu0
        %v798 = vadd.f32 0.0, %v797
        %v799 = vpop.f32.mrb[0].mxu0
        %v800 = vadd.f32 0.0, %v799
        %801 = vdwg.mxu0
        %v802 = vadd.f32 %v668, %v780
        %v803 = vadd.f32 %v669, %v782
        %v804 = vadd.f32 %v670, %v786
        %v805 = vadd.f32 %v671, %v788
        %v806 = vadd.f32 %v672, %v792
        %v807 = vadd.f32 %v673, %v794
        %v808 = vadd.f32 %v674, %v798
        %v809 = vadd.f32 %v675, %v800
        %v810 = vld [vmem:[%s290 + $0x4] sm:$0xff]
        %v811 = vld [vmem:[%s290 + $0xc] sm:$0xff]
        %v812 = vld [vmem:[%s290 + $0x14] sm:$0xff]
        %v813 = vld [vmem:[%s290 + $0x1c] sm:$0xf]
        %s814 = scalar_lea.vmem [#allocation4], 1024
        %v815 = vld [vmem:[%s814] sm:$0xff]
        %v816 = vld [vmem:[%s814 + $0x8] sm:$0xff]
        %v817 = vld [vmem:[%s814 + $0x10] sm:$0xff]
        %v818 = vld [vmem:[%s814 + $0x18] sm:$0xff]
        %v819 = vld [vmem:[%s814 + $0x20] sm:$0xff]
        %v820 = vld [vmem:[%s814 + $0x28] sm:$0xff]
        %v821 = vld [vmem:[%s814 + $0x30] sm:$0xff]
        %v822 = vld [vmem:[%s814 + $0x38] sm:$0xff]
        %v823 = vld [vmem:[%s814 + $0x40] sm:$0xff]
        %v824 = vld [vmem:[%s814 + $0x48] sm:$0xff]
        %v825 = vld [vmem:[%s814 + $0x50] sm:$0xff]
        %v826 = vld [vmem:[%s814 + $0x58] sm:$0xff]
        %v827 = vld [vmem:[%s814 + $0x60] sm:$0xff]
        %v828 = vld [vmem:[%s814 + $0x68] sm:$0xff]
        %v829 = vld [vmem:[%s814 + $0x70] sm:$0xff]
        %v830 = vld [vmem:[%s814 + $0x78] sm:$0xff]
        %v831 = vld [vmem:[%s814 + $0x80] sm:$0xff]
        %v832 = vld [vmem:[%s814 + $0x88] sm:$0xff]
        %v833 = vld [vmem:[%s814 + $0x90] sm:$0xff]
        %v834 = vld [vmem:[%s814 + $0x98] sm:$0xff]
        %v835 = vld [vmem:[%s814 + $0xa0] sm:$0xff]
        %v836 = vld [vmem:[%s814 + $0xa8] sm:$0xff]
        %v837 = vld [vmem:[%s814 + $0xb0] sm:$0xff]
        %v838 = vld [vmem:[%s814 + $0xb8] sm:$0xff]
        %v839 = vld [vmem:[%s814 + $0xc0] sm:$0xff]
        %v840 = vld [vmem:[%s814 + $0xc8] sm:$0xff]
        %v841 = vld [vmem:[%s814 + $0xd0] sm:$0xff]
        %v842 = vld [vmem:[%s814 + $0xd8] sm:$0xff]
        %v843 = vld [vmem:[%s814 + $0xe0] sm:$0xff]
        %v844 = vld [vmem:[%s814 + $0xe8] sm:$0xff]
        %v845 = vld [vmem:[%s814 + $0xf0] sm:$0xff]
        %v846 = vld [vmem:[%s814 + $0xf8] sm:$0xff]
        %847 = vmatprep.subr.mxu0 %v816
        %848 = vmatpush1.msra.mxu0 %v815
        %849 = vmatprep.subr.mxu0 %v818
        %850 = vmatpush1.msra.mxu0 %v817
        %851 = vmatprep.subr.mxu0 %v820
        %852 = vmatpush1.msra.mxu0 %v819
        %853 = vmatprep.subr.mxu0 %v822
        %854 = vmatpush1.msra.mxu0 %v821
        %855 = vmatprep.subr.mxu0 %v824
        %856 = vmatpush1.msra.mxu0 %v823
        %857 = vmatprep.subr.mxu0 %v826
        %858 = vmatpush1.msra.mxu0 %v825
        %859 = vmatprep.subr.mxu0 %v828
        %860 = vmatpush1.msra.mxu0 %v827
        %861 = vmatprep.subr.mxu0 %v830
        %862 = vmatpush1.msra.mxu0 %v829
        %863 = vmatprep.subr.mxu0 %v832
        %864 = vmatpush1.msra.mxu0 %v831
        %865 = vmatprep.subr.mxu0 %v834
        %866 = vmatpush1.msra.mxu0 %v833
        %867 = vmatprep.subr.mxu0 %v836
        %868 = vmatpush1.msra.mxu0 %v835
        %869 = vmatprep.subr.mxu0 %v838
        %870 = vmatpush1.msra.mxu0 %v837
        %871 = vmatprep.subr.mxu0 %v840
        %872 = vmatpush1.msra.mxu0 %v839
        %873 = vmatprep.subr.mxu0 %v842
        %874 = vmatpush1.msra.mxu0 %v841
        %875 = vmatprep.subr.mxu0 %v844
        %876 = vmatpush1.msra.mxu0 %v843
        %877 = vmatprep.subr.mxu0 %v846
        %878 = vmatpush1.msra.mxu0 %v845
        %879 = vmatprep.subr.mxu0 0.0
        %880 = vmatpush1.msra.mxu0 0.0
        %881 = vmatprep.subr.mxu0 0.0
        %882 = vmatpush1.msra.mxu0 0.0
        %883 = vmatprep.subr.mxu0 0.0
        %884 = vmatpush1.msra.mxu0 0.0
        %885 = vmatprep.subr.mxu0 0.0
        %886 = vmatpush1.msra.mxu0 0.0
        %887 = vmatprep.subr.mxu0 0.0
        %888 = vmatpush1.msra.mxu0 0.0
        %889 = vmatprep.subr.mxu0 0.0
        %890 = vmatpush1.msra.mxu0 0.0
        %891 = vmatprep.subr.mxu0 0.0
        %892 = vmatpush1.msra.mxu0 0.0
        %893 = vmatprep.subr.mxu0 0.0
        %894 = vmatpush1.msra.mxu0 0.0
        %895 = vmatprep.subr.mxu0 0.0
        %896 = vmatpush1.msra.mxu0 0.0
        %897 = vmatprep.subr.mxu0 0.0
        %898 = vmatpush1.msra.mxu0 0.0
        %899 = vmatprep.subr.mxu0 0.0
        %900 = vmatpush1.msra.mxu0 0.0
        %901 = vmatprep.subr.mxu0 0.0
        %902 = vmatpush1.msra.mxu0 0.0
        %903 = vmatprep.subr.mxu0 0.0
        %904 = vmatpush1.msra.mxu0 0.0
        %905 = vmatprep.subr.mxu0 0.0
        %906 = vmatpush1.msra.mxu0 0.0
        %907 = vmatprep.subr.mxu0 0.0
        %908 = vmatpush1.msra.mxu0 0.0
        %909 = vmatprep.subr.mxu0 0.0
        %910 = vmatpush1.msra.mxu0 0.0
        %911 = vmatprep.mubr.f32.mxu0 0.0
        %912 = vmatmul.mubr.f32.gmra.mrb[0].mxu0 %v810
        %v913 = vpop.f32.mrb[0].mxu0
        %v914 = vadd.f32 0.0, %v913
        %v915 = vpop.f32.mrb[0].mxu0
        %v916 = vadd.f32 0.0, %v915
        %917 = vmatprep.mubr.f32.mxu0 0.0
        %918 = vmatmul.mubr.f32.gmra.mrb[0].mxu0 %v811
        %v919 = vpop.f32.mrb[0].mxu0
        %v920 = vadd.f32 0.0, %v919
        %v921 = vpop.f32.mrb[0].mxu0
        %v922 = vadd.f32 0.0, %v921
        %923 = vmatprep.mubr.f32.mxu0 0.0
        %924 = vmatmul.mubr.f32.gmra.mrb[0].mxu0 %v812
        %v925 = vpop.f32.mrb[0].mxu0
        %v926 = vadd.f32 0.0, %v925
        %v927 = vpop.f32.mrb[0].mxu0
        %v928 = vadd.f32 0.0, %v927
        %929 = vmatprep.mubr.f32.mxu0 0.0
        %930 = vmatmul.mubr.f32.gmra.mrb[0].mxu0 %v813
        %v931 = vpop.f32.mrb[0].mxu0
        %v932 = vadd.f32 0.0, %v931
        %v933 = vpop.f32.mrb[0].mxu0
        %v934 = vadd.f32 0.0, %v933
        %935 = vdwg.mxu0
        %v936 = vadd.f32 %v802, %v914
        %v937 = vadd.f32 %v803, %v916
        %v938 = vadd.f32 %v804, %v920
        %v939 = vadd.f32 %v805, %v922
        %v940 = vadd.f32 %v806, %v926
        %v941 = vadd.f32 %v807, %v928
        %v942 = vadd.f32 %v808, %v932
        %v943 = vadd.f32 %v809, %v934
        %v944 = vld [vmem:[#allocation9] ss:$8 sm:$0x3]
        %v946 = vlaneseq
        %v947 = vshrl.u32 %v946, 7
        %v948 = vsub.s32 0, %v947
        %v949 = vrot.slane %v944, %v948
        %v950 = vlaneseq
        %v951 = vshrl.u32 %v950, 7
        %v952 = vsub.s32 1, %v951
        %v953 = vrot.slane %v944, %v952
        %v956 = vadd.f32 %v936, %v949
        %v957 = vadd.f32 %v937, %v953
        %v958 = vadd.f32 %v938, %v949
        %v959 = vadd.f32 %v939, %v953
        %v960 = vadd.f32 %v940, %v949
        %v961 = vadd.f32 %v941, %v953
        %v962 = vadd.f32 %v942, %v949
        %v963 = vadd.f32 %v943, %v953
        %v964 = vmax.f32 %v956, 0.0
        %v965 = vmax.f32 %v957, 0.0
        %v966 = vmax.f32 %v958, 0.0
        %v967 = vmax.f32 %v959, 0.0
        %v968 = vmax.f32 %v960, 0.0
        %v969 = vmax.f32 %v961, 0.0
        %v970 = vmax.f32 %v962, 0.0
        %v971 = vmax.f32 %v963, 0.0
        %v972 = vmax.f32 %v964, %v965
        %v973 = vmax.f32 %v966, %v967
        %v974 = vmax.f32 %v968, %v969
        %v975 = vmax.f32 %v970, %v971
        %v976 = vld [vmem:[%s4] sm:$0xff]
        %v977 = vld [vmem:[%s4 + $0x8] sm:$0x3f]
        %vm978 = vcmask 228352
        %v980 = vsel %vm978, %v976, 0
        %v983 = vsel %vm978, %v977, 0
        %vm985 = vcmask 1043456
        %v987 = vsel %vm985, %v975, 0
        %989 = vmatprep.subr.mxu0 0.0
        %990 = vmatpush1.msra.mxu0 %v972
        %991 = vmatprep.subr.mxu0 0.0
        %992 = vmatpush1.msra.mxu0 %v973
        %993 = vmatprep.subr.mxu0 0.0
        %994 = vmatpush1.msra.mxu0 %v974
        %995 = vmatprep.subr.mxu0 0.0
        %996 = vmatpush1.msra.mxu0 %v987
        %997 = vmatprep.subr.mxu0 0.0
        %998 = vmatpush1.msra.mxu0 0.0
        %999 = vmatprep.subr.mxu0 0.0
        %1000 = vmatpush1.msra.mxu0 0.0
        %1001 = vmatprep.subr.mxu0 0.0
        %1002 = vmatpush1.msra.mxu0 0.0
        %1003 = vmatprep.subr.mxu0 0.0
        %1004 = vmatpush1.msra.mxu0 0.0
        %1005 = vmatprep.subr.mxu0 0.0
        %1006 = vmatpush1.msra.mxu0 0.0
        %1007 = vmatprep.subr.mxu0 0.0
        %1008 = vmatpush1.msra.mxu0 0.0
        %1009 = vmatprep.subr.mxu0 0.0
        %1010 = vmatpush1.msra.mxu0 0.0
        %1011 = vmatprep.subr.mxu0 0.0
        %1012 = vmatpush1.msra.mxu0 0.0
        %1013 = vmatprep.subr.mxu0 0.0
        %1014 = vmatpush1.msra.mxu0 0.0
        %1015 = vmatprep.subr.mxu0 0.0
        %1016 = vmatpush1.msra.mxu0 0.0
        %1017 = vmatprep.subr.mxu0 0.0
        %1018 = vmatpush1.msra.mxu0 0.0
        %1019 = vmatprep.subr.mxu0 0.0
        %1020 = vmatpush1.msra.mxu0 0.0
        %1021 = vmatprep.subr.mxu0 0.0
        %1022 = vmatpush1.msra.mxu0 0.0
        %1023 = vmatprep.subr.mxu0 0.0
        %1024 = vmatpush1.msra.mxu0 0.0
        %1025 = vmatprep.subr.mxu0 0.0
        %1026 = vmatpush1.msra.mxu0 0.0
        %1027 = vmatprep.subr.mxu0 0.0
        %1028 = vmatpush1.msra.mxu0 0.0
        %1029 = vmatprep.subr.mxu0 0.0
        %1030 = vmatpush1.msra.mxu0 0.0
        %1031 = vmatprep.subr.mxu0 0.0
        %1032 = vmatpush1.msra.mxu0 0.0
        %1033 = vmatprep.subr.mxu0 0.0
        %1034 = vmatpush1.msra.mxu0 0.0
        %1035 = vmatprep.subr.mxu0 0.0
        %1036 = vmatpush1.msra.mxu0 0.0
        %1037 = vmatprep.subr.mxu0 0.0
        %1038 = vmatpush1.msra.mxu0 0.0
        %1039 = vmatprep.subr.mxu0 0.0
        %1040 = vmatpush1.msra.mxu0 0.0
        %1041 = vmatprep.subr.mxu0 0.0
        %1042 = vmatpush1.msra.mxu0 0.0
        %1043 = vmatprep.subr.mxu0 0.0
        %1044 = vmatpush1.msra.mxu0 0.0
        %1045 = vmatprep.subr.mxu0 0.0
        %1046 = vmatpush1.msra.mxu0 0.0
        %1047 = vmatprep.subr.mxu0 0.0
        %1048 = vmatpush1.msra.mxu0 0.0
        %1049 = vmatprep.subr.mxu0 0.0
        %1050 = vmatpush1.msra.mxu0 0.0
        %1051 = vmatprep.subr.mxu0 0.0
        %1052 = vmatpush1.msra.mxu0 0.0
        %1053 = vmatprep.mubr.f32.mxu0 0.0
        %1054 = vmatmul.mubr.f32.gmra.mrb[0].mxu0 %v980
        %v1055 = vpop.f32.mrb[0].mxu0
        %v1056 = vadd.f32 0.0, %v1055
        %v1057 = vpop.f32.mrb[0].mxu0
        %1058 = vmatprep.mubr.f32.mxu0 0.0
        %1059 = vmatmul.mubr.f32.gmra.mrb[0].mxu0 %v983
        %v1060 = vpop.f32.mrb[0].mxu0
        %v1061 = vadd.f32 0.0, %v1060
        %v1062 = vpop.f32.mrb[0].mxu0
        %1063 = vdwg.mxu0
        %s1064 = scalar_lea.vmem %s4, 16
        %v1065 = vld [vmem:[%s1064] sm:$0xff]
        %v1066 = vld [vmem:[%s1064 + $0x8] sm:$0x3f]
        %v1068 = vsel %vm978, %v1065, 0
        %v1071 = vsel %vm978, %v1066, 0
        %1073 = vmatprep.subr.mxu0 0.0
        %1074 = vmatpush1.msra.mxu0 %v972
        %1075 = vmatprep.subr.mxu0 0.0
        %1076 = vmatpush1.msra.mxu0 %v973
        %1077 = vmatprep.subr.mxu0 0.0
        %1078 = vmatpush1.msra.mxu0 %v974
        %1079 = vmatprep.subr.mxu0 0.0
        %1080 = vmatpush1.msra.mxu0 %v987
        %1081 = vmatprep.subr.mxu0 0.0
        %1082 = vmatpush1.msra.mxu0 0.0
        %1083 = vmatprep.subr.mxu0 0.0
        %1084 = vmatpush1.msra.mxu0 0.0
        %1085 = vmatprep.subr.mxu0 0.0
        %1086 = vmatpush1.msra.mxu0 0.0
        %1087 = vmatprep.subr.mxu0 0.0
        %1088 = vmatpush1.msra.mxu0 0.0
        %1089 = vmatprep.subr.mxu0 0.0
        %1090 = vmatpush1.msra.mxu0 0.0
        %1091 = vmatprep.subr.mxu0 0.0
        %1092 = vmatpush1.msra.mxu0 0.0
        %1093 = vmatprep.subr.mxu0 0.0
        %1094 = vmatpush1.msra.mxu0 0.0
        %1095 = vmatprep.subr.mxu0 0.0
        %1096 = vmatpush1.msra.mxu0 0.0
        %1097 = vmatprep.subr.mxu0 0.0
        %1098 = vmatpush1.msra.mxu0 0.0
        %1099 = vmatprep.subr.mxu0 0.0
        %1100 = vmatpush1.msra.mxu0 0.0
        %1101 = vmatprep.subr.mxu0 0.0
        %1102 = vmatpush1.msra.mxu0 0.0
        %1103 = vmatprep.subr.mxu0 0.0
        %1104 = vmatpush1.msra.mxu0 0.0
        %1105 = vmatprep.subr.mxu0 0.0
        %1106 = vmatpush1.msra.mxu0 0.0
        %1107 = vmatprep.subr.mxu0 0.0
        %1108 = vmatpush1.msra.mxu0 0.0
        %1109 = vmatprep.subr.mxu0 0.0
        %1110 = vmatpush1.msra.mxu0 0.0
        %1111 = vmatprep.subr.mxu0 0.0
        %1112 = vmatpush1.msra.mxu0 0.0
        %1113 = vmatprep.subr.mxu0 0.0
        %1114 = vmatpush1.msra.mxu0 0.0
        %1115 = vmatprep.subr.mxu0 0.0
        %1116 = vmatpush1.msra.mxu0 0.0
        %1117 = vmatprep.subr.mxu0 0.0
        %1118 = vmatpush1.msra.mxu0 0.0
        %1119 = vmatprep.subr.mxu0 0.0
        %1120 = vmatpush1.msra.mxu0 0.0
        %1121 = vmatprep.subr.mxu0 0.0
        %1122 = vmatpush1.msra.mxu0 0.0
        %1123 = vmatprep.subr.mxu0 0.0
        %1124 = vmatpush1.msra.mxu0 0.0
        %1125 = vmatprep.subr.mxu0 0.0
        %1126 = vmatpush1.msra.mxu0 0.0
        %1127 = vmatprep.subr.mxu0 0.0
        %1128 = vmatpush1.msra.mxu0 0.0
        %1129 = vmatprep.subr.mxu0 0.0
        %1130 = vmatpush1.msra.mxu0 0.0
        %1131 = vmatprep.subr.mxu0 0.0
        %1132 = vmatpush1.msra.mxu0 0.0
        %1133 = vmatprep.subr.mxu0 0.0
        %1134 = vmatpush1.msra.mxu0 0.0
        %1135 = vmatprep.subr.mxu0 0.0
        %1136 = vmatpush1.msra.mxu0 0.0
        %1137 = vmatprep.mubr.f32.mxu0 0.0
        %1138 = vmatmul.mubr.f32.gmra.mrb[0].mxu0 %v1068
        %v1139 = vpop.f32.mrb[0].mxu0
        %v1140 = vadd.f32 0.0, %v1139
        %v1141 = vpop.f32.mrb[0].mxu0
        %1142 = vmatprep.mubr.f32.mxu0 0.0
        %1143 = vmatmul.mubr.f32.gmra.mrb[0].mxu0 %v1071
        %v1144 = vpop.f32.mrb[0].mxu0
        %v1145 = vadd.f32 0.0, %v1144
        %v1146 = vpop.f32.mrb[0].mxu0
        %1147 = vdwg.mxu0
        %v1148 = vmax.f32 %v1056, %v1140
        %v1149 = vmax.f32 %v1061, %v1145
        %1150 = vst [vmem:[#allocation2] sm:$0xff] %v1148
        %1151 = vst [vmem:[#allocation2 + $0x8] sm:$0x3f] %v1149
        %v1152 = vld [vmem:[#allocation2] sm:$0xff]
        %v1153 = vld [vmem:[#allocation2 + $0x8] sm:$0x3]
        %s1154 = scalar_lea.vmem [#allocation4], 1280
        %v1155 = vld [vmem:[%s1154] sm:$0xff]
        %v1156 = vld [vmem:[%s1154 + $0x8] sm:$0xff]
        %v1157 = vld [vmem:[%s1154 + $0x10] sm:$0xff]
        %v1158 = vld [vmem:[%s1154 + $0x18] sm:$0xff]
        %v1159 = vld [vmem:[%s1154 + $0x20] sm:$0xff]
        %v1160 = vld [vmem:[%s1154 + $0x28] sm:$0xff]
        %v1161 = vld [vmem:[%s1154 + $0x30] sm:$0xff]
        %v1162 = vld [vmem:[%s1154 + $0x38] sm:$0xff]
        %v1163 = vld [vmem:[%s1154 + $0x40] sm:$0xff]
        %v1164 = vld [vmem:[%s1154 + $0x48] sm:$0xff]
        %v1165 = vld [vmem:[%s1154 + $0x50] sm:$0xff]
        %v1166 = vld [vmem:[%s1154 + $0x58] sm:$0xff]
        %v1167 = vld [vmem:[%s1154 + $0x60] sm:$0xff]
        %v1168 = vld [vmem:[%s1154 + $0x68] sm:$0xff]
        %v1169 = vld [vmem:[%s1154 + $0x70] sm:$0xff]
        %v1170 = vld [vmem:[%s1154 + $0x78] sm:$0xff]
        %v1171 = vld [vmem:[%s1154 + $0x80] sm:$0xff]
        %v1172 = vld [vmem:[%s1154 + $0x88] sm:$0xff]
        %v1173 = vld [vmem:[%s1154 + $0x90] sm:$0xff]
        %v1174 = vld [vmem:[%s1154 + $0x98] sm:$0xff]
        %v1175 = vld [vmem:[%s1154 + $0xa0] sm:$0xff]
        %v1176 = vld [vmem:[%s1154 + $0xa8] sm:$0xff]
        %v1177 = vld [vmem:[%s1154 + $0xb0] sm:$0xff]
        %v1178 = vld [vmem:[%s1154 + $0xb8] sm:$0xff]
        %v1179 = vld [vmem:[%s1154 + $0xc0] sm:$0xff]
        %v1180 = vld [vmem:[%s1154 + $0xc8] sm:$0xff]
        %v1181 = vld [vmem:[%s1154 + $0xd0] sm:$0xff]
        %v1182 = vld [vmem:[%s1154 + $0xd8] sm:$0xff]
        %v1183 = vld [vmem:[%s1154 + $0xe0] sm:$0xff]
        %v1184 = vld [vmem:[%s1154 + $0xe8] sm:$0xff]
        %v1185 = vld [vmem:[%s1154 + $0xf0] sm:$0xff]
        %v1186 = vld [vmem:[%s1154 + $0xf8] sm:$0xff]
        %v1187 = vld [vmem:[#allocation2 + $0x1] sm:$0xff]
        %v1188 = vld [vmem:[#allocation2 + $0x9] sm:$0x3]
        %s1189 = scalar_lea.vmem [#allocation4], 1536
        %v1190 = vld [vmem:[%s1189] sm:$0xff]
        %v1191 = vld [vmem:[%s1189 + $0x8] sm:$0xff]
        %v1192 = vld [vmem:[%s1189 + $0x10] sm:$0xff]
        %v1193 = vld [vmem:[%s1189 + $0x18] sm:$0xff]
        %v1194 = vld [vmem:[%s1189 + $0x20] sm:$0xff]
        %v1195 = vld [vmem:[%s1189 + $0x28] sm:$0xff]
        %v1196 = vld [vmem:[%s1189 + $0x30] sm:$0xff]
        %v1197 = vld [vmem:[%s1189 + $0x38] sm:$0xff]
        %v1198 = vld [vmem:[%s1189 + $0x40] sm:$0xff]
        %v1199 = vld [vmem:[%s1189 + $0x48] sm:$0xff]
        %v1200 = vld [vmem:[%s1189 + $0x50] sm:$0xff]
        %v1201 = vld [vmem:[%s1189 + $0x58] sm:$0xff]
        %v1202 = vld [vmem:[%s1189 + $0x60] sm:$0xff]
        %v1203 = vld [vmem:[%s1189 + $0x68] sm:$0xff]
        %v1204 = vld [vmem:[%s1189 + $0x70] sm:$0xff]
        %v1205 = vld [vmem:[%s1189 + $0x78] sm:$0xff]
        %v1206 = vld [vmem:[%s1189 + $0x80] sm:$0xff]
        %v1207 = vld [vmem:[%s1189 + $0x88] sm:$0xff]
        %v1208 = vld [vmem:[%s1189 + $0x90] sm:$0xff]
        %v1209 = vld [vmem:[%s1189 + $0x98] sm:$0xff]
        %v1210 = vld [vmem:[%s1189 + $0xa0] sm:$0xff]
        %v1211 = vld [vmem:[%s1189 + $0xa8] sm:$0xff]
        %v1212 = vld [vmem:[%s1189 + $0xb0] sm:$0xff]
        %v1213 = vld [vmem:[%s1189 + $0xb8] sm:$0xff]
        %v1214 = vld [vmem:[%s1189 + $0xc0] sm:$0xff]
        %v1215 = vld [vmem:[%s1189 + $0xc8] sm:$0xff]
        %v1216 = vld [vmem:[%s1189 + $0xd0] sm:$0xff]
        %v1217 = vld [vmem:[%s1189 + $0xd8] sm:$0xff]
        %v1218 = vld [vmem:[%s1189 + $0xe0] sm:$0xff]
        %v1219 = vld [vmem:[%s1189 + $0xe8] sm:$0xff]
        %v1220 = vld [vmem:[%s1189 + $0xf0] sm:$0xff]
        %v1221 = vld [vmem:[%s1189 + $0xf8] sm:$0xff]
        %1222 = vmatprep.subr.mxu0 %v1191
        %1223 = vmatpush1.msra.mxu0 %v1190
        %1224 = vmatprep.subr.mxu0 %v1193
        %1225 = vmatpush1.msra.mxu0 %v1192
        %1226 = vmatprep.subr.mxu0 %v1195
        %1227 = vmatpush1.msra.mxu0 %v1194
        %1228 = vmatprep.subr.mxu0 %v1197
        %1229 = vmatpush1.msra.mxu0 %v1196
        %1230 = vmatprep.subr.mxu0 %v1199
        %1231 = vmatpush1.msra.mxu0 %v1198
        %1232 = vmatprep.subr.mxu0 %v1201
        %1233 = vmatpush1.msra.mxu0 %v1200
        %1234 = vmatprep.subr.mxu0 %v1203
        %1235 = vmatpush1.msra.mxu0 %v1202
        %1236 = vmatprep.subr.mxu0 %v1205
        %1237 = vmatpush1.msra.mxu0 %v1204
        %1238 = vmatprep.subr.mxu0 %v1207
        %1239 = vmatpush1.msra.mxu0 %v1206
        %1240 = vmatprep.subr.mxu0 %v1209
        %1241 = vmatpush1.msra.mxu0 %v1208
        %1242 = vmatprep.subr.mxu0 %v1211
        %1243 = vmatpush1.msra.mxu0 %v1210
        %1244 = vmatprep.subr.mxu0 %v1213
        %1245 = vmatpush1.msra.mxu0 %v1212
        %1246 = vmatprep.subr.mxu0 %v1215
        %1247 = vmatpush1.msra.mxu0 %v1214
        %1248 = vmatprep.subr.mxu0 %v1217
        %1249 = vmatpush1.msra.mxu0 %v1216
        %1250 = vmatprep.subr.mxu0 %v1219
        %1251 = vmatpush1.msra.mxu0 %v1218
        %1252 = vmatprep.subr.mxu0 %v1221
        %1253 = vmatpush1.msra.mxu0 %v1220
        %1254 = vmatprep.subr.mxu0 0.0
        %1255 = vmatpush1.msra.mxu0 0.0
        %1256 = vmatprep.subr.mxu0 0.0
        %1257 = vmatpush1.msra.mxu0 0.0
        %1258 = vmatprep.subr.mxu0 0.0
        %1259 = vmatpush1.msra.mxu0 0.0
        %1260 = vmatprep.subr.mxu0 0.0
        %1261 = vmatpush1.msra.mxu0 0.0
        %1262 = vmatprep.subr.mxu0 0.0
        %1263 = vmatpush1.msra.mxu0 0.0
        %1264 = vmatprep.subr.mxu0 0.0
        %1265 = vmatpush1.msra.mxu0 0.0
        %1266 = vmatprep.subr.mxu0 0.0
        %1267 = vmatpush1.msra.mxu0 0.0
        %1268 = vmatprep.subr.mxu0 0.0
        %1269 = vmatpush1.msra.mxu0 0.0
        %1270 = vmatprep.subr.mxu0 0.0
        %1271 = vmatpush1.msra.mxu0 0.0
        %1272 = vmatprep.subr.mxu0 0.0
        %1273 = vmatpush1.msra.mxu0 0.0
        %1274 = vmatprep.subr.mxu0 0.0
        %1275 = vmatpush1.msra.mxu0 0.0
        %1276 = vmatprep.subr.mxu0 0.0
        %1277 = vmatpush1.msra.mxu0 0.0
        %1278 = vmatprep.subr.mxu0 0.0
        %1279 = vmatpush1.msra.mxu0 0.0
        %1280 = vmatprep.subr.mxu0 0.0
        %1281 = vmatpush1.msra.mxu0 0.0
        %1282 = vmatprep.subr.mxu0 0.0
        %1283 = vmatpush1.msra.mxu0 0.0
        %1284 = vmatprep.subr.mxu0 0.0
        %1285 = vmatpush1.msra.mxu0 0.0
        %1286 = vmatprep.mubr.f32.mxu0 0.0
        %1287 = vmatmul.mubr.f32.gmra.mrb[0].mxu0 %v1187
        %v1288 = vpop.f32.mrb[0].mxu0
        %v1289 = vadd.f32 0.0, %v1288
        %v1290 = vpop.f32.mrb[0].mxu0
        %v1291 = vadd.f32 0.0, %v1290
        %1292 = vmatprep.mubr.f32.mxu0 0.0
        %1293 = vmatmul.mubr.f32.gmra.mrb[0].mxu0 %v1188
        %v1294 = vpop.f32.mrb[0].mxu0
        %v1295 = vadd.f32 0.0, %v1294
        %v1296 = vpop.f32.mrb[0].mxu0
        %v1297 = vadd.f32 0.0, %v1296
        %1298 = vdwg.mxu0
        %1299 = vmatprep.subr.mxu0 %v1156
        %1300 = vmatpush1.msra.mxu0 %v1155
        %1301 = vmatprep.subr.mxu0 %v1158
        %1302 = vmatpush1.msra.mxu0 %v1157
        %1303 = vmatprep.subr.mxu0 %v1160
        %1304 = vmatpush1.msra.mxu0 %v1159
        %1305 = vmatprep.subr.mxu0 %v1162
        %1306 = vmatpush1.msra.mxu0 %v1161
        %1307 = vmatprep.subr.mxu0 %v1164
        %1308 = vmatpush1.msra.mxu0 %v1163
        %1309 = vmatprep.subr.mxu0 %v1166
        %1310 = vmatpush1.msra.mxu0 %v1165
        %1311 = vmatprep.subr.mxu0 %v1168
        %1312 = vmatpush1.msra.mxu0 %v1167
        %1313 = vmatprep.subr.mxu0 %v1170
        %1314 = vmatpush1.msra.mxu0 %v1169
        %1315 = vmatprep.subr.mxu0 %v1172
        %1316 = vmatpush1.msra.mxu0 %v1171
        %1317 = vmatprep.subr.mxu0 %v1174
        %1318 = vmatpush1.msra.mxu0 %v1173
        %1319 = vmatprep.subr.mxu0 %v1176
        %1320 = vmatpush1.msra.mxu0 %v1175
        %1321 = vmatprep.subr.mxu0 %v1178
        %1322 = vmatpush1.msra.mxu0 %v1177
        %1323 = vmatprep.subr.mxu0 %v1180
        %1324 = vmatpush1.msra.mxu0 %v1179
        %1325 = vmatprep.subr.mxu0 %v1182
        %1326 = vmatpush1.msra.mxu0 %v1181
        %1327 = vmatprep.subr.mxu0 %v1184
        %1328 = vmatpush1.msra.mxu0 %v1183
        %1329 = vmatprep.subr.mxu0 %v1186
        %1330 = vmatpush1.msra.mxu0 %v1185
        %1331 = vmatprep.subr.mxu0 0.0
        %1332 = vmatpush1.msra.mxu0 0.0
        %1333 = vmatprep.subr.mxu0 0.0
        %1334 = vmatpush1.msra.mxu0 0.0
        %1335 = vmatprep.subr.mxu0 0.0
        %1336 = vmatpush1.msra.mxu0 0.0
        %1337 = vmatprep.subr.mxu0 0.0
        %1338 = vmatpush1.msra.mxu0 0.0
        %1339 = vmatprep.subr.mxu0 0.0
        %1340 = vmatpush1.msra.mxu0 0.0
        %1341 = vmatprep.subr.mxu0 0.0
        %1342 = vmatpush1.msra.mxu0 0.0
        %1343 = vmatprep.subr.mxu0 0.0
        %1344 = vmatpush1.msra.mxu0 0.0
        %1345 = vmatprep.subr.mxu0 0.0
        %1346 = vmatpush1.msra.mxu0 0.0
        %1347 = vmatprep.subr.mxu0 0.0
        %1348 = vmatpush1.msra.mxu0 0.0
        %1349 = vmatprep.subr.mxu0 0.0
        %1350 = vmatpush1.msra.mxu0 0.0
        %1351 = vmatprep.subr.mxu0 0.0
        %1352 = vmatpush1.msra.mxu0 0.0
        %1353 = vmatprep.subr.mxu0 0.0
        %1354 = vmatpush1.msra.mxu0 0.0
        %1355 = vmatprep.subr.mxu0 0.0
        %1356 = vmatpush1.msra.mxu0 0.0
        %1357 = vmatprep.subr.mxu0 0.0
        %1358 = vmatpush1.msra.mxu0 0.0
        %1359 = vmatprep.subr.mxu0 0.0
        %1360 = vmatpush1.msra.mxu0 0.0
        %1361 = vmatprep.subr.mxu0 0.0
        %1362 = vmatpush1.msra.mxu0 0.0
        %1363 = vmatprep.mubr.f32.mxu0 0.0
        %1364 = vmatmul.mubr.f32.gmra.mrb[0].mxu0 %v1152
        %v1365 = vpop.f32.mrb[0].mxu0
        %v1366 = vadd.f32 %v1289, %v1365
        %v1367 = vpop.f32.mrb[0].mxu0
        %v1368 = vadd.f32 %v1291, %v1367
        %1369 = vmatprep.mubr.f32.mxu0 0.0
        %1370 = vmatmul.mubr.f32.gmra.mrb[0].mxu0 %v1153
        %v1371 = vpop.f32.mrb[0].mxu0
        %v1372 = vadd.f32 %v1295, %v1371
        %v1373 = vpop.f32.mrb[0].mxu0
        %v1374 = vadd.f32 %v1297, %v1373
        %1375 = vdwg.mxu0
        %v1376 = vld [vmem:[#allocation2 + $0x2] sm:$0xff]
        %v1377 = vld [vmem:[#allocation2 + $0xa] sm:$0x3]
        %s1378 = scalar_lea.vmem [#allocation4], 1792
        %v1379 = vld [vmem:[%s1378] sm:$0xff]
        %v1380 = vld [vmem:[%s1378 + $0x8] sm:$0xff]
        %v1381 = vld [vmem:[%s1378 + $0x10] sm:$0xff]
        %v1382 = vld [vmem:[%s1378 + $0x18] sm:$0xff]
        %v1383 = vld [vmem:[%s1378 + $0x20] sm:$0xff]
        %v1384 = vld [vmem:[%s1378 + $0x28] sm:$0xff]
        %v1385 = vld [vmem:[%s1378 + $0x30] sm:$0xff]
        %v1386 = vld [vmem:[%s1378 + $0x38] sm:$0xff]
        %v1387 = vld [vmem:[%s1378 + $0x40] sm:$0xff]
        %v1388 = vld [vmem:[%s1378 + $0x48] sm:$0xff]
        %v1389 = vld [vmem:[%s1378 + $0x50] sm:$0xff]
        %v1390 = vld [vmem:[%s1378 + $0x58] sm:$0xff]
        %v1391 = vld [vmem:[%s1378 + $0x60] sm:$0xff]
        %v1392 = vld [vmem:[%s1378 + $0x68] sm:$0xff]
        %v1393 = vld [vmem:[%s1378 + $0x70] sm:$0xff]
        %v1394 = vld [vmem:[%s1378 + $0x78] sm:$0xff]
        %v1395 = vld [vmem:[%s1378 + $0x80] sm:$0xff]
        %v1396 = vld [vmem:[%s1378 + $0x88] sm:$0xff]
        %v1397 = vld [vmem:[%s1378 + $0x90] sm:$0xff]
        %v1398 = vld [vmem:[%s1378 + $0x98] sm:$0xff]
        %v1399 = vld [vmem:[%s1378 + $0xa0] sm:$0xff]
        %v1400 = vld [vmem:[%s1378 + $0xa8] sm:$0xff]
        %v1401 = vld [vmem:[%s1378 + $0xb0] sm:$0xff]
        %v1402 = vld [vmem:[%s1378 + $0xb8] sm:$0xff]
        %v1403 = vld [vmem:[%s1378 + $0xc0] sm:$0xff]
        %v1404 = vld [vmem:[%s1378 + $0xc8] sm:$0xff]
        %v1405 = vld [vmem:[%s1378 + $0xd0] sm:$0xff]
        %v1406 = vld [vmem:[%s1378 + $0xd8] sm:$0xff]
        %v1407 = vld [vmem:[%s1378 + $0xe0] sm:$0xff]
        %v1408 = vld [vmem:[%s1378 + $0xe8] sm:$0xff]
        %v1409 = vld [vmem:[%s1378 + $0xf0] sm:$0xff]
        %v1410 = vld [vmem:[%s1378 + $0xf8] sm:$0xff]
        %1411 = vmatprep.subr.mxu0 %v1380
        %1412 = vmatpush1.msra.mxu0 %v1379
        %1413 = vmatprep.subr.mxu0 %v1382
        %1414 = vmatpush1.msra.mxu0 %v1381
        %1415 = vmatprep.subr.mxu0 %v1384
        %1416 = vmatpush1.msra.mxu0 %v1383
        %1417 = vmatprep.subr.mxu0 %v1386
        %1418 = vmatpush1.msra.mxu0 %v1385
        %1419 = vmatprep.subr.mxu0 %v1388
        %1420 = vmatpush1.msra.mxu0 %v1387
        %1421 = vmatprep.subr.mxu0 %v1390
        %1422 = vmatpush1.msra.mxu0 %v1389
        %1423 = vmatprep.subr.mxu0 %v1392
        %1424 = vmatpush1.msra.mxu0 %v1391
        %1425 = vmatprep.subr.mxu0 %v1394
        %1426 = vmatpush1.msra.mxu0 %v1393
        %1427 = vmatprep.subr.mxu0 %v1396
        %1428 = vmatpush1.msra.mxu0 %v1395
        %1429 = vmatprep.subr.mxu0 %v1398
        %1430 = vmatpush1.msra.mxu0 %v1397
        %1431 = vmatprep.subr.mxu0 %v1400
        %1432 = vmatpush1.msra.mxu0 %v1399
        %1433 = vmatprep.subr.mxu0 %v1402
        %1434 = vmatpush1.msra.mxu0 %v1401
        %1435 = vmatprep.subr.mxu0 %v1404
        %1436 = vmatpush1.msra.mxu0 %v1403
        %1437 = vmatprep.subr.mxu0 %v1406
        %1438 = vmatpush1.msra.mxu0 %v1405
        %1439 = vmatprep.subr.mxu0 %v1408
        %1440 = vmatpush1.msra.mxu0 %v1407
        %1441 = vmatprep.subr.mxu0 %v1410
        %1442 = vmatpush1.msra.mxu0 %v1409
        %1443 = vmatprep.subr.mxu0 0.0
        %1444 = vmatpush1.msra.mxu0 0.0
        %1445 = vmatprep.subr.mxu0 0.0
        %1446 = vmatpush1.msra.mxu0 0.0
        %1447 = vmatprep.subr.mxu0 0.0
        %1448 = vmatpush1.msra.mxu0 0.0
        %1449 = vmatprep.subr.mxu0 0.0
        %1450 = vmatpush1.msra.mxu0 0.0
        %1451 = vmatprep.subr.mxu0 0.0
        %1452 = vmatpush1.msra.mxu0 0.0
        %1453 = vmatprep.subr.mxu0 0.0
        %1454 = vmatpush1.msra.mxu0 0.0
        %1455 = vmatprep.subr.mxu0 0.0
        %1456 = vmatpush1.msra.mxu0 0.0
        %1457 = vmatprep.subr.mxu0 0.0
        %1458 = vmatpush1.msra.mxu0 0.0
        %1459 = vmatprep.subr.mxu0 0.0
        %1460 = vmatpush1.msra.mxu0 0.0
        %1461 = vmatprep.subr.mxu0 0.0
        %1462 = vmatpush1.msra.mxu0 0.0
        %1463 = vmatprep.subr.mxu0 0.0
        %1464 = vmatpush1.msra.mxu0 0.0
        %1465 = vmatprep.subr.mxu0 0.0
        %1466 = vmatpush1.msra.mxu0 0.0
        %1467 = vmatprep.subr.mxu0 0.0
        %1468 = vmatpush1.msra.mxu0 0.0
        %1469 = vmatprep.subr.mxu0 0.0
        %1470 = vmatpush1.msra.mxu0 0.0
        %1471 = vmatprep.subr.mxu0 0.0
        %1472 = vmatpush1.msra.mxu0 0.0
        %1473 = vmatprep.subr.mxu0 0.0
        %1474 = vmatpush1.msra.mxu0 0.0
        %1475 = vmatprep.mubr.f32.mxu0 0.0
        %1476 = vmatmul.mubr.f32.gmra.mrb[0].mxu0 %v1376
        %v1477 = vpop.f32.mrb[0].mxu0
        %v1478 = vadd.f32 0.0, %v1477
        %v1479 = vpop.f32.mrb[0].mxu0
        %v1480 = vadd.f32 0.0, %v1479
        %1481 = vmatprep.mubr.f32.mxu0 0.0
        %1482 = vmatmul.mubr.f32.gmra.mrb[0].mxu0 %v1377
        %v1483 = vpop.f32.mrb[0].mxu0
        %v1484 = vadd.f32 0.0, %v1483
        %v1485 = vpop.f32.mrb[0].mxu0
        %v1486 = vadd.f32 0.0, %v1485
        %1487 = vdwg.mxu0
        %v1488 = vadd.f32 %v1366, %v1478
        %v1489 = vadd.f32 %v1368, %v1480
        %v1490 = vadd.f32 %v1372, %v1484
        %v1491 = vadd.f32 %v1374, %v1486
        %v1492 = vld [vmem:[#allocation2 + $0x3] sm:$0xff]
        %v1493 = vld [vmem:[#allocation2 + $0xb] sm:$0x3]
        %s1494 = scalar_lea.vmem [#allocation4], 2048
        %v1495 = vld [vmem:[%s1494] sm:$0xff]
        %v1496 = vld [vmem:[%s1494 + $0x8] sm:$0xff]
        %v1497 = vld [vmem:[%s1494 + $0x10] sm:$0xff]
        %v1498 = vld [vmem:[%s1494 + $0x18] sm:$0xff]
        %v1499 = vld [vmem:[%s1494 + $0x20] sm:$0xff]
        %v1500 = vld [vmem:[%s1494 + $0x28] sm:$0xff]
        %v1501 = vld [vmem:[%s1494 + $0x30] sm:$0xff]
        %v1502 = vld [vmem:[%s1494 + $0x38] sm:$0xff]
        %v1503 = vld [vmem:[%s1494 + $0x40] sm:$0xff]
        %v1504 = vld [vmem:[%s1494 + $0x48] sm:$0xff]
        %v1505 = vld [vmem:[%s1494 + $0x50] sm:$0xff]
        %v1506 = vld [vmem:[%s1494 + $0x58] sm:$0xff]
        %v1507 = vld [vmem:[%s1494 + $0x60] sm:$0xff]
        %v1508 = vld [vmem:[%s1494 + $0x68] sm:$0xff]
        %v1509 = vld [vmem:[%s1494 + $0x70] sm:$0xff]
        %v1510 = vld [vmem:[%s1494 + $0x78] sm:$0xff]
        %v1511 = vld [vmem:[%s1494 + $0x80] sm:$0xff]
        %v1512 = vld [vmem:[%s1494 + $0x88] sm:$0xff]
        %v1513 = vld [vmem:[%s1494 + $0x90] sm:$0xff]
        %v1514 = vld [vmem:[%s1494 + $0x98] sm:$0xff]
        %v1515 = vld [vmem:[%s1494 + $0xa0] sm:$0xff]
        %v1516 = vld [vmem:[%s1494 + $0xa8] sm:$0xff]
        %v1517 = vld [vmem:[%s1494 + $0xb0] sm:$0xff]
        %v1518 = vld [vmem:[%s1494 + $0xb8] sm:$0xff]
        %v1519 = vld [vmem:[%s1494 + $0xc0] sm:$0xff]
        %v1520 = vld [vmem:[%s1494 + $0xc8] sm:$0xff]
        %v1521 = vld [vmem:[%s1494 + $0xd0] sm:$0xff]
        %v1522 = vld [vmem:[%s1494 + $0xd8] sm:$0xff]
        %v1523 = vld [vmem:[%s1494 + $0xe0] sm:$0xff]
        %v1524 = vld [vmem:[%s1494 + $0xe8] sm:$0xff]
        %v1525 = vld [vmem:[%s1494 + $0xf0] sm:$0xff]
        %v1526 = vld [vmem:[%s1494 + $0xf8] sm:$0xff]
        %1527 = vmatprep.subr.mxu0 %v1496
        %1528 = vmatpush1.msra.mxu0 %v1495
        %1529 = vmatprep.subr.mxu0 %v1498
        %1530 = vmatpush1.msra.mxu0 %v1497
        %1531 = vmatprep.subr.mxu0 %v1500
        %1532 = vmatpush1.msra.mxu0 %v1499
        %1533 = vmatprep.subr.mxu0 %v1502
        %1534 = vmatpush1.msra.mxu0 %v1501
        %1535 = vmatprep.subr.mxu0 %v1504
        %1536 = vmatpush1.msra.mxu0 %v1503
        %1537 = vmatprep.subr.mxu0 %v1506
        %1538 = vmatpush1.msra.mxu0 %v1505
        %1539 = vmatprep.subr.mxu0 %v1508
        %1540 = vmatpush1.msra.mxu0 %v1507
        %1541 = vmatprep.subr.mxu0 %v1510
        %1542 = vmatpush1.msra.mxu0 %v1509
        %1543 = vmatprep.subr.mxu0 %v1512
        %1544 = vmatpush1.msra.mxu0 %v1511
        %1545 = vmatprep.subr.mxu0 %v1514
        %1546 = vmatpush1.msra.mxu0 %v1513
        %1547 = vmatprep.subr.mxu0 %v1516
        %1548 = vmatpush1.msra.mxu0 %v1515
        %1549 = vmatprep.subr.mxu0 %v1518
        %1550 = vmatpush1.msra.mxu0 %v1517
        %1551 = vmatprep.subr.mxu0 %v1520
        %1552 = vmatpush1.msra.mxu0 %v1519
        %1553 = vmatprep.subr.mxu0 %v1522
        %1554 = vmatpush1.msra.mxu0 %v1521
        %1555 = vmatprep.subr.mxu0 %v1524
        %1556 = vmatpush1.msra.mxu0 %v1523
        %1557 = vmatprep.subr.mxu0 %v1526
        %1558 = vmatpush1.msra.mxu0 %v1525
        %1559 = vmatprep.subr.mxu0 0.0
        %1560 = vmatpush1.msra.mxu0 0.0
        %1561 = vmatprep.subr.mxu0 0.0
        %1562 = vmatpush1.msra.mxu0 0.0
        %1563 = vmatprep.subr.mxu0 0.0
        %1564 = vmatpush1.msra.mxu0 0.0
        %1565 = vmatprep.subr.mxu0 0.0
        %1566 = vmatpush1.msra.mxu0 0.0
        %1567 = vmatprep.subr.mxu0 0.0
        %1568 = vmatpush1.msra.mxu0 0.0
        %1569 = vmatprep.subr.mxu0 0.0
        %1570 = vmatpush1.msra.mxu0 0.0
        %1571 = vmatprep.subr.mxu0 0.0
        %1572 = vmatpush1.msra.mxu0 0.0
        %1573 = vmatprep.subr.mxu0 0.0
        %1574 = vmatpush1.msra.mxu0 0.0
        %1575 = vmatprep.subr.mxu0 0.0
        %1576 = vmatpush1.msra.mxu0 0.0
        %1577 = vmatprep.subr.mxu0 0.0
        %1578 = vmatpush1.msra.mxu0 0.0
        %1579 = vmatprep.subr.mxu0 0.0
        %1580 = vmatpush1.msra.mxu0 0.0
        %1581 = vmatprep.subr.mxu0 0.0
        %1582 = vmatpush1.msra.mxu0 0.0
        %1583 = vmatprep.subr.mxu0 0.0
        %1584 = vmatpush1.msra.mxu0 0.0
        %1585 = vmatprep.subr.mxu0 0.0
        %1586 = vmatpush1.msra.mxu0 0.0
        %1587 = vmatprep.subr.mxu0 0.0
        %1588 = vmatpush1.msra.mxu0 0.0
        %1589 = vmatprep.subr.mxu0 0.0
        %1590 = vmatpush1.msra.mxu0 0.0
        %1591 = vmatprep.mubr.f32.mxu0 0.0
        %1592 = vmatmul.mubr.f32.gmra.mrb[0].mxu0 %v1492
        %v1593 = vpop.f32.mrb[0].mxu0
        %v1594 = vadd.f32 0.0, %v1593
        %v1595 = vpop.f32.mrb[0].mxu0
        %v1596 = vadd.f32 0.0, %v1595
        %1597 = vmatprep.mubr.f32.mxu0 0.0
        %1598 = vmatmul.mubr.f32.gmra.mrb[0].mxu0 %v1493
        %v1599 = vpop.f32.mrb[0].mxu0
        %v1600 = vadd.f32 0.0, %v1599
        %v1601 = vpop.f32.mrb[0].mxu0
        %v1602 = vadd.f32 0.0, %v1601
        %1603 = vdwg.mxu0
        %v1604 = vadd.f32 %v1488, %v1594
        %v1605 = vadd.f32 %v1489, %v1596
        %v1606 = vadd.f32 %v1490, %v1600
        %v1607 = vadd.f32 %v1491, %v1602
        %v1608 = vld [vmem:[#allocation2 + $0x4] sm:$0xff]
        %v1609 = vld [vmem:[#allocation2 + $0xc] sm:$0x3]
        %s1610 = scalar_lea.vmem [#allocation4], 2304
        %v1611 = vld [vmem:[%s1610] sm:$0xff]
        %v1612 = vld [vmem:[%s1610 + $0x8] sm:$0xff]
        %v1613 = vld [vmem:[%s1610 + $0x10] sm:$0xff]
        %v1614 = vld [vmem:[%s1610 + $0x18] sm:$0xff]
        %v1615 = vld [vmem:[%s1610 + $0x20] sm:$0xff]
        %v1616 = vld [vmem:[%s1610 + $0x28] sm:$0xff]
        %v1617 = vld [vmem:[%s1610 + $0x30] sm:$0xff]
        %v1618 = vld [vmem:[%s1610 + $0x38] sm:$0xff]
        %v1619 = vld [vmem:[%s1610 + $0x40] sm:$0xff]
        %v1620 = vld [vmem:[%s1610 + $0x48] sm:$0xff]
        %v1621 = vld [vmem:[%s1610 + $0x50] sm:$0xff]
        %v1622 = vld [vmem:[%s1610 + $0x58] sm:$0xff]
        %v1623 = vld [vmem:[%s1610 + $0x60] sm:$0xff]
        %v1624 = vld [vmem:[%s1610 + $0x68] sm:$0xff]
        %v1625 = vld [vmem:[%s1610 + $0x70] sm:$0xff]
        %v1626 = vld [vmem:[%s1610 + $0x78] sm:$0xff]
        %v1627 = vld [vmem:[%s1610 + $0x80] sm:$0xff]
        %v1628 = vld [vmem:[%s1610 + $0x88] sm:$0xff]
        %v1629 = vld [vmem:[%s1610 + $0x90] sm:$0xff]
        %v1630 = vld [vmem:[%s1610 + $0x98] sm:$0xff]
        %v1631 = vld [vmem:[%s1610 + $0xa0] sm:$0xff]
        %v1632 = vld [vmem:[%s1610 + $0xa8] sm:$0xff]
        %v1633 = vld [vmem:[%s1610 + $0xb0] sm:$0xff]
        %v1634 = vld [vmem:[%s1610 + $0xb8] sm:$0xff]
        %v1635 = vld [vmem:[%s1610 + $0xc0] sm:$0xff]
        %v1636 = vld [vmem:[%s1610 + $0xc8] sm:$0xff]
        %v1637 = vld [vmem:[%s1610 + $0xd0] sm:$0xff]
        %v1638 = vld [vmem:[%s1610 + $0xd8] sm:$0xff]
        %v1639 = vld [vmem:[%s1610 + $0xe0] sm:$0xff]
        %v1640 = vld [vmem:[%s1610 + $0xe8] sm:$0xff]
        %v1641 = vld [vmem:[%s1610 + $0xf0] sm:$0xff]
        %v1642 = vld [vmem:[%s1610 + $0xf8] sm:$0xff]
        %1643 = vmatprep.subr.mxu0 %v1612
        %1644 = vmatpush1.msra.mxu0 %v1611
        %1645 = vmatprep.subr.mxu0 %v1614
        %1646 = vmatpush1.msra.mxu0 %v1613
        %1647 = vmatprep.subr.mxu0 %v1616
        %1648 = vmatpush1.msra.mxu0 %v1615
        %1649 = vmatprep.subr.mxu0 %v1618
        %1650 = vmatpush1.msra.mxu0 %v1617
        %1651 = vmatprep.subr.mxu0 %v1620
        %1652 = vmatpush1.msra.mxu0 %v1619
        %1653 = vmatprep.subr.mxu0 %v1622
        %1654 = vmatpush1.msra.mxu0 %v1621
        %1655 = vmatprep.subr.mxu0 %v1624
        %1656 = vmatpush1.msra.mxu0 %v1623
        %1657 = vmatprep.subr.mxu0 %v1626
        %1658 = vmatpush1.msra.mxu0 %v1625
        %1659 = vmatprep.subr.mxu0 %v1628
        %1660 = vmatpush1.msra.mxu0 %v1627
        %1661 = vmatprep.subr.mxu0 %v1630
        %1662 = vmatpush1.msra.mxu0 %v1629
        %1663 = vmatprep.subr.mxu0 %v1632
        %1664 = vmatpush1.msra.mxu0 %v1631
        %1665 = vmatprep.subr.mxu0 %v1634
        %1666 = vmatpush1.msra.mxu0 %v1633
        %1667 = vmatprep.subr.mxu0 %v1636
        %1668 = vmatpush1.msra.mxu0 %v1635
        %1669 = vmatprep.subr.mxu0 %v1638
        %1670 = vmatpush1.msra.mxu0 %v1637
        %1671 = vmatprep.subr.mxu0 %v1640
        %1672 = vmatpush1.msra.mxu0 %v1639
        %1673 = vmatprep.subr.mxu0 %v1642
        %1674 = vmatpush1.msra.mxu0 %v1641
        %1675 = vmatprep.subr.mxu0 0.0
        %1676 = vmatpush1.msra.mxu0 0.0
        %1677 = vmatprep.subr.mxu0 0.0
        %1678 = vmatpush1.msra.mxu0 0.0
        %1679 = vmatprep.subr.mxu0 0.0
        %1680 = vmatpush1.msra.mxu0 0.0
        %1681 = vmatprep.subr.mxu0 0.0
        %1682 = vmatpush1.msra.mxu0 0.0
        %1683 = vmatprep.subr.mxu0 0.0
        %1684 = vmatpush1.msra.mxu0 0.0
        %1685 = vmatprep.subr.mxu0 0.0
        %1686 = vmatpush1.msra.mxu0 0.0
        %1687 = vmatprep.subr.mxu0 0.0
        %1688 = vmatpush1.msra.mxu0 0.0
        %1689 = vmatprep.subr.mxu0 0.0
        %1690 = vmatpush1.msra.mxu0 0.0
        %1691 = vmatprep.subr.mxu0 0.0
        %1692 = vmatpush1.msra.mxu0 0.0
        %1693 = vmatprep.subr.mxu0 0.0
        %1694 = vmatpush1.msra.mxu0 0.0
        %1695 = vmatprep.subr.mxu0 0.0
        %1696 = vmatpush1.msra.mxu0 0.0
        %1697 = vmatprep.subr.mxu0 0.0
        %1698 = vmatpush1.msra.mxu0 0.0
        %1699 = vmatprep.subr.mxu0 0.0
        %1700 = vmatpush1.msra.mxu0 0.0
        %1701 = vmatprep.subr.mxu0 0.0
        %1702 = vmatpush1.msra.mxu0 0.0
        %1703 = vmatprep.subr.mxu0 0.0
        %1704 = vmatpush1.msra.mxu0 0.0
        %1705 = vmatprep.subr.mxu0 0.0
        %1706 = vmatpush1.msra.mxu0 0.0
        %1707 = vmatprep.mubr.f32.mxu0 0.0
        %1708 = vmatmul.mubr.f32.gmra.mrb[0].mxu0 %v1608
        %v1709 = vpop.f32.mrb[0].mxu0
        %v1710 = vadd.f32 0.0, %v1709
        %v1711 = vpop.f32.mrb[0].mxu0
        %v1712 = vadd.f32 0.0, %v1711
        %1713 = vmatprep.mubr.f32.mxu0 0.0
        %1714 = vmatmul.mubr.f32.gmra.mrb[0].mxu0 %v1609
        %v1715 = vpop.f32.mrb[0].mxu0
        %v1716 = vadd.f32 0.0, %v1715
        %v1717 = vpop.f32.mrb[0].mxu0
        %v1718 = vadd.f32 0.0, %v1717
        %1719 = vdwg.mxu0
        %v1720 = vadd.f32 %v1604, %v1710
        %v1721 = vadd.f32 %v1605, %v1712
        %v1722 = vadd.f32 %v1606, %v1716
        %v1723 = vadd.f32 %v1607, %v1718
        %s1724 = scalar_lea.vmem [#allocation9], 1
        %v1725 = vld [vmem:[%s1724] ss:$8 sm:$0x3]
        %v1727 = vlaneseq
        %v1728 = vshrl.u32 %v1727, 7
        %v1729 = vsub.s32 0, %v1728
        %v1730 = vrot.slane %v1725, %v1729
        %v1731 = vlaneseq
        %v1732 = vshrl.u32 %v1731, 7
        %v1733 = vsub.s32 1, %v1732
        %v1734 = vrot.slane %v1725, %v1733
        %v1737 = vadd.f32 %v1720, %v1730
        %v1738 = vadd.f32 %v1721, %v1734
        %v1739 = vadd.f32 %v1722, %v1730
        %v1740 = vadd.f32 %v1723, %v1734
        %v1741 = vmax.f32 %v1737, 0.0
        %v1742 = vmax.f32 %v1738, 0.0
        %v1743 = vmax.f32 %v1739, 0.0
        %v1744 = vmax.f32 %v1740, 0.0
        %v1745 = vmax.f32 %v1741, %v1742
        %v1746 = vmax.f32 %v1743, %v1744
        %v1747 = vld [vmem:[%s5] sm:$0x1f]
        %vm1748 = vcmask 80896
        %v1750 = vsel %vm1748, %v1747, 0
        %vm1752 = vcmask 1041408
        %v1754 = vsel %vm1752, %v1746, 0
        %1756 = vmatprep.subr.mxu0 0.0
        %1757 = vmatpush1.msra.mxu0 %v1745
        %1758 = vmatprep.subr.mxu0 0.0
        %1759 = vmatpush1.msra.mxu0 %v1754
        %1760 = vmatprep.subr.mxu0 0.0
        %1761 = vmatpush1.msra.mxu0 0.0
        %1762 = vmatprep.subr.mxu0 0.0
        %1763 = vmatpush1.msra.mxu0 0.0
        %1764 = vmatprep.subr.mxu0 0.0
        %1765 = vmatpush1.msra.mxu0 0.0
        %1766 = vmatprep.subr.mxu0 0.0
        %1767 = vmatpush1.msra.mxu0 0.0
        %1768 = vmatprep.subr.mxu0 0.0
        %1769 = vmatpush1.msra.mxu0 0.0
        %1770 = vmatprep.subr.mxu0 0.0
        %1771 = vmatpush1.msra.mxu0 0.0
        %1772 = vmatprep.subr.mxu0 0.0
        %1773 = vmatpush1.msra.mxu0 0.0
        %1774 = vmatprep.subr.mxu0 0.0
        %1775 = vmatpush1.msra.mxu0 0.0
        %1776 = vmatprep.subr.mxu0 0.0
        %1777 = vmatpush1.msra.mxu0 0.0
        %1778 = vmatprep.subr.mxu0 0.0
        %1779 = vmatpush1.msra.mxu0 0.0
        %1780 = vmatprep.subr.mxu0 0.0
        %1781 = vmatpush1.msra.mxu0 0.0
        %1782 = vmatprep.subr.mxu0 0.0
        %1783 = vmatpush1.msra.mxu0 0.0
        %1784 = vmatprep.subr.mxu0 0.0
        %1785 = vmatpush1.msra.mxu0 0.0
        %1786 = vmatprep.subr.mxu0 0.0
        %1787 = vmatpush1.msra.mxu0 0.0
        %1788 = vmatprep.subr.mxu0 0.0
        %1789 = vmatpush1.msra.mxu0 0.0
        %1790 = vmatprep.subr.mxu0 0.0
        %1791 = vmatpush1.msra.mxu0 0.0
        %1792 = vmatprep.subr.mxu0 0.0
        %1793 = vmatpush1.msra.mxu0 0.0
        %1794 = vmatprep.subr.mxu0 0.0
        %1795 = vmatpush1.msra.mxu0 0.0
        %1796 = vmatprep.subr.mxu0 0.0
        %1797 = vmatpush1.msra.mxu0 0.0
        %1798 = vmatprep.subr.mxu0 0.0
        %1799 = vmatpush1.msra.mxu0 0.0
        %1800 = vmatprep.subr.mxu0 0.0
        %1801 = vmatpush1.msra.mxu0 0.0
        %1802 = vmatprep.subr.mxu0 0.0
        %1803 = vmatpush1.msra.mxu0 0.0
        %1804 = vmatprep.subr.mxu0 0.0
        %1805 = vmatpush1.msra.mxu0 0.0
        %1806 = vmatprep.subr.mxu0 0.0
        %1807 = vmatpush1.msra.mxu0 0.0
        %1808 = vmatprep.subr.mxu0 0.0
        %1809 = vmatpush1.msra.mxu0 0.0
        %1810 = vmatprep.subr.mxu0 0.0
        %1811 = vmatpush1.msra.mxu0 0.0
        %1812 = vmatprep.subr.mxu0 0.0
        %1813 = vmatpush1.msra.mxu0 0.0
        %1814 = vmatprep.subr.mxu0 0.0
        %1815 = vmatpush1.msra.mxu0 0.0
        %1816 = vmatprep.subr.mxu0 0.0
        %1817 = vmatpush1.msra.mxu0 0.0
        %1818 = vmatprep.subr.mxu0 0.0
        %1819 = vmatpush1.msra.mxu0 0.0
        %1820 = vmatprep.mubr.f32.mxu0 0.0
        %1821 = vmatmul.mubr.f32.gmra.mrb[0].mxu0 %v1750
        %v1822 = vpop.f32.mrb[0].mxu0
        %v1823 = vadd.f32 0.0, %v1822
        %v1824 = vpop.f32.mrb[0].mxu0
        %1825 = vdwg.mxu0
        %s1826 = scalar_lea.vmem %s5, 8
        %v1827 = vld [vmem:[%s1826] sm:$0x1f]
        %v1829 = vsel %vm1748, %v1827, 0
        %1831 = vmatprep.subr.mxu0 0.0
        %1832 = vmatpush1.msra.mxu0 %v1745
        %1833 = vmatprep.subr.mxu0 0.0
        %1834 = vmatpush1.msra.mxu0 %v1754
        %1835 = vmatprep.subr.mxu0 0.0
        %1836 = vmatpush1.msra.mxu0 0.0
        %1837 = vmatprep.subr.mxu0 0.0
        %1838 = vmatpush1.msra.mxu0 0.0
        %1839 = vmatprep.subr.mxu0 0.0
        %1840 = vmatpush1.msra.mxu0 0.0
        %1841 = vmatprep.subr.mxu0 0.0
        %1842 = vmatpush1.msra.mxu0 0.0
        %1843 = vmatprep.subr.mxu0 0.0
        %1844 = vmatpush1.msra.mxu0 0.0
        %1845 = vmatprep.subr.mxu0 0.0
        %1846 = vmatpush1.msra.mxu0 0.0
        %1847 = vmatprep.subr.mxu0 0.0
        %1848 = vmatpush1.msra.mxu0 0.0
        %1849 = vmatprep.subr.mxu0 0.0
        %1850 = vmatpush1.msra.mxu0 0.0
        %1851 = vmatprep.subr.mxu0 0.0
        %1852 = vmatpush1.msra.mxu0 0.0
        %1853 = vmatprep.subr.mxu0 0.0
        %1854 = vmatpush1.msra.mxu0 0.0
        %1855 = vmatprep.subr.mxu0 0.0
        %1856 = vmatpush1.msra.mxu0 0.0
        %1857 = vmatprep.subr.mxu0 0.0
        %1858 = vmatpush1.msra.mxu0 0.0
        %1859 = vmatprep.subr.mxu0 0.0
        %1860 = vmatpush1.msra.mxu0 0.0
        %1861 = vmatprep.subr.mxu0 0.0
        %1862 = vmatpush1.msra.mxu0 0.0
        %1863 = vmatprep.subr.mxu0 0.0
        %1864 = vmatpush1.msra.mxu0 0.0
        %1865 = vmatprep.subr.mxu0 0.0
        %1866 = vmatpush1.msra.mxu0 0.0
        %1867 = vmatprep.subr.mxu0 0.0
        %1868 = vmatpush1.msra.mxu0 0.0
        %1869 = vmatprep.subr.mxu0 0.0
        %1870 = vmatpush1.msra.mxu0 0.0
        %1871 = vmatprep.subr.mxu0 0.0
        %1872 = vmatpush1.msra.mxu0 0.0
        %1873 = vmatprep.subr.mxu0 0.0
        %1874 = vmatpush1.msra.mxu0 0.0
        %1875 = vmatprep.subr.mxu0 0.0
        %1876 = vmatpush1.msra.mxu0 0.0
        %1877 = vmatprep.subr.mxu0 0.0
        %1878 = vmatpush1.msra.mxu0 0.0
        %1879 = vmatprep.subr.mxu0 0.0
        %1880 = vmatpush1.msra.mxu0 0.0
        %1881 = vmatprep.subr.mxu0 0.0
        %1882 = vmatpush1.msra.mxu0 0.0
        %1883 = vmatprep.subr.mxu0 0.0
        %1884 = vmatpush1.msra.mxu0 0.0
        %1885 = vmatprep.subr.mxu0 0.0
        %1886 = vmatpush1.msra.mxu0 0.0
        %1887 = vmatprep.subr.mxu0 0.0
        %1888 = vmatpush1.msra.mxu0 0.0
        %1889 = vmatprep.subr.mxu0 0.0
        %1890 = vmatpush1.msra.mxu0 0.0
        %1891 = vmatprep.subr.mxu0 0.0
        %1892 = vmatpush1.msra.mxu0 0.0
        %1893 = vmatprep.subr.mxu0 0.0
        %1894 = vmatpush1.msra.mxu0 0.0
        %1895 = vmatprep.mubr.f32.mxu0 0.0
        %1896 = vmatmul.mubr.f32.gmra.mrb[0].mxu0 %v1829
        %v1897 = vpop.f32.mrb[0].mxu0
        %v1898 = vadd.f32 0.0, %v1897
        %v1899 = vpop.f32.mrb[0].mxu0
        %1900 = vdwg.mxu0
        %v1901 = vmax.f32 %v1823, %v1898
        %1902 = vst [vmem:[#allocation3] sm:$0x1f] %v1901
        %v1903 = vld [vmem:[#allocation9 + $0x2] ss:$0 sm:$0xff]
        %v1904 = vld [vmem:[#allocation3] sm:$0x1]
        %v1905 = vld [vmem:[#allocation7] sm:$0xff]
        %v1906 = vld [vmem:[#allocation7 + $0x8] sm:$0xff]
        %v1907 = vld [vmem:[#allocation7 + $0x10] sm:$0xff]
        %v1908 = vld [vmem:[#allocation7 + $0x18] sm:$0xff]
        %v1909 = vld [vmem:[#allocation7 + $0x20] sm:$0xff]
        %v1910 = vld [vmem:[#allocation7 + $0x28] sm:$0xff]
        %v1911 = vld [vmem:[#allocation7 + $0x30] sm:$0xff]
        %v1912 = vld [vmem:[#allocation7 + $0x38] sm:$0xff]
        %v1913 = vld [vmem:[#allocation7 + $0x40] sm:$0xff]
        %v1914 = vld [vmem:[#allocation7 + $0x48] sm:$0xff]
        %v1915 = vld [vmem:[#allocation7 + $0x50] sm:$0xff]
        %v1916 = vld [vmem:[#allocation7 + $0x58] sm:$0xff]
        %v1917 = vld [vmem:[#allocation7 + $0x60] sm:$0xff]
        %v1918 = vld [vmem:[#allocation7 + $0x68] sm:$0xff]
        %v1919 = vld [vmem:[#allocation7 + $0x70] sm:$0xff]
        %v1920 = vld [vmem:[#allocation7 + $0x78] sm:$0xff]
        %1921 = vmatprep.subr.mxu0 0.0
        %1922 = vmatpush1.msra.mxu0 %v1905
        %1923 = vmatprep.subr.mxu0 0.0
        %1924 = vmatpush1.msra.mxu0 %v1906
        %1925 = vmatprep.subr.mxu0 0.0
        %1926 = vmatpush1.msra.mxu0 %v1907
        %1927 = vmatprep.subr.mxu0 0.0
        %1928 = vmatpush1.msra.mxu0 %v1908
        %1929 = vmatprep.subr.mxu0 0.0
        %1930 = vmatpush1.msra.mxu0 %v1909
        %1931 = vmatprep.subr.mxu0 0.0
        %1932 = vmatpush1.msra.mxu0 %v1910
        %1933 = vmatprep.subr.mxu0 0.0
        %1934 = vmatpush1.msra.mxu0 %v1911
        %1935 = vmatprep.subr.mxu0 0.0
        %1936 = vmatpush1.msra.mxu0 %v1912
        %1937 = vmatprep.subr.mxu0 0.0
        %1938 = vmatpush1.msra.mxu0 %v1913
        %1939 = vmatprep.subr.mxu0 0.0
        %1940 = vmatpush1.msra.mxu0 %v1914
        %1941 = vmatprep.subr.mxu0 0.0
        %1942 = vmatpush1.msra.mxu0 %v1915
        %1943 = vmatprep.subr.mxu0 0.0
        %1944 = vmatpush1.msra.mxu0 %v1916
        %1945 = vmatprep.subr.mxu0 0.0
        %1946 = vmatpush1.msra.mxu0 %v1917
        %1947 = vmatprep.subr.mxu0 0.0
        %1948 = vmatpush1.msra.mxu0 %v1918
        %1949 = vmatprep.subr.mxu0 0.0
        %1950 = vmatpush1.msra.mxu0 %v1919
        %1951 = vmatprep.subr.mxu0 0.0
        %1952 = vmatpush1.msra.mxu0 %v1920
        %1953 = vmatprep.subr.mxu0 0.0
        %1954 = vmatpush1.msra.mxu0 0.0
        %1955 = vmatprep.subr.mxu0 0.0
        %1956 = vmatpush1.msra.mxu0 0.0
        %1957 = vmatprep.subr.mxu0 0.0
        %1958 = vmatpush1.msra.mxu0 0.0
        %1959 = vmatprep.subr.mxu0 0.0
        %1960 = vmatpush1.msra.mxu0 0.0
        %1961 = vmatprep.subr.mxu0 0.0
        %1962 = vmatpush1.msra.mxu0 0.0
        %1963 = vmatprep.subr.mxu0 0.0
        %1964 = vmatpush1.msra.mxu0 0.0
        %1965 = vmatprep.subr.mxu0 0.0
        %1966 = vmatpush1.msra.mxu0 0.0
        %1967 = vmatprep.subr.mxu0 0.0
        %1968 = vmatpush1.msra.mxu0 0.0
        %1969 = vmatprep.subr.mxu0 0.0
        %1970 = vmatpush1.msra.mxu0 0.0
        %1971 = vmatprep.subr.mxu0 0.0
        %1972 = vmatpush1.msra.mxu0 0.0
        %1973 = vmatprep.subr.mxu0 0.0
        %1974 = vmatpush1.msra.mxu0 0.0
        %1975 = vmatprep.subr.mxu0 0.0
        %1976 = vmatpush1.msra.mxu0 0.0
        %1977 = vmatprep.subr.mxu0 0.0
        %1978 = vmatpush1.msra.mxu0 0.0
        %1979 = vmatprep.subr.mxu0 0.0
        %1980 = vmatpush1.msra.mxu0 0.0
        %1981 = vmatprep.subr.mxu0 0.0
        %1982 = vmatpush1.msra.mxu0 0.0
        %1983 = vmatprep.subr.mxu0 0.0
        %1984 = vmatpush1.msra.mxu0 0.0
        %1985 = vmatprep.mubr.f32.mxu0 0.0
        %1986 = vmatmul.mubr.f32.gmra.mrb[0].mxu0 %v1904
        %v1987 = vpop.f32.mrb[0].mxu0
        %v1988 = vadd.f32 0.0, %v1987
        %v1989 = vpop.f32.mrb[0].mxu0
        %1990 = vdwg.mxu0
        %v1991 = vadd.f32 %v1903, %v1988
        %v1992 = vld [vmem:[#allocation3 + $0x1] sm:$0x1]
        %s1993 = scalar_lea.vmem [#allocation7], 128
        %v1994 = vld [vmem:[%s1993] sm:$0xff]
        %v1995 = vld [vmem:[%s1993 + $0x8] sm:$0xff]
        %v1996 = vld [vmem:[%s1993 + $0x10] sm:$0xff]
        %v1997 = vld [vmem:[%s1993 + $0x18] sm:$0xff]
        %v1998 = vld [vmem:[%s1993 + $0x20] sm:$0xff]
        %v1999 = vld [vmem:[%s1993 + $0x28] sm:$0xff]
        %v2000 = vld [vmem:[%s1993 + $0x30] sm:$0xff]
        %v2001 = vld [vmem:[%s1993 + $0x38] sm:$0xff]
        %v2002 = vld [vmem:[%s1993 + $0x40] sm:$0xff]
        %v2003 = vld [vmem:[%s1993 + $0x48] sm:$0xff]
        %v2004 = vld [vmem:[%s1993 + $0x50] sm:$0xff]
        %v2005 = vld [vmem:[%s1993 + $0x58] sm:$0xff]
        %v2006 = vld [vmem:[%s1993 + $0x60] sm:$0xff]
        %v2007 = vld [vmem:[%s1993 + $0x68] sm:$0xff]
        %v2008 = vld [vmem:[%s1993 + $0x70] sm:$0xff]
        %v2009 = vld [vmem:[%s1993 + $0x78] sm:$0xff]
        %2010 = vmatprep.subr.mxu0 0.0
        %2011 = vmatpush1.msra.mxu0 %v1994
        %2012 = vmatprep.subr.mxu0 0.0
        %2013 = vmatpush1.msra.mxu0 %v1995
        %2014 = vmatprep.subr.mxu0 0.0
        %2015 = vmatpush1.msra.mxu0 %v1996
        %2016 = vmatprep.subr.mxu0 0.0
        %2017 = vmatpush1.msra.mxu0 %v1997
        %2018 = vmatprep.subr.mxu0 0.0
        %2019 = vmatpush1.msra.mxu0 %v1998
        %2020 = vmatprep.subr.mxu0 0.0
        %2021 = vmatpush1.msra.mxu0 %v1999
        %2022 = vmatprep.subr.mxu0 0.0
        %2023 = vmatpush1.msra.mxu0 %v2000
        %2024 = vmatprep.subr.mxu0 0.0
        %2025 = vmatpush1.msra.mxu0 %v2001
        %2026 = vmatprep.subr.mxu0 0.0
        %2027 = vmatpush1.msra.mxu0 %v2002
        %2028 = vmatprep.subr.mxu0 0.0
        %2029 = vmatpush1.msra.mxu0 %v2003
        %2030 = vmatprep.subr.mxu0 0.0
        %2031 = vmatpush1.msra.mxu0 %v2004
        %2032 = vmatprep.subr.mxu0 0.0
        %2033 = vmatpush1.msra.mxu0 %v2005
        %2034 = vmatprep.subr.mxu0 0.0
        %2035 = vmatpush1.msra.mxu0 %v2006
        %2036 = vmatprep.subr.mxu0 0.0
        %2037 = vmatpush1.msra.mxu0 %v2007
        %2038 = vmatprep.subr.mxu0 0.0
        %2039 = vmatpush1.msra.mxu0 %v2008
        %2040 = vmatprep.subr.mxu0 0.0
        %2041 = vmatpush1.msra.mxu0 %v2009
        %2042 = vmatprep.subr.mxu0 0.0
        %2043 = vmatpush1.msra.mxu0 0.0
        %2044 = vmatprep.subr.mxu0 0.0
        %2045 = vmatpush1.msra.mxu0 0.0
        %2046 = vmatprep.subr.mxu0 0.0
        %2047 = vmatpush1.msra.mxu0 0.0
        %2048 = vmatprep.subr.mxu0 0.0
        %2049 = vmatpush1.msra.mxu0 0.0
        %2050 = vmatprep.subr.mxu0 0.0
        %2051 = vmatpush1.msra.mxu0 0.0
        %2052 = vmatprep.subr.mxu0 0.0
        %2053 = vmatpush1.msra.mxu0 0.0
        %2054 = vmatprep.subr.mxu0 0.0
        %2055 = vmatpush1.msra.mxu0 0.0
        %2056 = vmatprep.subr.mxu0 0.0
        %2057 = vmatpush1.msra.mxu0 0.0
        %2058 = vmatprep.subr.mxu0 0.0
        %2059 = vmatpush1.msra.mxu0 0.0
        %2060 = vmatprep.subr.mxu0 0.0
        %2061 = vmatpush1.msra.mxu0 0.0
        %2062 = vmatprep.subr.mxu0 0.0
        %2063 = vmatpush1.msra.mxu0 0.0
        %2064 = vmatprep.subr.mxu0 0.0
        %2065 = vmatpush1.msra.mxu0 0.0
        %2066 = vmatprep.subr.mxu0 0.0
        %2067 = vmatpush1.msra.mxu0 0.0
        %2068 = vmatprep.subr.mxu0 0.0
        %2069 = vmatpush1.msra.mxu0 0.0
        %2070 = vmatprep.subr.mxu0 0.0
        %2071 = vmatpush1.msra.mxu0 0.0
        %2072 = vmatprep.subr.mxu0 0.0
        %2073 = vmatpush1.msra.mxu0 0.0
        %2074 = vmatprep.mubr.f32.mxu0 0.0
        %2075 = vmatmul.mubr.f32.gmra.mrb[0].mxu0 %v1992
        %v2076 = vpop.f32.mrb[0].mxu0
        %v2077 = vadd.f32 0.0, %v2076
        %v2078 = vpop.f32.mrb[0].mxu0
        %2079 = vdwg.mxu0
        %v2080 = vadd.f32 %v1991, %v2077
        %v2081 = vld [vmem:[#allocation3 + $0x2] sm:$0x1]
        %s2082 = scalar_lea.vmem [#allocation7], 256
        %v2083 = vld [vmem:[%s2082] sm:$0xff]
        %v2084 = vld [vmem:[%s2082 + $0x8] sm:$0xff]
        %v2085 = vld [vmem:[%s2082 + $0x10] sm:$0xff]
        %v2086 = vld [vmem:[%s2082 + $0x18] sm:$0xff]
        %v2087 = vld [vmem:[%s2082 + $0x20] sm:$0xff]
        %v2088 = vld [vmem:[%s2082 + $0x28] sm:$0xff]
        %v2089 = vld [vmem:[%s2082 + $0x30] sm:$0xff]
        %v2090 = vld [vmem:[%s2082 + $0x38] sm:$0xff]
        %v2091 = vld [vmem:[%s2082 + $0x40] sm:$0xff]
        %v2092 = vld [vmem:[%s2082 + $0x48] sm:$0xff]
        %v2093 = vld [vmem:[%s2082 + $0x50] sm:$0xff]
        %v2094 = vld [vmem:[%s2082 + $0x58] sm:$0xff]
        %v2095 = vld [vmem:[%s2082 + $0x60] sm:$0xff]
        %v2096 = vld [vmem:[%s2082 + $0x68] sm:$0xff]
        %v2097 = vld [vmem:[%s2082 + $0x70] sm:$0xff]
        %v2098 = vld [vmem:[%s2082 + $0x78] sm:$0xff]
        %2099 = vmatprep.subr.mxu0 0.0
        %2100 = vmatpush1.msra.mxu0 %v2083
        %2101 = vmatprep.subr.mxu0 0.0
        %2102 = vmatpush1.msra.mxu0 %v2084
        %2103 = vmatprep.subr.mxu0 0.0
        %2104 = vmatpush1.msra.mxu0 %v2085
        %2105 = vmatprep.subr.mxu0 0.0
        %2106 = vmatpush1.msra.mxu0 %v2086
        %2107 = vmatprep.subr.mxu0 0.0
        %2108 = vmatpush1.msra.mxu0 %v2087
        %2109 = vmatprep.subr.mxu0 0.0
        %2110 = vmatpush1.msra.mxu0 %v2088
        %2111 = vmatprep.subr.mxu0 0.0
        %2112 = vmatpush1.msra.mxu0 %v2089
        %2113 = vmatprep.subr.mxu0 0.0
        %2114 = vmatpush1.msra.mxu0 %v2090
        %2115 = vmatprep.subr.mxu0 0.0
        %2116 = vmatpush1.msra.mxu0 %v2091
        %2117 = vmatprep.subr.mxu0 0.0
        %2118 = vmatpush1.msra.mxu0 %v2092
        %2119 = vmatprep.subr.mxu0 0.0
        %2120 = vmatpush1.msra.mxu0 %v2093
        %2121 = vmatprep.subr.mxu0 0.0
        %2122 = vmatpush1.msra.mxu0 %v2094
        %2123 = vmatprep.subr.mxu0 0.0
        %2124 = vmatpush1.msra.mxu0 %v2095
        %2125 = vmatprep.subr.mxu0 0.0
        %2126 = vmatpush1.msra.mxu0 %v2096
        %2127 = vmatprep.subr.mxu0 0.0
        %2128 = vmatpush1.msra.mxu0 %v2097
        %2129 = vmatprep.subr.mxu0 0.0
        %2130 = vmatpush1.msra.mxu0 %v2098
        %2131 = vmatprep.subr.mxu0 0.0
        %2132 = vmatpush1.msra.mxu0 0.0
        %2133 = vmatprep.subr.mxu0 0.0
        %2134 = vmatpush1.msra.mxu0 0.0
        %2135 = vmatprep.subr.mxu0 0.0
        %2136 = vmatpush1.msra.mxu0 0.0
        %2137 = vmatprep.subr.mxu0 0.0
        %2138 = vmatpush1.msra.mxu0 0.0
        %2139 = vmatprep.subr.mxu0 0.0
        %2140 = vmatpush1.msra.mxu0 0.0
        %2141 = vmatprep.subr.mxu0 0.0
        %2142 = vmatpush1.msra.mxu0 0.0
        %2143 = vmatprep.subr.mxu0 0.0
        %2144 = vmatpush1.msra.mxu0 0.0
        %2145 = vmatprep.subr.mxu0 0.0
        %2146 = vmatpush1.msra.mxu0 0.0
        %2147 = vmatprep.subr.mxu0 0.0
        %2148 = vmatpush1.msra.mxu0 0.0
        %2149 = vmatprep.subr.mxu0 0.0
        %2150 = vmatpush1.msra.mxu0 0.0
        %2151 = vmatprep.subr.mxu0 0.0
        %2152 = vmatpush1.msra.mxu0 0.0
        %2153 = vmatprep.subr.mxu0 0.0
        %2154 = vmatpush1.msra.mxu0 0.0
        %2155 = vmatprep.subr.mxu0 0.0
        %2156 = vmatpush1.msra.mxu0 0.0
        %2157 = vmatprep.subr.mxu0 0.0
        %2158 = vmatpush1.msra.mxu0 0.0
        %2159 = vmatprep.subr.mxu0 0.0
        %2160 = vmatpush1.msra.mxu0 0.0
        %2161 = vmatprep.subr.mxu0 0.0
        %2162 = vmatpush1.msra.mxu0 0.0
        %2163 = vmatprep.mubr.f32.mxu0 0.0
        %2164 = vmatmul.mubr.f32.gmra.mrb[0].mxu0 %v2081
        %v2165 = vpop.f32.mrb[0].mxu0
        %v2166 = vadd.f32 0.0, %v2165
        %v2167 = vpop.f32.mrb[0].mxu0
        %2168 = vdwg.mxu0
        %v2169 = vadd.f32 %v2080, %v2166
        %v2170 = vld [vmem:[#allocation3 + $0x3] sm:$0x1]
        %s2171 = scalar_lea.vmem [#allocation7], 384
        %v2172 = vld [vmem:[%s2171] sm:$0xff]
        %v2173 = vld [vmem:[%s2171 + $0x8] sm:$0xff]
        %v2174 = vld [vmem:[%s2171 + $0x10] sm:$0xff]
        %v2175 = vld [vmem:[%s2171 + $0x18] sm:$0xff]
        %v2176 = vld [vmem:[%s2171 + $0x20] sm:$0xff]
        %v2177 = vld [vmem:[%s2171 + $0x28] sm:$0xff]
        %v2178 = vld [vmem:[%s2171 + $0x30] sm:$0xff]
        %v2179 = vld [vmem:[%s2171 + $0x38] sm:$0xff]
        %v2180 = vld [vmem:[%s2171 + $0x40] sm:$0xff]
        %v2181 = vld [vmem:[%s2171 + $0x48] sm:$0xff]
        %v2182 = vld [vmem:[%s2171 + $0x50] sm:$0xff]
        %v2183 = vld [vmem:[%s2171 + $0x58] sm:$0xff]
        %v2184 = vld [vmem:[%s2171 + $0x60] sm:$0xff]
        %v2185 = vld [vmem:[%s2171 + $0x68] sm:$0xff]
        %v2186 = vld [vmem:[%s2171 + $0x70] sm:$0xff]
        %v2187 = vld [vmem:[%s2171 + $0x78] sm:$0xff]
        %2188 = vmatprep.subr.mxu0 0.0
        %2189 = vmatpush1.msra.mxu0 %v2172
        %2190 = vmatprep.subr.mxu0 0.0
        %2191 = vmatpush1.msra.mxu0 %v2173
        %2192 = vmatprep.subr.mxu0 0.0
        %2193 = vmatpush1.msra.mxu0 %v2174
        %2194 = vmatprep.subr.mxu0 0.0
        %2195 = vmatpush1.msra.mxu0 %v2175
        %2196 = vmatprep.subr.mxu0 0.0
        %2197 = vmatpush1.msra.mxu0 %v2176
        %2198 = vmatprep.subr.mxu0 0.0
        %2199 = vmatpush1.msra.mxu0 %v2177
        %2200 = vmatprep.subr.mxu0 0.0
        %2201 = vmatpush1.msra.mxu0 %v2178
        %2202 = vmatprep.subr.mxu0 0.0
        %2203 = vmatpush1.msra.mxu0 %v2179
        %2204 = vmatprep.subr.mxu0 0.0
        %2205 = vmatpush1.msra.mxu0 %v2180
        %2206 = vmatprep.subr.mxu0 0.0
        %2207 = vmatpush1.msra.mxu0 %v2181
        %2208 = vmatprep.subr.mxu0 0.0
        %2209 = vmatpush1.msra.mxu0 %v2182
        %2210 = vmatprep.subr.mxu0 0.0
        %2211 = vmatpush1.msra.mxu0 %v2183
        %2212 = vmatprep.subr.mxu0 0.0
        %2213 = vmatpush1.msra.mxu0 %v2184
        %2214 = vmatprep.subr.mxu0 0.0
        %2215 = vmatpush1.msra.mxu0 %v2185
        %2216 = vmatprep.subr.mxu0 0.0
        %2217 = vmatpush1.msra.mxu0 %v2186
        %2218 = vmatprep.subr.mxu0 0.0
        %2219 = vmatpush1.msra.mxu0 %v2187
        %2220 = vmatprep.subr.mxu0 0.0
        %2221 = vmatpush1.msra.mxu0 0.0
        %2222 = vmatprep.subr.mxu0 0.0
        %2223 = vmatpush1.msra.mxu0 0.0
        %2224 = vmatprep.subr.mxu0 0.0
        %2225 = vmatpush1.msra.mxu0 0.0
        %2226 = vmatprep.subr.mxu0 0.0
        %2227 = vmatpush1.msra.mxu0 0.0
        %2228 = vmatprep.subr.mxu0 0.0
        %2229 = vmatpush1.msra.mxu0 0.0
        %2230 = vmatprep.subr.mxu0 0.0
        %2231 = vmatpush1.msra.mxu0 0.0
        %2232 = vmatprep.subr.mxu0 0.0
        %2233 = vmatpush1.msra.mxu0 0.0
        %2234 = vmatprep.subr.mxu0 0.0
        %2235 = vmatpush1.msra.mxu0 0.0
        %2236 = vmatprep.subr.mxu0 0.0
        %2237 = vmatpush1.msra.mxu0 0.0
        %2238 = vmatprep.subr.mxu0 0.0
        %2239 = vmatpush1.msra.mxu0 0.0
        %2240 = vmatprep.subr.mxu0 0.0
        %2241 = vmatpush1.msra.mxu0 0.0
        %2242 = vmatprep.subr.mxu0 0.0
        %2243 = vmatpush1.msra.mxu0 0.0
        %2244 = vmatprep.subr.mxu0 0.0
        %2245 = vmatpush1.msra.mxu0 0.0
        %2246 = vmatprep.subr.mxu0 0.0
        %2247 = vmatpush1.msra.mxu0 0.0
        %2248 = vmatprep.subr.mxu0 0.0
        %2249 = vmatpush1.msra.mxu0 0.0
        %2250 = vmatprep.subr.mxu0 0.0
        %2251 = vmatpush1.msra.mxu0 0.0
        %2252 = vmatprep.mubr.f32.mxu0 0.0
        %2253 = vmatmul.mubr.f32.gmra.mrb[0].mxu0 %v2170
        %v2254 = vpop.f32.mrb[0].mxu0
        %v2255 = vadd.f32 0.0, %v2254
        %v2256 = vpop.f32.mrb[0].mxu0
        %2257 = vdwg.mxu0
        %v2258 = vadd.f32 %v2169, %v2255
        %v2259 = vld [vmem:[#allocation3 + $0x4] sm:$0x1]
        %s2260 = scalar_lea.vmem [#allocation7], 512
        %v2261 = vld [vmem:[%s2260] sm:$0xff]
        %v2262 = vld [vmem:[%s2260 + $0x8] sm:$0xff]
        %v2263 = vld [vmem:[%s2260 + $0x10] sm:$0xff]
        %v2264 = vld [vmem:[%s2260 + $0x18] sm:$0xff]
        %v2265 = vld [vmem:[%s2260 + $0x20] sm:$0xff]
        %v2266 = vld [vmem:[%s2260 + $0x28] sm:$0xff]
        %v2267 = vld [vmem:[%s2260 + $0x30] sm:$0xff]
        %v2268 = vld [vmem:[%s2260 + $0x38] sm:$0xff]
        %v2269 = vld [vmem:[%s2260 + $0x40] sm:$0xff]
        %v2270 = vld [vmem:[%s2260 + $0x48] sm:$0xff]
        %v2271 = vld [vmem:[%s2260 + $0x50] sm:$0xff]
        %v2272 = vld [vmem:[%s2260 + $0x58] sm:$0xff]
        %v2273 = vld [vmem:[%s2260 + $0x60] sm:$0xff]
        %v2274 = vld [vmem:[%s2260 + $0x68] sm:$0xff]
        %v2275 = vld [vmem:[%s2260 + $0x70] sm:$0xff]
        %v2276 = vld [vmem:[%s2260 + $0x78] sm:$0xff]
        %2277 = vmatprep.subr.mxu0 0.0
        %2278 = vmatpush1.msra.mxu0 %v2261
        %2279 = vmatprep.subr.mxu0 0.0
        %2280 = vmatpush1.msra.mxu0 %v2262
        %2281 = vmatprep.subr.mxu0 0.0
        %2282 = vmatpush1.msra.mxu0 %v2263
        %2283 = vmatprep.subr.mxu0 0.0
        %2284 = vmatpush1.msra.mxu0 %v2264
        %2285 = vmatprep.subr.mxu0 0.0
        %2286 = vmatpush1.msra.mxu0 %v2265
        %2287 = vmatprep.subr.mxu0 0.0
        %2288 = vmatpush1.msra.mxu0 %v2266
        %2289 = vmatprep.subr.mxu0 0.0
        %2290 = vmatpush1.msra.mxu0 %v2267
        %2291 = vmatprep.subr.mxu0 0.0
        %2292 = vmatpush1.msra.mxu0 %v2268
        %2293 = vmatprep.subr.mxu0 0.0
        %2294 = vmatpush1.msra.mxu0 %v2269
        %2295 = vmatprep.subr.mxu0 0.0
        %2296 = vmatpush1.msra.mxu0 %v2270
        %2297 = vmatprep.subr.mxu0 0.0
        %2298 = vmatpush1.msra.mxu0 %v2271
        %2299 = vmatprep.subr.mxu0 0.0
        %2300 = vmatpush1.msra.mxu0 %v2272
        %2301 = vmatprep.subr.mxu0 0.0
        %2302 = vmatpush1.msra.mxu0 %v2273
        %2303 = vmatprep.subr.mxu0 0.0
        %2304 = vmatpush1.msra.mxu0 %v2274
        %2305 = vmatprep.subr.mxu0 0.0
        %2306 = vmatpush1.msra.mxu0 %v2275
        %2307 = vmatprep.subr.mxu0 0.0
        %2308 = vmatpush1.msra.mxu0 %v2276
        %2309 = vmatprep.subr.mxu0 0.0
        %2310 = vmatpush1.msra.mxu0 0.0
        %2311 = vmatprep.subr.mxu0 0.0
        %2312 = vmatpush1.msra.mxu0 0.0
        %2313 = vmatprep.subr.mxu0 0.0
        %2314 = vmatpush1.msra.mxu0 0.0
        %2315 = vmatprep.subr.mxu0 0.0
        %2316 = vmatpush1.msra.mxu0 0.0
        %2317 = vmatprep.subr.mxu0 0.0
        %2318 = vmatpush1.msra.mxu0 0.0
        %2319 = vmatprep.subr.mxu0 0.0
        %2320 = vmatpush1.msra.mxu0 0.0
        %2321 = vmatprep.subr.mxu0 0.0
        %2322 = vmatpush1.msra.mxu0 0.0
        %2323 = vmatprep.subr.mxu0 0.0
        %2324 = vmatpush1.msra.mxu0 0.0
        %2325 = vmatprep.subr.mxu0 0.0
        %2326 = vmatpush1.msra.mxu0 0.0
        %2327 = vmatprep.subr.mxu0 0.0
        %2328 = vmatpush1.msra.mxu0 0.0
        %2329 = vmatprep.subr.mxu0 0.0
        %2330 = vmatpush1.msra.mxu0 0.0
        %2331 = vmatprep.subr.mxu0 0.0
        %2332 = vmatpush1.msra.mxu0 0.0
        %2333 = vmatprep.subr.mxu0 0.0
        %2334 = vmatpush1.msra.mxu0 0.0
        %2335 = vmatprep.subr.mxu0 0.0
        %2336 = vmatpush1.msra.mxu0 0.0
        %2337 = vmatprep.subr.mxu0 0.0
        %2338 = vmatpush1.msra.mxu0 0.0
        %2339 = vmatprep.subr.mxu0 0.0
        %2340 = vmatpush1.msra.mxu0 0.0
        %2341 = vmatprep.mubr.f32.mxu0 0.0
        %2342 = vmatmul.mubr.f32.gmra.mrb[0].mxu0 %v2259
        %v2343 = vpop.f32.mrb[0].mxu0
        %v2344 = vadd.f32 0.0, %v2343
        %v2345 = vpop.f32.mrb[0].mxu0
        %2346 = vdwg.mxu0
        %v2347 = vadd.f32 %v2258, %v2344
        %v2348 = vmax.f32 %v2347, 0.0
        %s2349 = scalar_lea.vmem [#allocation7], 640
        %v2350 = vld [vmem:[%s2349] sm:$0xff]
        %v2351 = vld [vmem:[%s2349 + $0x8] sm:$0xff]
        %v2352 = vld [vmem:[%s2349 + $0x10] sm:$0xff]
        %v2353 = vld [vmem:[%s2349 + $0x18] sm:$0xff]
        %v2354 = vld [vmem:[%s2349 + $0x20] sm:$0xff]
        %v2355 = vld [vmem:[%s2349 + $0x28] sm:$0xff]
        %v2356 = vld [vmem:[%s2349 + $0x30] sm:$0xff]
        %v2357 = vld [vmem:[%s2349 + $0x38] sm:$0xff]
        %v2358 = vld [vmem:[%s2349 + $0x40] sm:$0xff]
        %v2359 = vld [vmem:[%s2349 + $0x48] sm:$0xff]
        %v2360 = vld [vmem:[%s2349 + $0x50] sm:$0xff]
        %v2361 = vld [vmem:[%s2349 + $0x58] sm:$0xff]
        %v2362 = vld [vmem:[%s2349 + $0x60] sm:$0xff]
        %v2363 = vld [vmem:[%s2349 + $0x68] sm:$0xff]
        %v2364 = vld [vmem:[%s2349 + $0x70] sm:$0xff]
        %v2365 = vld [vmem:[%s2349 + $0x78] sm:$0xff]
        %v2366 = vld [vmem:[#allocation9 + $0x3] ss:$0 sm:$0xff]
        %2367 = vmatprep.subr.mxu0 0.0
        %2368 = vmatpush1.msra.mxu0 %v2350
        %2369 = vmatprep.subr.mxu0 0.0
        %2370 = vmatpush1.msra.mxu0 %v2351
        %2371 = vmatprep.subr.mxu0 0.0
        %2372 = vmatpush1.msra.mxu0 %v2352
        %2373 = vmatprep.subr.mxu0 0.0
        %2374 = vmatpush1.msra.mxu0 %v2353
        %2375 = vmatprep.subr.mxu0 0.0
        %2376 = vmatpush1.msra.mxu0 %v2354
        %2377 = vmatprep.subr.mxu0 0.0
        %2378 = vmatpush1.msra.mxu0 %v2355
        %2379 = vmatprep.subr.mxu0 0.0
        %2380 = vmatpush1.msra.mxu0 %v2356
        %2381 = vmatprep.subr.mxu0 0.0
        %2382 = vmatpush1.msra.mxu0 %v2357
        %2383 = vmatprep.subr.mxu0 0.0
        %2384 = vmatpush1.msra.mxu0 %v2358
        %2385 = vmatprep.subr.mxu0 0.0
        %2386 = vmatpush1.msra.mxu0 %v2359
        %2387 = vmatprep.subr.mxu0 0.0
        %2388 = vmatpush1.msra.mxu0 %v2360
        %2389 = vmatprep.subr.mxu0 0.0
        %2390 = vmatpush1.msra.mxu0 %v2361
        %2391 = vmatprep.subr.mxu0 0.0
        %2392 = vmatpush1.msra.mxu0 %v2362
        %2393 = vmatprep.subr.mxu0 0.0
        %2394 = vmatpush1.msra.mxu0 %v2363
        %2395 = vmatprep.subr.mxu0 0.0
        %2396 = vmatpush1.msra.mxu0 %v2364
        %2397 = vmatprep.subr.mxu0 0.0
        %2398 = vmatpush1.msra.mxu0 %v2365
        %2399 = vmatprep.subr.mxu0 0.0
        %2400 = vmatpush1.msra.mxu0 0.0
        %2401 = vmatprep.subr.mxu0 0.0
        %2402 = vmatpush1.msra.mxu0 0.0
        %2403 = vmatprep.subr.mxu0 0.0
        %2404 = vmatpush1.msra.mxu0 0.0
        %2405 = vmatprep.subr.mxu0 0.0
        %2406 = vmatpush1.msra.mxu0 0.0
        %2407 = vmatprep.subr.mxu0 0.0
        %2408 = vmatpush1.msra.mxu0 0.0
        %2409 = vmatprep.subr.mxu0 0.0
        %2410 = vmatpush1.msra.mxu0 0.0
        %2411 = vmatprep.subr.mxu0 0.0
        %2412 = vmatpush1.msra.mxu0 0.0
        %2413 = vmatprep.subr.mxu0 0.0
        %2414 = vmatpush1.msra.mxu0 0.0
        %2415 = vmatprep.subr.mxu0 0.0
        %2416 = vmatpush1.msra.mxu0 0.0
        %2417 = vmatprep.subr.mxu0 0.0
        %2418 = vmatpush1.msra.mxu0 0.0
        %2419 = vmatprep.subr.mxu0 0.0
        %2420 = vmatpush1.msra.mxu0 0.0
        %2421 = vmatprep.subr.mxu0 0.0
        %2422 = vmatpush1.msra.mxu0 0.0
        %2423 = vmatprep.subr.mxu0 0.0
        %2424 = vmatpush1.msra.mxu0 0.0
        %2425 = vmatprep.subr.mxu0 0.0
        %2426 = vmatpush1.msra.mxu0 0.0
        %2427 = vmatprep.subr.mxu0 0.0
        %2428 = vmatpush1.msra.mxu0 0.0
        %2429 = vmatprep.subr.mxu0 0.0
        %2430 = vmatpush1.msra.mxu0 0.0
        %2431 = vmatprep.mubr.f32.mxu0 0.0
        %2432 = vmatmul.mubr.f32.gmra.mrb[0].mxu0 %v2348
        %v2433 = vpop.f32.mrb[0].mxu0
        %v2434 = vadd.f32 %v2366, %v2433
        %v2435 = vpop.f32.mrb[0].mxu0
        %2436 = vdwg.mxu0
        %v2437 = vmax.f32 %v2434, 0.0
        %s2438 = scalar_lea.vmem [#allocation7], 768
        %v2439 = vld [vmem:[%s2438] sm:$0xff]
        %v2440 = vld [vmem:[%s2438 + $0x8] sm:$0xff]
        %v2441 = vld [vmem:[%s2438 + $0x10] sm:$0xff]
        %v2442 = vld [vmem:[%s2438 + $0x18] sm:$0xff]
        %v2443 = vld [vmem:[%s2438 + $0x20] sm:$0xff]
        %v2444 = vld [vmem:[%s2438 + $0x28] sm:$0xff]
        %v2445 = vld [vmem:[%s2438 + $0x30] sm:$0xff]
        %v2446 = vld [vmem:[%s2438 + $0x38] sm:$0xff]
        %v2447 = vld [vmem:[%s2438 + $0x40] sm:$0xff]
        %v2448 = vld [vmem:[%s2438 + $0x48] sm:$0xff]
        %v2449 = vld [vmem:[%s2438 + $0x50] sm:$0xff]
        %v2450 = vld [vmem:[%s2438 + $0x58] sm:$0xff]
        %v2451 = vld [vmem:[%s2438 + $0x60] sm:$0xff]
        %v2452 = vld [vmem:[%s2438 + $0x68] sm:$0xff]
        %v2453 = vld [vmem:[%s2438 + $0x70] sm:$0xff]
        %v2454 = vld [vmem:[%s2438 + $0x78] sm:$0xff]
        %v2455 = vld [vmem:[#allocation9 + $0x4] ss:$0 sm:$0xff]
        %2456 = vmatprep.subr.mxu0 0.0
        %2457 = vmatpush1.msra.mxu0 %v2439
        %2458 = vmatprep.subr.mxu0 0.0
        %2459 = vmatpush1.msra.mxu0 %v2440
        %2460 = vmatprep.subr.mxu0 0.0
        %2461 = vmatpush1.msra.mxu0 %v2441
        %2462 = vmatprep.subr.mxu0 0.0
        %2463 = vmatpush1.msra.mxu0 %v2442
        %2464 = vmatprep.subr.mxu0 0.0
        %2465 = vmatpush1.msra.mxu0 %v2443
        %2466 = vmatprep.subr.mxu0 0.0
        %2467 = vmatpush1.msra.mxu0 %v2444
        %2468 = vmatprep.subr.mxu0 0.0
        %2469 = vmatpush1.msra.mxu0 %v2445
        %2470 = vmatprep.subr.mxu0 0.0
        %2471 = vmatpush1.msra.mxu0 %v2446
        %2472 = vmatprep.subr.mxu0 0.0
        %2473 = vmatpush1.msra.mxu0 %v2447
        %2474 = vmatprep.subr.mxu0 0.0
        %2475 = vmatpush1.msra.mxu0 %v2448
        %2476 = vmatprep.subr.mxu0 0.0
        %2477 = vmatpush1.msra.mxu0 %v2449
        %2478 = vmatprep.subr.mxu0 0.0
        %2479 = vmatpush1.msra.mxu0 %v2450
        %2480 = vmatprep.subr.mxu0 0.0
        %2481 = vmatpush1.msra.mxu0 %v2451
        %2482 = vmatprep.subr.mxu0 0.0
        %2483 = vmatpush1.msra.mxu0 %v2452
        %2484 = vmatprep.subr.mxu0 0.0
        %2485 = vmatpush1.msra.mxu0 %v2453
        %2486 = vmatprep.subr.mxu0 0.0
        %2487 = vmatpush1.msra.mxu0 %v2454
        %2488 = vmatprep.subr.mxu0 0.0
        %2489 = vmatpush1.msra.mxu0 0.0
        %2490 = vmatprep.subr.mxu0 0.0
        %2491 = vmatpush1.msra.mxu0 0.0
        %2492 = vmatprep.subr.mxu0 0.0
        %2493 = vmatpush1.msra.mxu0 0.0
        %2494 = vmatprep.subr.mxu0 0.0
        %2495 = vmatpush1.msra.mxu0 0.0
        %2496 = vmatprep.subr.mxu0 0.0
        %2497 = vmatpush1.msra.mxu0 0.0
        %2498 = vmatprep.subr.mxu0 0.0
        %2499 = vmatpush1.msra.mxu0 0.0
        %2500 = vmatprep.subr.mxu0 0.0
        %2501 = vmatpush1.msra.mxu0 0.0
        %2502 = vmatprep.subr.mxu0 0.0
        %2503 = vmatpush1.msra.mxu0 0.0
        %2504 = vmatprep.subr.mxu0 0.0
        %2505 = vmatpush1.msra.mxu0 0.0
        %2506 = vmatprep.subr.mxu0 0.0
        %2507 = vmatpush1.msra.mxu0 0.0
        %2508 = vmatprep.subr.mxu0 0.0
        %2509 = vmatpush1.msra.mxu0 0.0
        %2510 = vmatprep.subr.mxu0 0.0
        %2511 = vmatpush1.msra.mxu0 0.0
        %2512 = vmatprep.subr.mxu0 0.0
        %2513 = vmatpush1.msra.mxu0 0.0
        %2514 = vmatprep.subr.mxu0 0.0
        %2515 = vmatpush1.msra.mxu0 0.0
        %2516 = vmatprep.subr.mxu0 0.0
        %2517 = vmatpush1.msra.mxu0 0.0
        %2518 = vmatprep.subr.mxu0 0.0
        %2519 = vmatpush1.msra.mxu0 0.0
        %2520 = vmatprep.mubr.f32.mxu0 0.0
        %2521 = vmatmul.mubr.f32.gmra.mrb[0].mxu0 %v2437
        %v2522 = vpop.f32.mrb[0].mxu0
        %v2523 = vadd.f32 %v2455, %v2522
        %v2524 = vpop.f32.mrb[0].mxu0
        %2525 = vdwg.mxu0
        %2526 = vst [vmem:[%s285] sm:$0x1] %v2523
        %s2527 = sand.u32 %s161, 1
        %s2528 = scalar_lea.sflag [#allocation6], %s2527
        %s2529 = sand.u32 %s161, 1
        %s2530 = scalar_lea.vmem [#allocation10], %s2529
        // Predicated region
        $region57: #{net_forward.1} parent=43 // pred_check
          %p2531 = pneg %p171
        $region58: #{net_forward.1} parent=43 // pred_check_branch
          %2533 = sbr.rel (%p2531) target = $region60
        $region59: #{net_forward.1} parent=43 // pred_region
          %s2535 = ssub.s32 16, 16
          %2536 = vsyncadd %s2528, %s2535
          %s2537 = smul.addr %s22, 16
          %s2538 = scalar_lea.hbm %s6, %s2537
          %s2540 = sshll.u32 %s2530, 4
          %s2541 = int_to_ptr.vmem [resolvable:$true] %s2540
          %2543 = dma.vmem_to_hbm [thread:$0]  %s2541, 16, %s2538, %s2528
        $region60: #{net_forward.1} parent=43 // pred_fallthru
          _
      $region44: #{net_forward.1} parent=5 // pred_fallthru
        _
      %p2544 = scmp.le.s32.totalorder 2, %s17
      // Predicated region
      $region61: #{net_forward.1} parent=5 // pred_check
        %p2545 = pneg %p2544
      $region62: #{net_forward.1} parent=5 // pred_check_branch
        %2547 = sbr.rel (%p2545) target = $region64
      $region63: #{net_forward.1} parent=5 // pred_region
        %s2548 = ssub.s32 %s17, 2
        // Predicated region
        $region65: #{net_forward.1} parent=63 // pred_check
          %p2549 = pneg %p177
        $region66: #{net_forward.1} parent=63 // pred_check_branch
          %2551 = sbr.rel (%p2549) target = $region68
        $region67: #{net_forward.1} parent=63 // pred_region
          %s2552 = sand.u32 %s162, 1
          %s2553 = scalar_lea.sflag [#allocation6], %s2552
          %s2554 = sand.u32 %s162, 1
          %s2555 = scalar_lea.vmem [#allocation10], %s2554
          %2556 = dma.done %s2553, 16
        $region68: #{net_forward.1} parent=63 // pred_fallthru
          _
      $region64: #{net_forward.1} parent=5 // pred_fallthru
        _
    $region6: #{net_forward.1} parent=1 // loop_footer
      %s21 = sadd.s32 1, %s17
    $region7: #{net_forward.1} parent=1 // loop_footer_branch
      %16 = sbr.rel target = $region3
    $region8: #{net_forward.1} parent=1 // loop_exit
      _
    %2557 = vsyncpa [#allocation5], 1
    %s2558 = scalar_lea.sflag [#allocation5], 1
    %2559 = vsyncpa %s2558, 1
    %2560 = vsyncpa [#allocation8], 1
    %2561 = vsyncpa [#allocation6], 1
    %s2562 = scalar_lea.sflag [#allocation6], 1
    %2563 = vsyncpa %s2562, 1

</llo_original>
